<compile_context>
chip_gen: v7x
topology: tpu7x:2x2x1
jax: 0.10.0
libtpu: 0.0.40
codegen_flags: <defaults>
</compile_context>

<pallas_src>
import functools

import jax
import jax.numpy as jnp
from jax.experimental import pallas as pl
from jax.experimental.pallas import tpu as pltpu


# Per-conv configs: (kh, kw, pad_h, pad_w, dil_h, dil_w), mirroring RFB_modified.
_BRANCH_CFGS = [
    [(1, 1, 0, 0, 1, 1)],
    [(1, 1, 0, 0, 1, 1), (1, 3, 0, 1, 1, 1), (3, 1, 1, 0, 1, 1),
     (3, 3, 3, 3, 3, 3)],
    [(1, 1, 0, 0, 1, 1), (1, 5, 0, 2, 1, 1), (5, 1, 2, 0, 1, 1),
     (3, 3, 5, 5, 5, 5)],
    [(1, 1, 0, 0, 1, 1), (1, 7, 0, 3, 1, 1), (7, 1, 3, 0, 1, 1),
     (3, 3, 7, 7, 7, 7)],
]
_CAT_CFG = (3, 3, 1, 1, 1, 1)   # conv_cat: 3x3, pad 1
_RES_CFG = (1, 1, 0, 0, 1, 1)   # conv_res: 1x1
_ALL_CFGS = tuple(c for b in _BRANCH_CFGS for c in b) + (_CAT_CFG, _RES_CFG)
_BRANCH_SIZES = tuple(len(b) for b in _BRANCH_CFGS)

# Param indices (in _ALL_CFGS order) of the 1x1 convs applied to x, and of the
# remaining convs (branch tails + conv_cat).
_HEAD_IDX = (0, 1, 5, 9, 14)                        # branch0..3 heads + conv_res
_REST_IDX = (2, 3, 4, 6, 7, 8, 10, 11, 12, 13)      # branch tails + conv_cat

_BN_EPS = 1e-5


def _lane_mod(lane, m):
    """lane % m for a constant positive m (bitwise-AND fast path for powers of 2)."""
    if m & (m - 1) == 0:
        return jnp.bitwise_and(lane, m - 1)
    return lane % m


# ----------------------------------------------------------------------------
# Fused Pallas kernel: the whole RFB_modified forward for one batch block.
# Layout: channels on sublanes, (image, y, x) flattened on the 128-wide lanes.
# ----------------------------------------------------------------------------
def _rfb_kernel(x_ref, w11_ref, b11_ref, wr_ref, br_ref, out_ref, *,
                H, W, C_OUT, B_BLK, rest_meta):
    HW = H * W
    cols = B_BLK * HW

    # Per-image pixel coordinates, built once in-kernel (no extra inputs).
    lane = jax.lax.broadcasted_iota(jnp.int32, (1, cols), 1)
    sidx = _lane_mod(lane, HW)      # flattened index within its image
    xidx = _lane_mod(lane, W)       # column coordinate within its image

    # Boundary masks, memoized per (k, dx) so identical offsets across convs
    # share one mask and each tap costs a single multiply.
    mask_cache = {}

    def tap_mask(k, dx):
        key = (k, dx)
        if key not in mask_cache:
            conds = []
            if k > 0:
                conds.append(sidx < HW - k)
            elif k < 0:
                conds.append(sidx >= -k)
            if dx > 0:
                conds.append(xidx < W - dx)
            elif dx < 0:
                conds.append(xidx >= -dx)
            if not conds:
                mask_cache[key] = None
            else:
                m = conds[0]
                for c in conds[1:]:
                    m = jnp.logical_and(m, c)
                mask_cache[key] = jnp.where(m, 1.0, 0.0)   # 0/1 f32
        return mask_cache[key]

    def shifted_tap(h, dy, dx):
        # t[:, l] = h[:, l + k] with k = dy*W + dx (source pixel (y+dy, x+dx));
        # zero where that source pixel falls outside its own image.
        k = dy * W + dx
        t = h if k == 0 else pltpu.roll(h, shift=(-k) % cols, axis=1)
        m = tap_mask(k, dx)
        return t if m is None else t * m

    def conv_bn(h, cfg, k0, kk, bcol):
        kh, kw, ph, pw, dh, dw = cfg
        taps = [shifted_tap(h, ky * dh - ph, kx * dw - pw)
                for ky in range(kh) for kx in range(kw)]
        patch = taps[0] if len(taps) == 1 else jnp.concatenate(taps, axis=0)
        w = wr_ref[:, k0:k0 + kk]                 # 128-lane-aligned static slice
        y = jnp.dot(w, patch, preferred_element_type=jnp.float32)
        return y + br_ref[:, bcol:bcol + 1]       # folded-BN bias (scale in w)

    # Images of this block concatenated along the lane axis -> each conv is a
    # single matmul over B_BLK*H*W columns.
    if B_BLK == 1:
        x0 = x_ref[0]
    else:
        x0 = jnp.concatenate([x_ref[b] for b in range(B_BLK)], axis=1)

    # All five 1x1 convs that read x (branch heads + conv_res) as ONE matmul.
    y11 = jnp.dot(w11_ref[...], x0, preferred_element_type=jnp.float32)
    y11 = y11 + b11_ref[...]

    branch_outs = [y11[0:C_OUT]]                  # branch0 output
    for br in range(1, 4):
        h = y11[br * C_OUT:(br + 1) * C_OUT]
        for j in range(3):
            h = conv_bn(h, *rest_meta[(br - 1) * 3 + j])
        branch_outs.append(h)
    res = y11[4 * C_OUT:5 * C_OUT]                # conv_res output

    x_cat = jnp.concatenate(branch_outs, axis=0)  # (4*Cout, cols)
    y_cat = conv_bn(x_cat, *rest_meta[9])         # conv_cat

    y = jnp.maximum(y_cat + res, 0.0)
    for b in range(B_BLK):                        # lane-dense per-image stores
        out_ref[b] = y[:, b * HW:(b + 1) * HW].astype(out_ref.dtype)


# ----------------------------------------------------------------------------
# Wrapper: one pallas_call for the whole module.  x is NCHW like PyTorch.
# ----------------------------------------------------------------------------
def _const_spec(shape):
    nd = len(shape)
    return pl.BlockSpec(shape, lambda n, _nd=nd: (0,) * _nd)


def rfb_modified_forward(params, x, *, batch_block=None):
    """x: [N, in_channel, H, W] (NCHW) -> [N, out_channel, H, W]."""
    N, cin, H, W = x.shape
    HW = H * W
    cout = params[0]["scale"].shape[0]

    if batch_block is None:
        # >=2 grid steps when N>=2 keeps both v7x TensorCores busy; on
        # single-TC parts (v5e/v6e) pass batch_block=N to use one grid step.
        batch_block = max(1, N // 2)
    assert N % batch_block == 0, "batch_block must divide N"
    grid_n = N // batch_block

    # Fold BN scale into the conv weights (inference BN -> scale/bias).
    def folded_w(p):
        return (p["w"] * p["scale"][:, None]).astype(jnp.float32)

    # Stacked 1x1 slab: branch heads + conv_res.
    w11 = jnp.concatenate([folded_w(params[i]) for i in _HEAD_IDX], axis=0)
    b11 = jnp.concatenate([params[i]["bias"] for i in _HEAD_IDX]
                          ).reshape(5 * cout, 1).astype(jnp.float32)

    # Remaining convs packed along K with 128-lane-aligned per-conv offsets.
    w_parts, rest_meta, k0 = [], [], 0
    for col, i in enumerate(_REST_IDX):
        w = folded_w(params[i])
        kk = w.shape[1]
        kpad = -(-kk // 128) * 128
        w_parts.append(jnp.pad(w, ((0, 0), (0, kpad - kk))))
        rest_meta.append((_ALL_CFGS[i], k0, kk, col))
        k0 += kpad
    w_rest = jnp.concatenate(w_parts, axis=1)                       # (cout, Ktot)
    b_rest = jnp.stack([params[i]["bias"] for i in _REST_IDX],
                       axis=1).astype(jnp.float32)                  # (cout, 10)

    kernel = functools.partial(
        _rfb_kernel, H=H, W=W, C_OUT=cout, B_BLK=batch_block,
        rest_meta=tuple(rest_meta))

    out = pl.pallas_call(
        kernel,
        out_shape=jax.ShapeDtypeStruct((N, cout, HW), jnp.float32),
        grid=(grid_n,),
        in_specs=[
            pl.BlockSpec((batch_block, cin, HW), lambda n: (n, 0, 0)),
            _const_spec(w11.shape), _const_spec(b11.shape),
            _const_spec(w_rest.shape), _const_spec(b_rest.shape),
        ],
        out_specs=pl.BlockSpec((batch_block, cout, HW), lambda n: (n, 0, 0)),
        compiler_params=pltpu.CompilerParams(
            dimension_semantics=("parallel",),        # shard batch blocks (v7x)
            vmem_limit_bytes=32 * 1024 * 1024),       # well under v7x 64 MiB
    )(x.reshape(N, cin, HW).astype(jnp.float32), w11, b11, w_rest, b_rest)
    return out.reshape(N, cout, H, W)


# ----------------------------------------------------------------------------
# Deterministic synthetic parameters (conv weight + BN gamma/beta/mean/var
# pre-reduced to scale/bias).  Weight storage: (Cout, KH*KW*Cin), tap-major /
# input-channel-minor, i.e. w[co,(ky*KW+kx)*Cin+ci] <-> torch weight[co,ci,ky,kx].
# ----------------------------------------------------------------------------
def init_rfb_modified(key, in_channel, out_channel):
    cins = []
    for branch in _BRANCH_CFGS:
        for li in range(len(branch)):
            cins.append(in_channel if li == 0 else out_channel)
    cins.append(4 * out_channel)   # conv_cat
    cins.append(in_channel)        # conv_res

    params = []
    for cfg, cin in zip(_ALL_CFGS, cins):
        kh, kw = cfg[0], cfg[1]
        key, k_w, k1, k2, k3, k4 = jax.random.split(key, 6)
        fan_in = kh * kw * cin
        w = jax.random.normal(k_w, (out_channel, kh, kw, cin),
                              jnp.float32) * (fan_in ** -0.5)
        w = w.reshape(out_channel, kh * kw * cin)
        gamma = 1.0 + 0.1 * jax.random.normal(k1, (out_channel,), jnp.float32)
        beta = 0.1 * jax.random.normal(k2, (out_channel,), jnp.float32)
        mean = 0.1 * jax.random.normal(k3, (out_channel,), jnp.float32)
        var = 1.0 + 0.25 * jnp.abs(jax.random.normal(k4, (out_channel,),
                                                     jnp.float32))
        scale = gamma / jnp.sqrt(var + _BN_EPS)
        bias = beta - mean * scale
        params.append({"w": w, "scale": scale, "bias": bias})
    return params


# ----------------------------------------------------------------------------
# Pure-JAX reference (lax.conv) for the in-script correctness check.
# ----------------------------------------------------------------------------
def _conv_bn_ref(x, w, scale, bias, cfg):
    kh, kw, ph, pw, dh, dw = cfg
    cout = w.shape[0]
    cin = w.shape[1] // (kh * kw)
    w4 = w.reshape(cout, kh, kw, cin).transpose(0, 3, 1, 2)   # OIHW
    y = jax.lax.conv_general_dilated(
        x, w4, window_strides=(1, 1), padding=[(ph, ph), (pw, pw)],
        rhs_dilation=(dh, dw), dimension_numbers=("NCHW", "OIHW", "NCHW"))
    return y * scale.reshape(1, cout, 1, 1) + bias.reshape(1, cout, 1, 1)


def rfb_modified_reference(params, x):
    ci = 0
    outs = []
    for nb in _BRANCH_SIZES:
        h = x
        for _ in range(nb):
            p = params[ci]
            h = _conv_bn_ref(h, p["w"], p["scale"], p["bias"], _ALL_CFGS[ci])
            ci += 1
        outs.append(h)
    x_cat = jnp.concatenate(outs, axis=1)
    p = params[ci]
    y_cat = _conv_bn_ref(x_cat, p["w"], p["scale"], p["bias"], _ALL_CFGS[ci])
    ci += 1
    p = params[ci]
    res = _conv_bn_ref(x, p["w"], p["scale"], p["bias"], _ALL_CFGS[ci])
    return jnp.maximum(y_cat + res, 0.0)


if __name__ == "__main__":
    in_channel, out_channel = 4, 8
    N, H, W = 2, 16, 16

    key = jax.random.PRNGKey(0)
    k_params, k_x = jax.random.split(key)

    params = init_rfb_modified(k_params, in_channel, out_channel)
    x = jax.random.normal(k_x, (N, in_channel, H, W), jnp.float32)   # NCHW

    out = jax.block_until_ready(jax.jit(rfb_modified_forward)(params, x))
    assert out.shape == (N, out_channel, H, W)

    ref = jax.block_until_ready(jax.jit(rfb_modified_reference)(params, x))

    # Much tighter than the previous 0.1+0.1|ref| check; the slack only covers
    # possible bf16 operand truncation inside the MXU under DEFAULT precision.
    def check(o, tag):
        viol = jnp.max(jnp.abs(o - ref) - (5e-2 + 2e-2 * jnp.abs(ref)))
        assert float(viol) <= 0.0, f"{tag}: mismatch (violation={float(viol)})"

    check(out, "default (2 parallel grid steps)")

    # Also exercise the batch-blocked path (whole batch in one grid step,
    # images concatenated along the lane axis) -- the v5e/v6e configuration.
    out_blk = jax.block_until_ready(
        jax.jit(functools.partial(rfb_modified_forward, batch_block=N))(params, x))
    check(out_blk, "batch_block=N (single grid step)")

    print("KERNEL_OK")
</pallas_src>

<mosaic_0001>
module attributes {stable_mosaic.version = 11 : i64} {
  func.func @_rfb_kernel(%arg0: i32, %arg1: memref<1x4x256xf32, #tpu.memory_space<vmem>>, %arg2: memref<40x4xf32, #tpu.memory_space<vmem>>, %arg3: memref<40x1xf32, #tpu.memory_space<vmem>>, %arg4: memref<8x1536xf32, #tpu.memory_space<vmem>>, %arg5: memref<8x10xf32, #tpu.memory_space<vmem>>, %arg6: memref<1x8x256xf32, #tpu.memory_space<vmem>>) attributes {dimension_semantics = [#tpu.dimension_semantics<parallel>], iteration_bounds = array<i64: 2>, scalar_prefetch = 0 : i64, scratch_operands = 0 : i64, tpu.core_type = #tpu.core_type<tc>, window_params = [{transform_indices = @transform_0, window_bounds = array<i64: 1, 4, 256>}, {pipeline_mode = #tpu.pipeline_mode<synchronous>, transform_indices = @transform_1, window_bounds = array<i64: 40, 4>}, {pipeline_mode = #tpu.pipeline_mode<synchronous>, transform_indices = @transform_2, window_bounds = array<i64: 40, 1>}, {pipeline_mode = #tpu.pipeline_mode<synchronous>, transform_indices = @transform_3, window_bounds = array<i64: 8, 1536>}, {pipeline_mode = #tpu.pipeline_mode<synchronous>, transform_indices = @transform_4, window_bounds = array<i64: 8, 10>}, {transform_indices = @transform_5, window_bounds = array<i64: 1, 8, 256>}]} {
    %0 = tpu.iota {dimensions = array<i32: 1>} : vector<1x256xi32>
    %c255_i32 = arith.constant 255 : i32
    %1 = vector.broadcast %c255_i32 : i32 to vector<1x256xi32>
    %2 = arith.andi %0, %1 : vector<1x256xi32>
    %c15_i32 = arith.constant 15 : i32
    %3 = vector.broadcast %c15_i32 : i32 to vector<1x256xi32>
    %4 = arith.andi %0, %3 : vector<1x256xi32>
    %c0 = arith.constant 0 : index
    %c0_0 = arith.constant 0 : index
    %c0_1 = arith.constant 0 : index
    %5 = vector.load %arg1[%c0, %c0_0, %c0_1] : memref<1x4x256xf32, #tpu.memory_space<vmem>>, vector<1x4x256xf32>
    %6 = vector.shape_cast %5 : vector<1x4x256xf32> to vector<4x256xf32>
    %c0_2 = arith.constant 0 : index
    %c0_3 = arith.constant 0 : index
    %7 = vector.load %arg2[%c0_2, %c0_3] : memref<40x4xf32, #tpu.memory_space<vmem>>, vector<40x4xf32>
    %cst = arith.constant dense<0.000000e+00> : vector<40x256xf32>
    %8 = tpu.matmul %7, %6, %cst {dimension_numbers = #tpu.dot_dimension_numbers<[1], [0], [0], [1], [0, 0, 1, 1], [], []>} : vector<40x4xf32>, vector<4x256xf32>, vector<40x256xf32> -> vector<40x256xf32>
    %c0_4 = arith.constant 0 : index
    %c0_5 = arith.constant 0 : index
    %9 = vector.load %arg3[%c0_4, %c0_5] : memref<40x1xf32, #tpu.memory_space<vmem>>, vector<40x1xf32>
    %10 = vector.broadcast %9 : vector<40x1xf32> to vector<40x256xf32>
    %11 = arith.addf %8, %10 : vector<40x256xf32>
    %12 = vector.extract_strided_slice %11 {offsets = [0, 0], sizes = [8, 256], strides = [1, 1]} : vector<40x256xf32> to vector<8x256xf32>
    %13 = vector.extract_strided_slice %11 {offsets = [8, 0], sizes = [8, 256], strides = [1, 1]} : vector<40x256xf32> to vector<8x256xf32>
    %c1_i32 = arith.constant 1 : i32
    %14 = tpu.dynamic_rotate %13 by %c1_i32 dim 1 : vector<8x256xf32>, i32 -> vector<8x256xf32>
    %c1_i32_6 = arith.constant 1 : i32
    %15 = vector.broadcast %c1_i32_6 : i32 to vector<1x256xi32>
    %16 = arith.cmpi sge, %2, %15 : vector<1x256xi32>
    %c1_i32_7 = arith.constant 1 : i32
    %17 = vector.broadcast %c1_i32_7 : i32 to vector<1x256xi32>
    %18 = arith.cmpi sge, %4, %17 : vector<1x256xi32>
    %19 = arith.andi %16, %18 : vector<1x256xi1>
    %cst_8 = arith.constant 1.000000e+00 : f32
    %cst_9 = arith.constant 0.000000e+00 : f32
    %20 = vector.broadcast %cst_8 : f32 to vector<1x256xf32>
    %21 = vector.broadcast %cst_9 : f32 to vector<1x256xf32>
    %22 = arith.select %19, %20, %21 : vector<1x256xi1>, vector<1x256xf32>
    %23 = vector.broadcast %22 : vector<1x256xf32> to vector<8x256xf32>
    %24 = arith.mulf %14, %23 : vector<8x256xf32>
    %c255_i32_10 = arith.constant 255 : i32
    %25 = tpu.dynamic_rotate %13 by %c255_i32_10 dim 1 : vector<8x256xf32>, i32 -> vector<8x256xf32>
    %c255_i32_11 = arith.constant 255 : i32
    %26 = vector.broadcast %c255_i32_11 : i32 to vector<1x256xi32>
    %27 = arith.cmpi slt, %2, %26 : vector<1x256xi32>
    %c15_i32_12 = arith.constant 15 : i32
    %28 = vector.broadcast %c15_i32_12 : i32 to vector<1x256xi32>
    %29 = arith.cmpi slt, %4, %28 : vector<1x256xi32>
    %30 = arith.andi %27, %29 : vector<1x256xi1>
    %cst_13 = arith.constant 1.000000e+00 : f32
    %cst_14 = arith.constant 0.000000e+00 : f32
    %31 = vector.broadcast %cst_13 : f32 to vector<1x256xf32>
    %32 = vector.broadcast %cst_14 : f32 to vector<1x256xf32>
    %33 = arith.select %30, %31, %32 : vector<1x256xi1>, vector<1x256xf32>
    %34 = vector.broadcast %33 : vector<1x256xf32> to vector<8x256xf32>
    %35 = arith.mulf %25, %34 : vector<8x256xf32>
    %36 = tpu.concatenate %24, %13, %35 in 0 : vector<8x256xf32>, vector<8x256xf32>, vector<8x256xf32> -> vector<24x256xf32>
    %c0_15 = arith.constant 0 : index
    %c0_16 = arith.constant 0 : index
    %37 = vector.load %arg4[%c0_15, %c0_16] : memref<8x1536xf32, #tpu.memory_space<vmem>>, vector<8x24xf32>
    %cst_17 = arith.constant dense<0.000000e+00> : vector<8x256xf32>
    %38 = tpu.matmul %37, %36, %cst_17 {dimension_numbers = #tpu.dot_dimension_numbers<[1], [0], [0], [1], [0, 0, 1, 1], [], []>} : vector<8x24xf32>, vector<24x256xf32>, vector<8x256xf32> -> vector<8x256xf32>
    %c0_18 = arith.constant 0 : index
    %c0_19 = arith.constant 0 : index
    %39 = vector.load %arg5[%c0_18, %c0_19] : memref<8x10xf32, #tpu.memory_space<vmem>>, vector<8x1xf32>
    %40 = vector.broadcast %39 : vector<8x1xf32> to vector<8x256xf32>
    %41 = arith.addf %38, %40 : vector<8x256xf32>
    %c16_i32 = arith.constant 16 : i32
    %42 = tpu.dynamic_rotate %41 by %c16_i32 dim 1 : vector<8x256xf32>, i32 -> vector<8x256xf32>
    %c16_i32_20 = arith.constant 16 : i32
    %43 = vector.broadcast %c16_i32_20 : i32 to vector<1x256xi32>
    %44 = arith.cmpi sge, %2, %43 : vector<1x256xi32>
    %cst_21 = arith.constant 1.000000e+00 : f32
    %cst_22 = arith.constant 0.000000e+00 : f32
    %45 = vector.broadcast %cst_21 : f32 to vector<1x256xf32>
    %46 = vector.broadcast %cst_22 : f32 to vector<1x256xf32>
    %47 = arith.select %44, %45, %46 : vector<1x256xi1>, vector<1x256xf32>
    %48 = vector.broadcast %47 : vector<1x256xf32> to vector<8x256xf32>
    %49 = arith.mulf %42, %48 : vector<8x256xf32>
    %c240_i32 = arith.constant 240 : i32
    %50 = tpu.dynamic_rotate %41 by %c240_i32 dim 1 : vector<8x256xf32>, i32 -> vector<8x256xf32>
    %c240_i32_23 = arith.constant 240 : i32
    %51 = vector.broadcast %c240_i32_23 : i32 to vector<1x256xi32>
    %52 = arith.cmpi slt, %2, %51 : vector<1x256xi32>
    %cst_24 = arith.constant 1.000000e+00 : f32
    %cst_25 = arith.constant 0.000000e+00 : f32
    %53 = vector.broadcast %cst_24 : f32 to vector<1x256xf32>
    %54 = vector.broadcast %cst_25 : f32 to vector<1x256xf32>
    %55 = arith.select %52, %53, %54 : vector<1x256xi1>, vector<1x256xf32>
    %56 = vector.broadcast %55 : vector<1x256xf32> to vector<8x256xf32>
    %57 = arith.mulf %50, %56 : vector<8x256xf32>
    %58 = tpu.concatenate %49, %41, %57 in 0 : vector<8x256xf32>, vector<8x256xf32>, vector<8x256xf32> -> vector<24x256xf32>
    %c0_26 = arith.constant 0 : index
    %c128 = arith.constant 128 : index
    %59 = vector.load %arg4[%c0_26, %c128] : memref<8x1536xf32, #tpu.memory_space<vmem>>, vector<8x24xf32>
    %cst_27 = arith.constant dense<0.000000e+00> : vector<8x256xf32>
    %60 = tpu.matmul %59, %58, %cst_27 {dimension_numbers = #tpu.dot_dimension_numbers<[1], [0], [0], [1], [0, 0, 1, 1], [], []>} : vector<8x24xf32>, vector<24x256xf32>, vector<8x256xf32> -> vector<8x256xf32>
    %c0_28 = arith.constant 0 : index
    %c1 = arith.constant 1 : index
    %61 = vector.load %arg5[%c0_28, %c1] : memref<8x10xf32, #tpu.memory_space<vmem>>, vector<8x1xf32>
    %62 = vector.broadcast %61 : vector<8x1xf32> to vector<8x256xf32>
    %63 = arith.addf %60, %62 : vector<8x256xf32>
    %c51_i32 = arith.constant 51 : i32
    %64 = tpu.dynamic_rotate %63 by %c51_i32 dim 1 : vector<8x256xf32>, i32 -> vector<8x256xf32>
    %c51_i32_29 = arith.constant 51 : i32
    %65 = vector.broadcast %c51_i32_29 : i32 to vector<1x256xi32>
    %66 = arith.cmpi sge, %2, %65 : vector<1x256xi32>
    %c3_i32 = arith.constant 3 : i32
    %67 = vector.broadcast %c3_i32 : i32 to vector<1x256xi32>
    %68 = arith.cmpi sge, %4, %67 : vector<1x256xi32>
    %69 = arith.andi %66, %68 : vector<1x256xi1>
    %cst_30 = arith.constant 1.000000e+00 : f32
    %cst_31 = arith.constant 0.000000e+00 : f32
    %70 = vector.broadcast %cst_30 : f32 to vector<1x256xf32>
    %71 = vector.broadcast %cst_31 : f32 to vector<1x256xf32>
    %72 = arith.select %69, %70, %71 : vector<1x256xi1>, vector<1x256xf32>
    %73 = vector.broadcast %72 : vector<1x256xf32> to vector<8x256xf32>
    %74 = arith.mulf %64, %73 : vector<8x256xf32>
    %c48_i32 = arith.constant 48 : i32
    %75 = tpu.dynamic_rotate %63 by %c48_i32 dim 1 : vector<8x256xf32>, i32 -> vector<8x256xf32>
    %c48_i32_32 = arith.constant 48 : i32
    %76 = vector.broadcast %c48_i32_32 : i32 to vector<1x256xi32>
    %77 = arith.cmpi sge, %2, %76 : vector<1x256xi32>
    %cst_33 = arith.constant 1.000000e+00 : f32
    %cst_34 = arith.constant 0.000000e+00 : f32
    %78 = vector.broadcast %cst_33 : f32 to vector<1x256xf32>
    %79 = vector.broadcast %cst_34 : f32 to vector<1x256xf32>
    %80 = arith.select %77, %78, %79 : vector<1x256xi1>, vector<1x256xf32>
    %81 = vector.broadcast %80 : vector<1x256xf32> to vector<8x256xf32>
    %82 = arith.mulf %75, %81 : vector<8x256xf32>
    %c45_i32 = arith.constant 45 : i32
    %83 = tpu.dynamic_rotate %63 by %c45_i32 dim 1 : vector<8x256xf32>, i32 -> vector<8x256xf32>
    %c45_i32_35 = arith.constant 45 : i32
    %84 = vector.broadcast %c45_i32_35 : i32 to vector<1x256xi32>
    %85 = arith.cmpi sge, %2, %84 : vector<1x256xi32>
    %c13_i32 = arith.constant 13 : i32
    %86 = vector.broadcast %c13_i32 : i32 to vector<1x256xi32>
    %87 = arith.cmpi slt, %4, %86 : vector<1x256xi32>
    %88 = arith.andi %85, %87 : vector<1x256xi1>
    %cst_36 = arith.constant 1.000000e+00 : f32
    %cst_37 = arith.constant 0.000000e+00 : f32
    %89 = vector.broadcast %cst_36 : f32 to vector<1x256xf32>
    %90 = vector.broadcast %cst_37 : f32 to vector<1x256xf32>
    %91 = arith.select %88, %89, %90 : vector<1x256xi1>, vector<1x256xf32>
    %92 = vector.broadcast %91 : vector<1x256xf32> to vector<8x256xf32>
    %93 = arith.mulf %83, %92 : vector<8x256xf32>
    %c3_i32_38 = arith.constant 3 : i32
    %94 = tpu.dynamic_rotate %63 by %c3_i32_38 dim 1 : vector<8x256xf32>, i32 -> vector<8x256xf32>
    %c3_i32_39 = arith.constant 3 : i32
    %95 = vector.broadcast %c3_i32_39 : i32 to vector<1x256xi32>
    %96 = arith.cmpi sge, %2, %95 : vector<1x256xi32>
    %c3_i32_40 = arith.constant 3 : i32
    %97 = vector.broadcast %c3_i32_40 : i32 to vector<1x256xi32>
    %98 = arith.cmpi sge, %4, %97 : vector<1x256xi32>
    %99 = arith.andi %96, %98 : vector<1x256xi1>
    %cst_41 = arith.constant 1.000000e+00 : f32
    %cst_42 = arith.constant 0.000000e+00 : f32
    %100 = vector.broadcast %cst_41 : f32 to vector<1x256xf32>
    %101 = vector.broadcast %cst_42 : f32 to vector<1x256xf32>
    %102 = arith.select %99, %100, %101 : vector<1x256xi1>, vector<1x256xf32>
    %103 = vector.broadcast %102 : vector<1x256xf32> to vector<8x256xf32>
    %104 = arith.mulf %94, %103 : vector<8x256xf32>
    %c253_i32 = arith.constant 253 : i32
    %105 = tpu.dynamic_rotate %63 by %c253_i32 dim 1 : vector<8x256xf32>, i32 -> vector<8x256xf32>
    %c253_i32_43 = arith.constant 253 : i32
    %106 = vector.broadcast %c253_i32_43 : i32 to vector<1x256xi32>
    %107 = arith.cmpi slt, %2, %106 : vector<1x256xi32>
    %c13_i32_44 = arith.constant 13 : i32
    %108 = vector.broadcast %c13_i32_44 : i32 to vector<1x256xi32>
    %109 = arith.cmpi slt, %4, %108 : vector<1x256xi32>
    %110 = arith.andi %107, %109 : vector<1x256xi1>
    %cst_45 = arith.constant 1.000000e+00 : f32
    %cst_46 = arith.constant 0.000000e+00 : f32
    %111 = vector.broadcast %cst_45 : f32 to vector<1x256xf32>
    %112 = vector.broadcast %cst_46 : f32 to vector<1x256xf32>
    %113 = arith.select %110, %111, %112 : vector<1x256xi1>, vector<1x256xf32>
    %114 = vector.broadcast %113 : vector<1x256xf32> to vector<8x256xf32>
    %115 = arith.mulf %105, %114 : vector<8x256xf32>
    %c211_i32 = arith.constant 211 : i32
    %116 = tpu.dynamic_rotate %63 by %c211_i32 dim 1 : vector<8x256xf32>, i32 -> vector<8x256xf32>
    %c211_i32_47 = arith.constant 211 : i32
    %117 = vector.broadcast %c211_i32_47 : i32 to vector<1x256xi32>
    %118 = arith.cmpi slt, %2, %117 : vector<1x256xi32>
    %c3_i32_48 = arith.constant 3 : i32
    %119 = vector.broadcast %c3_i32_48 : i32 to vector<1x256xi32>
    %120 = arith.cmpi sge, %4, %119 : vector<1x256xi32>
    %121 = arith.andi %118, %120 : vector<1x256xi1>
    %cst_49 = arith.constant 1.000000e+00 : f32
    %cst_50 = arith.constant 0.000000e+00 : f32
    %122 = vector.broadcast %cst_49 : f32 to vector<1x256xf32>
    %123 = vector.broadcast %cst_50 : f32 to vector<1x256xf32>
    %124 = arith.select %121, %122, %123 : vector<1x256xi1>, vector<1x256xf32>
    %125 = vector.broadcast %124 : vector<1x256xf32> to vector<8x256xf32>
    %126 = arith.mulf %116, %125 : vector<8x256xf32>
    %c208_i32 = arith.constant 208 : i32
    %127 = tpu.dynamic_rotate %63 by %c208_i32 dim 1 : vector<8x256xf32>, i32 -> vector<8x256xf32>
    %c208_i32_51 = arith.constant 208 : i32
    %128 = vector.broadcast %c208_i32_51 : i32 to vector<1x256xi32>
    %129 = arith.cmpi slt, %2, %128 : vector<1x256xi32>
    %cst_52 = arith.constant 1.000000e+00 : f32
    %cst_53 = arith.constant 0.000000e+00 : f32
    %130 = vector.broadcast %cst_52 : f32 to vector<1x256xf32>
    %131 = vector.broadcast %cst_53 : f32 to vector<1x256xf32>
    %132 = arith.select %129, %130, %131 : vector<1x256xi1>, vector<1x256xf32>
    %133 = vector.broadcast %132 : vector<1x256xf32> to vector<8x256xf32>
    %134 = arith.mulf %127, %133 : vector<8x256xf32>
    %c205_i32 = arith.constant 205 : i32
    %135 = tpu.dynamic_rotate %63 by %c205_i32 dim 1 : vector<8x256xf32>, i32 -> vector<8x256xf32>
    %c205_i32_54 = arith.constant 205 : i32
    %136 = vector.broadcast %c205_i32_54 : i32 to vector<1x256xi32>
    %137 = arith.cmpi slt, %2, %136 : vector<1x256xi32>
    %c13_i32_55 = arith.constant 13 : i32
    %138 = vector.broadcast %c13_i32_55 : i32 to vector<1x256xi32>
    %139 = arith.cmpi slt, %4, %138 : vector<1x256xi32>
    %140 = arith.andi %137, %139 : vector<1x256xi1>
    %cst_56 = arith.constant 1.000000e+00 : f32
    %cst_57 = arith.constant 0.000000e+00 : f32
    %141 = vector.broadcast %cst_56 : f32 to vector<1x256xf32>
    %142 = vector.broadcast %cst_57 : f32 to vector<1x256xf32>
    %143 = arith.select %140, %141, %142 : vector<1x256xi1>, vector<1x256xf32>
    %144 = vector.broadcast %143 : vector<1x256xf32> to vector<8x256xf32>
    %145 = arith.mulf %135, %144 : vector<8x256xf32>
    %146 = tpu.concatenate %74, %82, %93, %104, %63, %115, %126, %134, %145 in 0 : vector<8x256xf32>, vector<8x256xf32>, vector<8x256xf32>, vector<8x256xf32>, vector<8x256xf32>, vector<8x256xf32>, vector<8x256xf32>, vector<8x256xf32>, vector<8x256xf32> -> vector<72x256xf32>
    %c0_58 = arith.constant 0 : index
    %c256 = arith.constant 256 : index
    %147 = vector.load %arg4[%c0_58, %c256] : memref<8x1536xf32, #tpu.memory_space<vmem>>, vector<8x72xf32>
    %cst_59 = arith.constant dense<0.000000e+00> : vector<8x256xf32>
    %148 = tpu.matmul %147, %146, %cst_59 {dimension_numbers = #tpu.dot_dimension_numbers<[1], [0], [0], [1], [0, 0, 1, 1], [], []>} : vector<8x72xf32>, vector<72x256xf32>, vector<8x256xf32> -> vector<8x256xf32>
    %c0_60 = arith.constant 0 : index
    %c2 = arith.constant 2 : index
    %149 = vector.load %arg5[%c0_60, %c2] : memref<8x10xf32, #tpu.memory_space<vmem>>, vector<8x1xf32>
    %150 = vector.broadcast %149 : vector<8x1xf32> to vector<8x256xf32>
    %151 = arith.addf %148, %150 : vector<8x256xf32>
    %152 = vector.extract_strided_slice %11 {offsets = [16, 0], sizes = [8, 256], strides = [1, 1]} : vector<40x256xf32> to vector<8x256xf32>
    %c2_i32 = arith.constant 2 : i32
    %153 = tpu.dynamic_rotate %152 by %c2_i32 dim 1 : vector<8x256xf32>, i32 -> vector<8x256xf32>
    %c2_i32_61 = arith.constant 2 : i32
    %154 = vector.broadcast %c2_i32_61 : i32 to vector<1x256xi32>
    %155 = arith.cmpi sge, %2, %154 : vector<1x256xi32>
    %c2_i32_62 = arith.constant 2 : i32
    %156 = vector.broadcast %c2_i32_62 : i32 to vector<1x256xi32>
    %157 = arith.cmpi sge, %4, %156 : vector<1x256xi32>
    %158 = arith.andi %155, %157 : vector<1x256xi1>
    %cst_63 = arith.constant 1.000000e+00 : f32
    %cst_64 = arith.constant 0.000000e+00 : f32
    %159 = vector.broadcast %cst_63 : f32 to vector<1x256xf32>
    %160 = vector.broadcast %cst_64 : f32 to vector<1x256xf32>
    %161 = arith.select %158, %159, %160 : vector<1x256xi1>, vector<1x256xf32>
    %162 = vector.broadcast %161 : vector<1x256xf32> to vector<8x256xf32>
    %163 = arith.mulf %153, %162 : vector<8x256xf32>
    %c1_i32_65 = arith.constant 1 : i32
    %164 = tpu.dynamic_rotate %152 by %c1_i32_65 dim 1 : vector<8x256xf32>, i32 -> vector<8x256xf32>
    %165 = vector.broadcast %22 : vector<1x256xf32> to vector<8x256xf32>
    %166 = arith.mulf %164, %165 : vector<8x256xf32>
    %c255_i32_66 = arith.constant 255 : i32
    %167 = tpu.dynamic_rotate %152 by %c255_i32_66 dim 1 : vector<8x256xf32>, i32 -> vector<8x256xf32>
    %168 = vector.broadcast %33 : vector<1x256xf32> to vector<8x256xf32>
    %169 = arith.mulf %167, %168 : vector<8x256xf32>
    %c254_i32 = arith.constant 254 : i32
    %170 = tpu.dynamic_rotate %152 by %c254_i32 dim 1 : vector<8x256xf32>, i32 -> vector<8x256xf32>
    %c254_i32_67 = arith.constant 254 : i32
    %171 = vector.broadcast %c254_i32_67 : i32 to vector<1x256xi32>
    %172 = arith.cmpi slt, %2, %171 : vector<1x256xi32>
    %c14_i32 = arith.constant 14 : i32
    %173 = vector.broadcast %c14_i32 : i32 to vector<1x256xi32>
    %174 = arith.cmpi slt, %4, %173 : vector<1x256xi32>
    %175 = arith.andi %172, %174 : vector<1x256xi1>
    %cst_68 = arith.constant 1.000000e+00 : f32
    %cst_69 = arith.constant 0.000000e+00 : f32
    %176 = vector.broadcast %cst_68 : f32 to vector<1x256xf32>
    %177 = vector.broadcast %cst_69 : f32 to vector<1x256xf32>
    %178 = arith.select %175, %176, %177 : vector<1x256xi1>, vector<1x256xf32>
    %179 = vector.broadcast %178 : vector<1x256xf32> to vector<8x256xf32>
    %180 = arith.mulf %170, %179 : vector<8x256xf32>
    %181 = tpu.concatenate %163, %166, %152, %169, %180 in 0 : vector<8x256xf32>, vector<8x256xf32>, vector<8x256xf32>, vector<8x256xf32>, vector<8x256xf32> -> vector<40x256xf32>
    %c0_70 = arith.constant 0 : index
    %c384 = arith.constant 384 : index
    %182 = vector.load %arg4[%c0_70, %c384] : memref<8x1536xf32, #tpu.memory_space<vmem>>, vector<8x40xf32>
    %cst_71 = arith.constant dense<0.000000e+00> : vector<8x256xf32>
    %183 = tpu.matmul %182, %181, %cst_71 {dimension_numbers = #tpu.dot_dimension_numbers<[1], [0], [0], [1], [0, 0, 1, 1], [], []>} : vector<8x40xf32>, vector<40x256xf32>, vector<8x256xf32> -> vector<8x256xf32>
    %c0_72 = arith.constant 0 : index
    %c3 = arith.constant 3 : index
    %184 = vector.load %arg5[%c0_72, %c3] : memref<8x10xf32, #tpu.memory_space<vmem>>, vector<8x1xf32>
    %185 = vector.broadcast %184 : vector<8x1xf32> to vector<8x256xf32>
    %186 = arith.addf %183, %185 : vector<8x256xf32>
    %c32_i32 = arith.constant 32 : i32
    %187 = tpu.dynamic_rotate %186 by %c32_i32 dim 1 : vector<8x256xf32>, i32 -> vector<8x256xf32>
    %c32_i32_73 = arith.constant 32 : i32
    %188 = vector.broadcast %c32_i32_73 : i32 to vector<1x256xi32>
    %189 = arith.cmpi sge, %2, %188 : vector<1x256xi32>
    %cst_74 = arith.constant 1.000000e+00 : f32
    %cst_75 = arith.constant 0.000000e+00 : f32
    %190 = vector.broadcast %cst_74 : f32 to vector<1x256xf32>
    %191 = vector.broadcast %cst_75 : f32 to vector<1x256xf32>
    %192 = arith.select %189, %190, %191 : vector<1x256xi1>, vector<1x256xf32>
    %193 = vector.broadcast %192 : vector<1x256xf32> to vector<8x256xf32>
    %194 = arith.mulf %187, %193 : vector<8x256xf32>
    %c16_i32_76 = arith.constant 16 : i32
    %195 = tpu.dynamic_rotate %186 by %c16_i32_76 dim 1 : vector<8x256xf32>, i32 -> vector<8x256xf32>
    %196 = vector.broadcast %47 : vector<1x256xf32> to vector<8x256xf32>
    %197 = arith.mulf %195, %196 : vector<8x256xf32>
    %c240_i32_77 = arith.constant 240 : i32
    %198 = tpu.dynamic_rotate %186 by %c240_i32_77 dim 1 : vector<8x256xf32>, i32 -> vector<8x256xf32>
    %199 = vector.broadcast %55 : vector<1x256xf32> to vector<8x256xf32>
    %200 = arith.mulf %198, %199 : vector<8x256xf32>
    %c224_i32 = arith.constant 224 : i32
    %201 = tpu.dynamic_rotate %186 by %c224_i32 dim 1 : vector<8x256xf32>, i32 -> vector<8x256xf32>
    %c224_i32_78 = arith.constant 224 : i32
    %202 = vector.broadcast %c224_i32_78 : i32 to vector<1x256xi32>
    %203 = arith.cmpi slt, %2, %202 : vector<1x256xi32>
    %cst_79 = arith.constant 1.000000e+00 : f32
    %cst_80 = arith.constant 0.000000e+00 : f32
    %204 = vector.broadcast %cst_79 : f32 to vector<1x256xf32>
    %205 = vector.broadcast %cst_80 : f32 to vector<1x256xf32>
    %206 = arith.select %203, %204, %205 : vector<1x256xi1>, vector<1x256xf32>
    %207 = vector.broadcast %206 : vector<1x256xf32> to vector<8x256xf32>
    %208 = arith.mulf %201, %207 : vector<8x256xf32>
    %209 = tpu.concatenate %194, %197, %186, %200, %208 in 0 : vector<8x256xf32>, vector<8x256xf32>, vector<8x256xf32>, vector<8x256xf32>, vector<8x256xf32> -> vector<40x256xf32>
    %c0_81 = arith.constant 0 : index
    %c512 = arith.constant 512 : index
    %210 = vector.load %arg4[%c0_81, %c512] : memref<8x1536xf32, #tpu.memory_space<vmem>>, vector<8x40xf32>
    %cst_82 = arith.constant dense<0.000000e+00> : vector<8x256xf32>
    %211 = tpu.matmul %210, %209, %cst_82 {dimension_numbers = #tpu.dot_dimension_numbers<[1], [0], [0], [1], [0, 0, 1, 1], [], []>} : vector<8x40xf32>, vector<40x256xf32>, vector<8x256xf32> -> vector<8x256xf32>
    %c0_83 = arith.constant 0 : index
    %c4 = arith.constant 4 : index
    %212 = vector.load %arg5[%c0_83, %c4] : memref<8x10xf32, #tpu.memory_space<vmem>>, vector<8x1xf32>
    %213 = vector.broadcast %212 : vector<8x1xf32> to vector<8x256xf32>
    %214 = arith.addf %211, %213 : vector<8x256xf32>
    %c85_i32 = arith.constant 85 : i32
    %215 = tpu.dynamic_rotate %214 by %c85_i32 dim 1 : vector<8x256xf32>, i32 -> vector<8x256xf32>
    %c85_i32_84 = arith.constant 85 : i32
    %216 = vector.broadcast %c85_i32_84 : i32 to vector<1x256xi32>
    %217 = arith.cmpi sge, %2, %216 : vector<1x256xi32>
    %c5_i32 = arith.constant 5 : i32
    %218 = vector.broadcast %c5_i32 : i32 to vector<1x256xi32>
    %219 = arith.cmpi sge, %4, %218 : vector<1x256xi32>
    %220 = arith.andi %217, %219 : vector<1x256xi1>
    %cst_85 = arith.constant 1.000000e+00 : f32
    %cst_86 = arith.constant 0.000000e+00 : f32
    %221 = vector.broadcast %cst_85 : f32 to vector<1x256xf32>
    %222 = vector.broadcast %cst_86 : f32 to vector<1x256xf32>
    %223 = arith.select %220, %221, %222 : vector<1x256xi1>, vector<1x256xf32>
    %224 = vector.broadcast %223 : vector<1x256xf32> to vector<8x256xf32>
    %225 = arith.mulf %215, %224 : vector<8x256xf32>
    %c80_i32 = arith.constant 80 : i32
    %226 = tpu.dynamic_rotate %214 by %c80_i32 dim 1 : vector<8x256xf32>, i32 -> vector<8x256xf32>
    %c80_i32_87 = arith.constant 80 : i32
    %227 = vector.broadcast %c80_i32_87 : i32 to vector<1x256xi32>
    %228 = arith.cmpi sge, %2, %227 : vector<1x256xi32>
    %cst_88 = arith.constant 1.000000e+00 : f32
    %cst_89 = arith.constant 0.000000e+00 : f32
    %229 = vector.broadcast %cst_88 : f32 to vector<1x256xf32>
    %230 = vector.broadcast %cst_89 : f32 to vector<1x256xf32>
    %231 = arith.select %228, %229, %230 : vector<1x256xi1>, vector<1x256xf32>
    %232 = vector.broadcast %231 : vector<1x256xf32> to vector<8x256xf32>
    %233 = arith.mulf %226, %232 : vector<8x256xf32>
    %c75_i32 = arith.constant 75 : i32
    %234 = tpu.dynamic_rotate %214 by %c75_i32 dim 1 : vector<8x256xf32>, i32 -> vector<8x256xf32>
    %c75_i32_90 = arith.constant 75 : i32
    %235 = vector.broadcast %c75_i32_90 : i32 to vector<1x256xi32>
    %236 = arith.cmpi sge, %2, %235 : vector<1x256xi32>
    %c11_i32 = arith.constant 11 : i32
    %237 = vector.broadcast %c11_i32 : i32 to vector<1x256xi32>
    %238 = arith.cmpi slt, %4, %237 : vector<1x256xi32>
    %239 = arith.andi %236, %238 : vector<1x256xi1>
    %cst_91 = arith.constant 1.000000e+00 : f32
    %cst_92 = arith.constant 0.000000e+00 : f32
    %240 = vector.broadcast %cst_91 : f32 to vector<1x256xf32>
    %241 = vector.broadcast %cst_92 : f32 to vector<1x256xf32>
    %242 = arith.select %239, %240, %241 : vector<1x256xi1>, vector<1x256xf32>
    %243 = vector.broadcast %242 : vector<1x256xf32> to vector<8x256xf32>
    %244 = arith.mulf %234, %243 : vector<8x256xf32>
    %c5_i32_93 = arith.constant 5 : i32
    %245 = tpu.dynamic_rotate %214 by %c5_i32_93 dim 1 : vector<8x256xf32>, i32 -> vector<8x256xf32>
    %c5_i32_94 = arith.constant 5 : i32
    %246 = vector.broadcast %c5_i32_94 : i32 to vector<1x256xi32>
    %247 = arith.cmpi sge, %2, %246 : vector<1x256xi32>
    %c5_i32_95 = arith.constant 5 : i32
    %248 = vector.broadcast %c5_i32_95 : i32 to vector<1x256xi32>
    %249 = arith.cmpi sge, %4, %248 : vector<1x256xi32>
    %250 = arith.andi %247, %249 : vector<1x256xi1>
    %cst_96 = arith.constant 1.000000e+00 : f32
    %cst_97 = arith.constant 0.000000e+00 : f32
    %251 = vector.broadcast %cst_96 : f32 to vector<1x256xf32>
    %252 = vector.broadcast %cst_97 : f32 to vector<1x256xf32>
    %253 = arith.select %250, %251, %252 : vector<1x256xi1>, vector<1x256xf32>
    %254 = vector.broadcast %253 : vector<1x256xf32> to vector<8x256xf32>
    %255 = arith.mulf %245, %254 : vector<8x256xf32>
    %c251_i32 = arith.constant 251 : i32
    %256 = tpu.dynamic_rotate %214 by %c251_i32 dim 1 : vector<8x256xf32>, i32 -> vector<8x256xf32>
    %c251_i32_98 = arith.constant 251 : i32
    %257 = vector.broadcast %c251_i32_98 : i32 to vector<1x256xi32>
    %258 = arith.cmpi slt, %2, %257 : vector<1x256xi32>
    %c11_i32_99 = arith.constant 11 : i32
    %259 = vector.broadcast %c11_i32_99 : i32 to vector<1x256xi32>
    %260 = arith.cmpi slt, %4, %259 : vector<1x256xi32>
    %261 = arith.andi %258, %260 : vector<1x256xi1>
    %cst_100 = arith.constant 1.000000e+00 : f32
    %cst_101 = arith.constant 0.000000e+00 : f32
    %262 = vector.broadcast %cst_100 : f32 to vector<1x256xf32>
    %263 = vector.broadcast %cst_101 : f32 to vector<1x256xf32>
    %264 = arith.select %261, %262, %263 : vector<1x256xi1>, vector<1x256xf32>
    %265 = vector.broadcast %264 : vector<1x256xf32> to vector<8x256xf32>
    %266 = arith.mulf %256, %265 : vector<8x256xf32>
    %c181_i32 = arith.constant 181 : i32
    %267 = tpu.dynamic_rotate %214 by %c181_i32 dim 1 : vector<8x256xf32>, i32 -> vector<8x256xf32>
    %c181_i32_102 = arith.constant 181 : i32
    %268 = vector.broadcast %c181_i32_102 : i32 to vector<1x256xi32>
    %269 = arith.cmpi slt, %2, %268 : vector<1x256xi32>
    %c5_i32_103 = arith.constant 5 : i32
    %270 = vector.broadcast %c5_i32_103 : i32 to vector<1x256xi32>
    %271 = arith.cmpi sge, %4, %270 : vector<1x256xi32>
    %272 = arith.andi %269, %271 : vector<1x256xi1>
    %cst_104 = arith.constant 1.000000e+00 : f32
    %cst_105 = arith.constant 0.000000e+00 : f32
    %273 = vector.broadcast %cst_104 : f32 to vector<1x256xf32>
    %274 = vector.broadcast %cst_105 : f32 to vector<1x256xf32>
    %275 = arith.select %272, %273, %274 : vector<1x256xi1>, vector<1x256xf32>
    %276 = vector.broadcast %275 : vector<1x256xf32> to vector<8x256xf32>
    %277 = arith.mulf %267, %276 : vector<8x256xf32>
    %c176_i32 = arith.constant 176 : i32
    %278 = tpu.dynamic_rotate %214 by %c176_i32 dim 1 : vector<8x256xf32>, i32 -> vector<8x256xf32>
    %c176_i32_106 = arith.constant 176 : i32
    %279 = vector.broadcast %c176_i32_106 : i32 to vector<1x256xi32>
    %280 = arith.cmpi slt, %2, %279 : vector<1x256xi32>
    %cst_107 = arith.constant 1.000000e+00 : f32
    %cst_108 = arith.constant 0.000000e+00 : f32
    %281 = vector.broadcast %cst_107 : f32 to vector<1x256xf32>
    %282 = vector.broadcast %cst_108 : f32 to vector<1x256xf32>
    %283 = arith.select %280, %281, %282 : vector<1x256xi1>, vector<1x256xf32>
    %284 = vector.broadcast %283 : vector<1x256xf32> to vector<8x256xf32>
    %285 = arith.mulf %278, %284 : vector<8x256xf32>
    %c171_i32 = arith.constant 171 : i32
    %286 = tpu.dynamic_rotate %214 by %c171_i32 dim 1 : vector<8x256xf32>, i32 -> vector<8x256xf32>
    %c171_i32_109 = arith.constant 171 : i32
    %287 = vector.broadcast %c171_i32_109 : i32 to vector<1x256xi32>
    %288 = arith.cmpi slt, %2, %287 : vector<1x256xi32>
    %c11_i32_110 = arith.constant 11 : i32
    %289 = vector.broadcast %c11_i32_110 : i32 to vector<1x256xi32>
    %290 = arith.cmpi slt, %4, %289 : vector<1x256xi32>
    %291 = arith.andi %288, %290 : vector<1x256xi1>
    %cst_111 = arith.constant 1.000000e+00 : f32
    %cst_112 = arith.constant 0.000000e+00 : f32
    %292 = vector.broadcast %cst_111 : f32 to vector<1x256xf32>
    %293 = vector.broadcast %cst_112 : f32 to vector<1x256xf32>
    %294 = arith.select %291, %292, %293 : vector<1x256xi1>, vector<1x256xf32>
    %295 = vector.broadcast %294 : vector<1x256xf32> to vector<8x256xf32>
    %296 = arith.mulf %286, %295 : vector<8x256xf32>
    %297 = tpu.concatenate %225, %233, %244, %255, %214, %266, %277, %285, %296 in 0 : vector<8x256xf32>, vector<8x256xf32>, vector<8x256xf32>, vector<8x256xf32>, vector<8x256xf32>, vector<8x256xf32>, vector<8x256xf32>, vector<8x256xf32>, vector<8x256xf32> -> vector<72x256xf32>
    %c0_113 = arith.constant 0 : index
    %c640 = arith.constant 640 : index
    %298 = vector.load %arg4[%c0_113, %c640] : memref<8x1536xf32, #tpu.memory_space<vmem>>, vector<8x72xf32>
    %cst_114 = arith.constant dense<0.000000e+00> : vector<8x256xf32>
    %299 = tpu.matmul %298, %297, %cst_114 {dimension_numbers = #tpu.dot_dimension_numbers<[1], [0], [0], [1], [0, 0, 1, 1], [], []>} : vector<8x72xf32>, vector<72x256xf32>, vector<8x256xf32> -> vector<8x256xf32>
    %c0_115 = arith.constant 0 : index
    %c5 = arith.constant 5 : index
    %300 = vector.load %arg5[%c0_115, %c5] : memref<8x10xf32, #tpu.memory_space<vmem>>, vector<8x1xf32>
    %301 = vector.broadcast %300 : vector<8x1xf32> to vector<8x256xf32>
    %302 = arith.addf %299, %301 : vector<8x256xf32>
    %303 = vector.extract_strided_slice %11 {offsets = [24, 0], sizes = [8, 256], strides = [1, 1]} : vector<40x256xf32> to vector<8x256xf32>
    %c3_i32_116 = arith.constant 3 : i32
    %304 = tpu.dynamic_rotate %303 by %c3_i32_116 dim 1 : vector<8x256xf32>, i32 -> vector<8x256xf32>
    %305 = vector.broadcast %102 : vector<1x256xf32> to vector<8x256xf32>
    %306 = arith.mulf %304, %305 : vector<8x256xf32>
    %c2_i32_117 = arith.constant 2 : i32
    %307 = tpu.dynamic_rotate %303 by %c2_i32_117 dim 1 : vector<8x256xf32>, i32 -> vector<8x256xf32>
    %308 = vector.broadcast %161 : vector<1x256xf32> to vector<8x256xf32>
    %309 = arith.mulf %307, %308 : vector<8x256xf32>
    %c1_i32_118 = arith.constant 1 : i32
    %310 = tpu.dynamic_rotate %303 by %c1_i32_118 dim 1 : vector<8x256xf32>, i32 -> vector<8x256xf32>
    %311 = vector.broadcast %22 : vector<1x256xf32> to vector<8x256xf32>
    %312 = arith.mulf %310, %311 : vector<8x256xf32>
    %c255_i32_119 = arith.constant 255 : i32
    %313 = tpu.dynamic_rotate %303 by %c255_i32_119 dim 1 : vector<8x256xf32>, i32 -> vector<8x256xf32>
    %314 = vector.broadcast %33 : vector<1x256xf32> to vector<8x256xf32>
    %315 = arith.mulf %313, %314 : vector<8x256xf32>
    %c254_i32_120 = arith.constant 254 : i32
    %316 = tpu.dynamic_rotate %303 by %c254_i32_120 dim 1 : vector<8x256xf32>, i32 -> vector<8x256xf32>
    %317 = vector.broadcast %178 : vector<1x256xf32> to vector<8x256xf32>
    %318 = arith.mulf %316, %317 : vector<8x256xf32>
    %c253_i32_121 = arith.constant 253 : i32
    %319 = tpu.dynamic_rotate %303 by %c253_i32_121 dim 1 : vector<8x256xf32>, i32 -> vector<8x256xf32>
    %320 = vector.broadcast %113 : vector<1x256xf32> to vector<8x256xf32>
    %321 = arith.mulf %319, %320 : vector<8x256xf32>
    %322 = tpu.concatenate %306, %309, %312, %303, %315, %318, %321 in 0 : vector<8x256xf32>, vector<8x256xf32>, vector<8x256xf32>, vector<8x256xf32>, vector<8x256xf32>, vector<8x256xf32>, vector<8x256xf32> -> vector<56x256xf32>
    %c0_122 = arith.constant 0 : index
    %c768 = arith.constant 768 : index
    %323 = vector.load %arg4[%c0_122, %c768] : memref<8x1536xf32, #tpu.memory_space<vmem>>, vector<8x56xf32>
    %cst_123 = arith.constant dense<0.000000e+00> : vector<8x256xf32>
    %324 = tpu.matmul %323, %322, %cst_123 {dimension_numbers = #tpu.dot_dimension_numbers<[1], [0], [0], [1], [0, 0, 1, 1], [], []>} : vector<8x56xf32>, vector<56x256xf32>, vector<8x256xf32> -> vector<8x256xf32>
    %c0_124 = arith.constant 0 : index
    %c6 = arith.constant 6 : index
    %325 = vector.load %arg5[%c0_124, %c6] : memref<8x10xf32, #tpu.memory_space<vmem>>, vector<8x1xf32>
    %326 = vector.broadcast %325 : vector<8x1xf32> to vector<8x256xf32>
    %327 = arith.addf %324, %326 : vector<8x256xf32>
    %c48_i32_125 = arith.constant 48 : i32
    %328 = tpu.dynamic_rotate %327 by %c48_i32_125 dim 1 : vector<8x256xf32>, i32 -> vector<8x256xf32>
    %329 = vector.broadcast %80 : vector<1x256xf32> to vector<8x256xf32>
    %330 = arith.mulf %328, %329 : vector<8x256xf32>
    %c32_i32_126 = arith.constant 32 : i32
    %331 = tpu.dynamic_rotate %327 by %c32_i32_126 dim 1 : vector<8x256xf32>, i32 -> vector<8x256xf32>
    %332 = vector.broadcast %192 : vector<1x256xf32> to vector<8x256xf32>
    %333 = arith.mulf %331, %332 : vector<8x256xf32>
    %c16_i32_127 = arith.constant 16 : i32
    %334 = tpu.dynamic_rotate %327 by %c16_i32_127 dim 1 : vector<8x256xf32>, i32 -> vector<8x256xf32>
    %335 = vector.broadcast %47 : vector<1x256xf32> to vector<8x256xf32>
    %336 = arith.mulf %334, %335 : vector<8x256xf32>
    %c240_i32_128 = arith.constant 240 : i32
    %337 = tpu.dynamic_rotate %327 by %c240_i32_128 dim 1 : vector<8x256xf32>, i32 -> vector<8x256xf32>
    %338 = vector.broadcast %55 : vector<1x256xf32> to vector<8x256xf32>
    %339 = arith.mulf %337, %338 : vector<8x256xf32>
    %c224_i32_129 = arith.constant 224 : i32
    %340 = tpu.dynamic_rotate %327 by %c224_i32_129 dim 1 : vector<8x256xf32>, i32 -> vector<8x256xf32>
    %341 = vector.broadcast %206 : vector<1x256xf32> to vector<8x256xf32>
    %342 = arith.mulf %340, %341 : vector<8x256xf32>
    %c208_i32_130 = arith.constant 208 : i32
    %343 = tpu.dynamic_rotate %327 by %c208_i32_130 dim 1 : vector<8x256xf32>, i32 -> vector<8x256xf32>
    %344 = vector.broadcast %132 : vector<1x256xf32> to vector<8x256xf32>
    %345 = arith.mulf %343, %344 : vector<8x256xf32>
    %346 = tpu.concatenate %330, %333, %336, %327, %339, %342, %345 in 0 : vector<8x256xf32>, vector<8x256xf32>, vector<8x256xf32>, vector<8x256xf32>, vector<8x256xf32>, vector<8x256xf32>, vector<8x256xf32> -> vector<56x256xf32>
    %c0_131 = arith.constant 0 : index
    %c896 = arith.constant 896 : index
    %347 = vector.load %arg4[%c0_131, %c896] : memref<8x1536xf32, #tpu.memory_space<vmem>>, vector<8x56xf32>
    %cst_132 = arith.constant dense<0.000000e+00> : vector<8x256xf32>
    %348 = tpu.matmul %347, %346, %cst_132 {dimension_numbers = #tpu.dot_dimension_numbers<[1], [0], [0], [1], [0, 0, 1, 1], [], []>} : vector<8x56xf32>, vector<56x256xf32>, vector<8x256xf32> -> vector<8x256xf32>
    %c0_133 = arith.constant 0 : index
    %c7 = arith.constant 7 : index
    %349 = vector.load %arg5[%c0_133, %c7] : memref<8x10xf32, #tpu.memory_space<vmem>>, vector<8x1xf32>
    %350 = vector.broadcast %349 : vector<8x1xf32> to vector<8x256xf32>
    %351 = arith.addf %348, %350 : vector<8x256xf32>
    %c119_i32 = arith.constant 119 : i32
    %352 = tpu.dynamic_rotate %351 by %c119_i32 dim 1 : vector<8x256xf32>, i32 -> vector<8x256xf32>
    %c119_i32_134 = arith.constant 119 : i32
    %353 = vector.broadcast %c119_i32_134 : i32 to vector<1x256xi32>
    %354 = arith.cmpi sge, %2, %353 : vector<1x256xi32>
    %c7_i32 = arith.constant 7 : i32
    %355 = vector.broadcast %c7_i32 : i32 to vector<1x256xi32>
    %356 = arith.cmpi sge, %4, %355 : vector<1x256xi32>
    %357 = arith.andi %354, %356 : vector<1x256xi1>
    %cst_135 = arith.constant 1.000000e+00 : f32
    %cst_136 = arith.constant 0.000000e+00 : f32
    %358 = vector.broadcast %cst_135 : f32 to vector<1x256xf32>
    %359 = vector.broadcast %cst_136 : f32 to vector<1x256xf32>
    %360 = arith.select %357, %358, %359 : vector<1x256xi1>, vector<1x256xf32>
    %361 = vector.broadcast %360 : vector<1x256xf32> to vector<8x256xf32>
    %362 = arith.mulf %352, %361 : vector<8x256xf32>
    %c112_i32 = arith.constant 112 : i32
    %363 = tpu.dynamic_rotate %351 by %c112_i32 dim 1 : vector<8x256xf32>, i32 -> vector<8x256xf32>
    %c112_i32_137 = arith.constant 112 : i32
    %364 = vector.broadcast %c112_i32_137 : i32 to vector<1x256xi32>
    %365 = arith.cmpi sge, %2, %364 : vector<1x256xi32>
    %cst_138 = arith.constant 1.000000e+00 : f32
    %cst_139 = arith.constant 0.000000e+00 : f32
    %366 = vector.broadcast %cst_138 : f32 to vector<1x256xf32>
    %367 = vector.broadcast %cst_139 : f32 to vector<1x256xf32>
    %368 = arith.select %365, %366, %367 : vector<1x256xi1>, vector<1x256xf32>
    %369 = vector.broadcast %368 : vector<1x256xf32> to vector<8x256xf32>
    %370 = arith.mulf %363, %369 : vector<8x256xf32>
    %c105_i32 = arith.constant 105 : i32
    %371 = tpu.dynamic_rotate %351 by %c105_i32 dim 1 : vector<8x256xf32>, i32 -> vector<8x256xf32>
    %c105_i32_140 = arith.constant 105 : i32
    %372 = vector.broadcast %c105_i32_140 : i32 to vector<1x256xi32>
    %373 = arith.cmpi sge, %2, %372 : vector<1x256xi32>
    %c9_i32 = arith.constant 9 : i32
    %374 = vector.broadcast %c9_i32 : i32 to vector<1x256xi32>
    %375 = arith.cmpi slt, %4, %374 : vector<1x256xi32>
    %376 = arith.andi %373, %375 : vector<1x256xi1>
    %cst_141 = arith.constant 1.000000e+00 : f32
    %cst_142 = arith.constant 0.000000e+00 : f32
    %377 = vector.broadcast %cst_141 : f32 to vector<1x256xf32>
    %378 = vector.broadcast %cst_142 : f32 to vector<1x256xf32>
    %379 = arith.select %376, %377, %378 : vector<1x256xi1>, vector<1x256xf32>
    %380 = vector.broadcast %379 : vector<1x256xf32> to vector<8x256xf32>
    %381 = arith.mulf %371, %380 : vector<8x256xf32>
    %c7_i32_143 = arith.constant 7 : i32
    %382 = tpu.dynamic_rotate %351 by %c7_i32_143 dim 1 : vector<8x256xf32>, i32 -> vector<8x256xf32>
    %c7_i32_144 = arith.constant 7 : i32
    %383 = vector.broadcast %c7_i32_144 : i32 to vector<1x256xi32>
    %384 = arith.cmpi sge, %2, %383 : vector<1x256xi32>
    %c7_i32_145 = arith.constant 7 : i32
    %385 = vector.broadcast %c7_i32_145 : i32 to vector<1x256xi32>
    %386 = arith.cmpi sge, %4, %385 : vector<1x256xi32>
    %387 = arith.andi %384, %386 : vector<1x256xi1>
    %cst_146 = arith.constant 1.000000e+00 : f32
    %cst_147 = arith.constant 0.000000e+00 : f32
    %388 = vector.broadcast %cst_146 : f32 to vector<1x256xf32>
    %389 = vector.broadcast %cst_147 : f32 to vector<1x256xf32>
    %390 = arith.select %387, %388, %389 : vector<1x256xi1>, vector<1x256xf32>
    %391 = vector.broadcast %390 : vector<1x256xf32> to vector<8x256xf32>
    %392 = arith.mulf %382, %391 : vector<8x256xf32>
    %c249_i32 = arith.constant 249 : i32
    %393 = tpu.dynamic_rotate %351 by %c249_i32 dim 1 : vector<8x256xf32>, i32 -> vector<8x256xf32>
    %c249_i32_148 = arith.constant 249 : i32
    %394 = vector.broadcast %c249_i32_148 : i32 to vector<1x256xi32>
    %395 = arith.cmpi slt, %2, %394 : vector<1x256xi32>
    %c9_i32_149 = arith.constant 9 : i32
    %396 = vector.broadcast %c9_i32_149 : i32 to vector<1x256xi32>
    %397 = arith.cmpi slt, %4, %396 : vector<1x256xi32>
    %398 = arith.andi %395, %397 : vector<1x256xi1>
    %cst_150 = arith.constant 1.000000e+00 : f32
    %cst_151 = arith.constant 0.000000e+00 : f32
    %399 = vector.broadcast %cst_150 : f32 to vector<1x256xf32>
    %400 = vector.broadcast %cst_151 : f32 to vector<1x256xf32>
    %401 = arith.select %398, %399, %400 : vector<1x256xi1>, vector<1x256xf32>
    %402 = vector.broadcast %401 : vector<1x256xf32> to vector<8x256xf32>
    %403 = arith.mulf %393, %402 : vector<8x256xf32>
    %c151_i32 = arith.constant 151 : i32
    %404 = tpu.dynamic_rotate %351 by %c151_i32 dim 1 : vector<8x256xf32>, i32 -> vector<8x256xf32>
    %c151_i32_152 = arith.constant 151 : i32
    %405 = vector.broadcast %c151_i32_152 : i32 to vector<1x256xi32>
    %406 = arith.cmpi slt, %2, %405 : vector<1x256xi32>
    %c7_i32_153 = arith.constant 7 : i32
    %407 = vector.broadcast %c7_i32_153 : i32 to vector<1x256xi32>
    %408 = arith.cmpi sge, %4, %407 : vector<1x256xi32>
    %409 = arith.andi %406, %408 : vector<1x256xi1>
    %cst_154 = arith.constant 1.000000e+00 : f32
    %cst_155 = arith.constant 0.000000e+00 : f32
    %410 = vector.broadcast %cst_154 : f32 to vector<1x256xf32>
    %411 = vector.broadcast %cst_155 : f32 to vector<1x256xf32>
    %412 = arith.select %409, %410, %411 : vector<1x256xi1>, vector<1x256xf32>
    %413 = vector.broadcast %412 : vector<1x256xf32> to vector<8x256xf32>
    %414 = arith.mulf %404, %413 : vector<8x256xf32>
    %c144_i32 = arith.constant 144 : i32
    %415 = tpu.dynamic_rotate %351 by %c144_i32 dim 1 : vector<8x256xf32>, i32 -> vector<8x256xf32>
    %c144_i32_156 = arith.constant 144 : i32
    %416 = vector.broadcast %c144_i32_156 : i32 to vector<1x256xi32>
    %417 = arith.cmpi slt, %2, %416 : vector<1x256xi32>
    %cst_157 = arith.constant 1.000000e+00 : f32
    %cst_158 = arith.constant 0.000000e+00 : f32
    %418 = vector.broadcast %cst_157 : f32 to vector<1x256xf32>
    %419 = vector.broadcast %cst_158 : f32 to vector<1x256xf32>
    %420 = arith.select %417, %418, %419 : vector<1x256xi1>, vector<1x256xf32>
    %421 = vector.broadcast %420 : vector<1x256xf32> to vector<8x256xf32>
    %422 = arith.mulf %415, %421 : vector<8x256xf32>
    %c137_i32 = arith.constant 137 : i32
    %423 = tpu.dynamic_rotate %351 by %c137_i32 dim 1 : vector<8x256xf32>, i32 -> vector<8x256xf32>
    %c137_i32_159 = arith.constant 137 : i32
    %424 = vector.broadcast %c137_i32_159 : i32 to vector<1x256xi32>
    %425 = arith.cmpi slt, %2, %424 : vector<1x256xi32>
    %c9_i32_160 = arith.constant 9 : i32
    %426 = vector.broadcast %c9_i32_160 : i32 to vector<1x256xi32>
    %427 = arith.cmpi slt, %4, %426 : vector<1x256xi32>
    %428 = arith.andi %425, %427 : vector<1x256xi1>
    %cst_161 = arith.constant 1.000000e+00 : f32
    %cst_162 = arith.constant 0.000000e+00 : f32
    %429 = vector.broadcast %cst_161 : f32 to vector<1x256xf32>
    %430 = vector.broadcast %cst_162 : f32 to vector<1x256xf32>
    %431 = arith.select %428, %429, %430 : vector<1x256xi1>, vector<1x256xf32>
    %432 = vector.broadcast %431 : vector<1x256xf32> to vector<8x256xf32>
    %433 = arith.mulf %423, %432 : vector<8x256xf32>
    %434 = tpu.concatenate %362, %370, %381, %392, %351, %403, %414, %422, %433 in 0 : vector<8x256xf32>, vector<8x256xf32>, vector<8x256xf32>, vector<8x256xf32>, vector<8x256xf32>, vector<8x256xf32>, vector<8x256xf32>, vector<8x256xf32>, vector<8x256xf32> -> vector<72x256xf32>
    %c0_163 = arith.constant 0 : index
    %c1024 = arith.constant 1024 : index
    %435 = vector.load %arg4[%c0_163, %c1024] : memref<8x1536xf32, #tpu.memory_space<vmem>>, vector<8x72xf32>
    %cst_164 = arith.constant dense<0.000000e+00> : vector<8x256xf32>
    %436 = tpu.matmul %435, %434, %cst_164 {dimension_numbers = #tpu.dot_dimension_numbers<[1], [0], [0], [1], [0, 0, 1, 1], [], []>} : vector<8x72xf32>, vector<72x256xf32>, vector<8x256xf32> -> vector<8x256xf32>
    %c0_165 = arith.constant 0 : index
    %c8 = arith.constant 8 : index
    %437 = vector.load %arg5[%c0_165, %c8] : memref<8x10xf32, #tpu.memory_space<vmem>>, vector<8x1xf32>
    %438 = vector.broadcast %437 : vector<8x1xf32> to vector<8x256xf32>
    %439 = arith.addf %436, %438 : vector<8x256xf32>
    %440 = vector.extract_strided_slice %11 {offsets = [32, 0], sizes = [8, 256], strides = [1, 1]} : vector<40x256xf32> to vector<8x256xf32>
    %441 = tpu.concatenate %12, %151, %302, %439 in 0 : vector<8x256xf32>, vector<8x256xf32>, vector<8x256xf32>, vector<8x256xf32> -> vector<32x256xf32>
    %c17_i32 = arith.constant 17 : i32
    %442 = tpu.dynamic_rotate %441 by %c17_i32 dim 1 : vector<32x256xf32>, i32 -> vector<32x256xf32>
    %c17_i32_166 = arith.constant 17 : i32
    %443 = vector.broadcast %c17_i32_166 : i32 to vector<1x256xi32>
    %444 = arith.cmpi sge, %2, %443 : vector<1x256xi32>
    %c1_i32_167 = arith.constant 1 : i32
    %445 = vector.broadcast %c1_i32_167 : i32 to vector<1x256xi32>
    %446 = arith.cmpi sge, %4, %445 : vector<1x256xi32>
    %447 = arith.andi %444, %446 : vector<1x256xi1>
    %cst_168 = arith.constant 1.000000e+00 : f32
    %cst_169 = arith.constant 0.000000e+00 : f32
    %448 = vector.broadcast %cst_168 : f32 to vector<1x256xf32>
    %449 = vector.broadcast %cst_169 : f32 to vector<1x256xf32>
    %450 = arith.select %447, %448, %449 : vector<1x256xi1>, vector<1x256xf32>
    %451 = vector.broadcast %450 : vector<1x256xf32> to vector<32x256xf32>
    %452 = arith.mulf %442, %451 : vector<32x256xf32>
    %c16_i32_170 = arith.constant 16 : i32
    %453 = tpu.dynamic_rotate %441 by %c16_i32_170 dim 1 : vector<32x256xf32>, i32 -> vector<32x256xf32>
    %454 = vector.broadcast %47 : vector<1x256xf32> to vector<32x256xf32>
    %455 = arith.mulf %453, %454 : vector<32x256xf32>
    %c15_i32_171 = arith.constant 15 : i32
    %456 = tpu.dynamic_rotate %441 by %c15_i32_171 dim 1 : vector<32x256xf32>, i32 -> vector<32x256xf32>
    %c15_i32_172 = arith.constant 15 : i32
    %457 = vector.broadcast %c15_i32_172 : i32 to vector<1x256xi32>
    %458 = arith.cmpi sge, %2, %457 : vector<1x256xi32>
    %c15_i32_173 = arith.constant 15 : i32
    %459 = vector.broadcast %c15_i32_173 : i32 to vector<1x256xi32>
    %460 = arith.cmpi slt, %4, %459 : vector<1x256xi32>
    %461 = arith.andi %458, %460 : vector<1x256xi1>
    %cst_174 = arith.constant 1.000000e+00 : f32
    %cst_175 = arith.constant 0.000000e+00 : f32
    %462 = vector.broadcast %cst_174 : f32 to vector<1x256xf32>
    %463 = vector.broadcast %cst_175 : f32 to vector<1x256xf32>
    %464 = arith.select %461, %462, %463 : vector<1x256xi1>, vector<1x256xf32>
    %465 = vector.broadcast %464 : vector<1x256xf32> to vector<32x256xf32>
    %466 = arith.mulf %456, %465 : vector<32x256xf32>
    %c1_i32_176 = arith.constant 1 : i32
    %467 = tpu.dynamic_rotate %441 by %c1_i32_176 dim 1 : vector<32x256xf32>, i32 -> vector<32x256xf32>
    %468 = vector.broadcast %22 : vector<1x256xf32> to vector<32x256xf32>
    %469 = arith.mulf %467, %468 : vector<32x256xf32>
    %c255_i32_177 = arith.constant 255 : i32
    %470 = tpu.dynamic_rotate %441 by %c255_i32_177 dim 1 : vector<32x256xf32>, i32 -> vector<32x256xf32>
    %471 = vector.broadcast %33 : vector<1x256xf32> to vector<32x256xf32>
    %472 = arith.mulf %470, %471 : vector<32x256xf32>
    %c241_i32 = arith.constant 241 : i32
    %473 = tpu.dynamic_rotate %441 by %c241_i32 dim 1 : vector<32x256xf32>, i32 -> vector<32x256xf32>
    %c241_i32_178 = arith.constant 241 : i32
    %474 = vector.broadcast %c241_i32_178 : i32 to vector<1x256xi32>
    %475 = arith.cmpi slt, %2, %474 : vector<1x256xi32>
    %c1_i32_179 = arith.constant 1 : i32
    %476 = vector.broadcast %c1_i32_179 : i32 to vector<1x256xi32>
    %477 = arith.cmpi sge, %4, %476 : vector<1x256xi32>
    %478 = arith.andi %475, %477 : vector<1x256xi1>
    %cst_180 = arith.constant 1.000000e+00 : f32
    %cst_181 = arith.constant 0.000000e+00 : f32
    %479 = vector.broadcast %cst_180 : f32 to vector<1x256xf32>
    %480 = vector.broadcast %cst_181 : f32 to vector<1x256xf32>
    %481 = arith.select %478, %479, %480 : vector<1x256xi1>, vector<1x256xf32>
    %482 = vector.broadcast %481 : vector<1x256xf32> to vector<32x256xf32>
    %483 = arith.mulf %473, %482 : vector<32x256xf32>
    %c240_i32_182 = arith.constant 240 : i32
    %484 = tpu.dynamic_rotate %441 by %c240_i32_182 dim 1 : vector<32x256xf32>, i32 -> vector<32x256xf32>
    %485 = vector.broadcast %55 : vector<1x256xf32> to vector<32x256xf32>
    %486 = arith.mulf %484, %485 : vector<32x256xf32>
    %c239_i32 = arith.constant 239 : i32
    %487 = tpu.dynamic_rotate %441 by %c239_i32 dim 1 : vector<32x256xf32>, i32 -> vector<32x256xf32>
    %c239_i32_183 = arith.constant 239 : i32
    %488 = vector.broadcast %c239_i32_183 : i32 to vector<1x256xi32>
    %489 = arith.cmpi slt, %2, %488 : vector<1x256xi32>
    %c15_i32_184 = arith.constant 15 : i32
    %490 = vector.broadcast %c15_i32_184 : i32 to vector<1x256xi32>
    %491 = arith.cmpi slt, %4, %490 : vector<1x256xi32>
    %492 = arith.andi %489, %491 : vector<1x256xi1>
    %cst_185 = arith.constant 1.000000e+00 : f32
    %cst_186 = arith.constant 0.000000e+00 : f32
    %493 = vector.broadcast %cst_185 : f32 to vector<1x256xf32>
    %494 = vector.broadcast %cst_186 : f32 to vector<1x256xf32>
    %495 = arith.select %492, %493, %494 : vector<1x256xi1>, vector<1x256xf32>
    %496 = vector.broadcast %495 : vector<1x256xf32> to vector<32x256xf32>
    %497 = arith.mulf %487, %496 : vector<32x256xf32>
    %498 = tpu.concatenate %452, %455, %466, %469, %441, %472, %483, %486, %497 in 0 : vector<32x256xf32>, vector<32x256xf32>, vector<32x256xf32>, vector<32x256xf32>, vector<32x256xf32>, vector<32x256xf32>, vector<32x256xf32>, vector<32x256xf32>, vector<32x256xf32> -> vector<288x256xf32>
    %c0_187 = arith.constant 0 : index
    %c1152 = arith.constant 1152 : index
    %499 = vector.load %arg4[%c0_187, %c1152] : memref<8x1536xf32, #tpu.memory_space<vmem>>, vector<8x288xf32>
    %cst_188 = arith.constant dense<0.000000e+00> : vector<8x256xf32>
    %500 = tpu.matmul %499, %498, %cst_188 {dimension_numbers = #tpu.dot_dimension_numbers<[1], [0], [0], [1], [0, 0, 1, 1], [], []>} : vector<8x288xf32>, vector<288x256xf32>, vector<8x256xf32> -> vector<8x256xf32>
    %c0_189 = arith.constant 0 : index
    %c9 = arith.constant 9 : index
    %501 = vector.load %arg5[%c0_189, %c9] : memref<8x10xf32, #tpu.memory_space<vmem>>, vector<8x1xf32>
    %502 = vector.broadcast %501 : vector<8x1xf32> to vector<8x256xf32>
    %503 = arith.addf %500, %502 : vector<8x256xf32>
    %504 = arith.addf %503, %440 : vector<8x256xf32>
    %cst_190 = arith.constant 0.000000e+00 : f32
    %505 = vector.broadcast %cst_190 : f32 to vector<8x256xf32>
    %506 = arith.maximumf %504, %505 : vector<8x256xf32>
    %c0_191 = arith.constant 0 : index
    %c0_192 = arith.constant 0 : index
    %c0_193 = arith.constant 0 : index
    %507 = vector.load %arg6[%c0_191, %c0_192, %c0_193] : memref<1x8x256xf32, #tpu.memory_space<vmem>>, vector<1x8x256xf32>
    %508 = vector.shape_cast %507 : vector<1x8x256xf32> to vector<8x256xf32>
    %509 = vector.shape_cast %506 : vector<8x256xf32> to vector<1x8x256xf32>
    tpu.vector_store %arg6[%c0_191, %c0_192, %c0_193], %509 {strides = array<i32>} : memref<1x8x256xf32, #tpu.memory_space<vmem>>, vector<1x8x256xf32>,
    return
  }
  func.func @transform_0(%arg0: i32) -> (i32, i32, i32) {
    %c0_i32 = arith.constant 0 : i32
    %c0_i32_0 = arith.constant 0 : i32
    %c0_i32_1 = arith.constant 0 : i32
    return %arg0, %c0_i32, %c0_i32_0 : i32, i32, i32
  }
  func.func @transform_1(%arg0: i32) -> (i32, i32) {
    %c0_i32 = arith.constant 0 : i32
    %c0_i32_0 = arith.constant 0 : i32
    %c0_i32_1 = arith.constant 0 : i32
    return %c0_i32, %c0_i32_0 : i32, i32
  }
  func.func @transform_2(%arg0: i32) -> (i32, i32) {
    %c0_i32 = arith.constant 0 : i32
    %c0_i32_0 = arith.constant 0 : i32
    %c0_i32_1 = arith.constant 0 : i32
    return %c0_i32, %c0_i32_0 : i32, i32
  }
  func.func @transform_3(%arg0: i32) -> (i32, i32) {
    %c0_i32 = arith.constant 0 : i32
    %c0_i32_0 = arith.constant 0 : i32
    %c0_i32_1 = arith.constant 0 : i32
    return %c0_i32, %c0_i32_0 : i32, i32
  }
  func.func @transform_4(%arg0: i32) -> (i32, i32) {
    %c0_i32 = arith.constant 0 : i32
    %c0_i32_0 = arith.constant 0 : i32
    %c0_i32_1 = arith.constant 0 : i32
    return %c0_i32, %c0_i32_0 : i32, i32
  }
  func.func @transform_5(%arg0: i32) -> (i32, i32, i32) {
    %c0_i32 = arith.constant 0 : i32
    %c0_i32_0 = arith.constant 0 : i32
    %c0_i32_1 = arith.constant 0 : i32
    return %arg0, %c0_i32, %c0_i32_0 : i32, i32, i32
  }
}

</mosaic_0001>

<llo_original>
// kernel: rfb_modified_forward.1
$region0: #{rfb_modified_forward.1}
  #allocation0 [shape = 'u32[]', space=smem, size = 0x4, offset = 0x4, fixed_abs, tag = 'smem constant byte address 0x4 - core index']
  #allocation1 [shape = 'u32[144,128]{1,0:T(1,128)}', space=vmem, size = 0x12000, scoped, tag = 'internal scratch']
  %s0 = inlined_call_operand.vmem [shape: f32[2,4,256], index: 0, kind: input, shape index: {}]
  %s1 = inlined_call_operand.vmem [shape: f32[40,4], index: 1, kind: input, shape index: {}]
  %s2 = inlined_call_operand.vmem [shape: f32[40,1], index: 2, kind: input, shape index: {}]
  %s3 = inlined_call_operand.vmem [shape: f32[8,1536], index: 3, kind: input, shape index: {}]
  %s4 = inlined_call_operand.vmem [shape: f32[8,10], index: 4, kind: input, shape index: {}]
  %s5 = inlined_call_operand.vmem [shape: f32[2,8,256], index: 5, kind: output, shape index: {}]
  %s6 = sld [smem:[#allocation0]]
  $region53: #{rfb_modified_forward.1} parent=0
    _
  %s8 = ssub.s32 1, %s6
  %s9 = scalar_select 0, %s8, %s6
  loop: start=0, step=1, limit=4
  $region2: #{rfb_modified_forward.1} parent=0 // loop_pre_header
    _
  $region3: #{rfb_modified_forward.1} parent=0 // loop_header
    %s11 = sphi 0, %s15
    %p12 = scmp.ge.s32.totalorder %s11, 4
    %s21 = sphi 0, %s23
    %s24 = sphi 0, %s21
    %s25 = sphi 0, %s24
    %s41 = sphi 0, %s25
    %s45 = sphi 0, %s45
    %s47 = sphi 0, %s45
    %s48 = sphi 0, %s47
    %s62 = sphi 0, %s48
    %s66 = sphi 0, %s66
    %s68 = sphi 0, %s66
    %s69 = sphi 0, %s68
    %s83 = sphi 0, %s69
    %s87 = sphi 0, %s87
    %s89 = sphi 0, %s87
    %s90 = sphi 0, %s89
    %s104 = sphi 0, %s90
    %s108 = sphi 0, %s108
    %s110 = sphi 0, %s108
    %s111 = sphi 0, %s110
    %s125 = sphi 0, %s111
    %s131 = sphi 0, %s133
    %s134 = sphi 0, %s131
    %s135 = sphi 0, %s134
    %s151 = sphi 0, %s135
  $region4: #{rfb_modified_forward.1} parent=0 // loop_header_branch
    %14 = sbr.rel (%p12) target = $region8
  $region5: #{rfb_modified_forward.1} parent=0 // loop_body
    %s16 = ssub.s32 %s11, 1
    %s17 = ssub.s32 %s11, 2
    %s18 = sadd.s32 %s11, 1
    %s19 = ssub.s32 %s11, %s18
    %p20 = scmp.eq.s32.totalorder %s19, 0
    %s22 = sadd.s32 %s21, 1
    %s23 = scalar_select %p20, %s21, %s22
    %p26 = pneg %p20
    %p27 = scmp.eq.s32.totalorder %s11, 1
    %p28 = por %p26, %p27
    %p29 = scmp.ne.s32.totalorder %s21, %s24
    %p30 = scmp.eq.s32.totalorder %s11, 0
    %p31 = por %p29, %p30
    %p32 = scmp.ne.s32.totalorder %s21, %s24
    %p33 = scmp.eq.s32.totalorder %s16, 1
    %p34 = por %p32, %p33
    %p35 = scmp.ne.s32.totalorder %s24, %s25
    %p36 = scmp.eq.s32.totalorder %s16, 0
    %p37 = por %p35, %p36
    %p38 = scmp.ne.s32.totalorder %s24, %s25
    %p39 = scmp.eq.s32.totalorder %s17, 1
    %p40 = por %p38, %p39
    %p42 = scmp.ne.s32.totalorder %s25, %s41
    %p43 = scmp.eq.s32.totalorder %s17, 0
    %p44 = por %p42, %p43
    %s46 = sadd.s32 %s45, 1
    %p49 = scmp.eq.s32.totalorder %s11, 1
    %p50 = scmp.ne.s32.totalorder %s45, %s47
    %p51 = scmp.eq.s32.totalorder %s11, 0
    %p52 = por %p50, %p51
    %p53 = scmp.ne.s32.totalorder %s45, %s47
    %p54 = scmp.eq.s32.totalorder %s16, 1
    %p55 = por %p53, %p54
    %p56 = scmp.ne.s32.totalorder %s47, %s48
    %p57 = scmp.eq.s32.totalorder %s16, 0
    %p58 = por %p56, %p57
    %p59 = scmp.ne.s32.totalorder %s47, %s48
    %p60 = scmp.eq.s32.totalorder %s17, 1
    %p61 = por %p59, %p60
    %p63 = scmp.ne.s32.totalorder %s48, %s62
    %p64 = scmp.eq.s32.totalorder %s17, 0
    %p65 = por %p63, %p64
    %s67 = sadd.s32 %s66, 1
    %p70 = scmp.eq.s32.totalorder %s11, 1
    %p71 = scmp.ne.s32.totalorder %s66, %s68
    %p72 = scmp.eq.s32.totalorder %s11, 0
    %p73 = por %p71, %p72
    %p74 = scmp.ne.s32.totalorder %s66, %s68
    %p75 = scmp.eq.s32.totalorder %s16, 1
    %p76 = por %p74, %p75
    %p77 = scmp.ne.s32.totalorder %s68, %s69
    %p78 = scmp.eq.s32.totalorder %s16, 0
    %p79 = por %p77, %p78
    %p80 = scmp.ne.s32.totalorder %s68, %s69
    %p81 = scmp.eq.s32.totalorder %s17, 1
    %p82 = por %p80, %p81
    %p84 = scmp.ne.s32.totalorder %s69, %s83
    %p85 = scmp.eq.s32.totalorder %s17, 0
    %p86 = por %p84, %p85
    %s88 = sadd.s32 %s87, 1
    %p91 = scmp.eq.s32.totalorder %s11, 1
    %p92 = scmp.ne.s32.totalorder %s87, %s89
    %p93 = scmp.eq.s32.totalorder %s11, 0
    %p94 = por %p92, %p93
    %p95 = scmp.ne.s32.totalorder %s87, %s89
    %p96 = scmp.eq.s32.totalorder %s16, 1
    %p97 = por %p95, %p96
    %p98 = scmp.ne.s32.totalorder %s89, %s90
    %p99 = scmp.eq.s32.totalorder %s16, 0
    %p100 = por %p98, %p99
    %p101 = scmp.ne.s32.totalorder %s89, %s90
    %p102 = scmp.eq.s32.totalorder %s17, 1
    %p103 = por %p101, %p102
    %p105 = scmp.ne.s32.totalorder %s90, %s104
    %p106 = scmp.eq.s32.totalorder %s17, 0
    %p107 = por %p105, %p106
    %s109 = sadd.s32 %s108, 1
    %p112 = scmp.eq.s32.totalorder %s11, 1
    %p113 = scmp.ne.s32.totalorder %s108, %s110
    %p114 = scmp.eq.s32.totalorder %s11, 0
    %p115 = por %p113, %p114
    %p116 = scmp.ne.s32.totalorder %s108, %s110
    %p117 = scmp.eq.s32.totalorder %s16, 1
    %p118 = por %p116, %p117
    %p119 = scmp.ne.s32.totalorder %s110, %s111
    %p120 = scmp.eq.s32.totalorder %s16, 0
    %p121 = por %p119, %p120
    %p122 = scmp.ne.s32.totalorder %s110, %s111
    %p123 = scmp.eq.s32.totalorder %s17, 1
    %p124 = por %p122, %p123
    %p126 = scmp.ne.s32.totalorder %s111, %s125
    %p127 = scmp.eq.s32.totalorder %s17, 0
    %p128 = por %p126, %p127
    %s129 = ssub.s32 %s11, %s18
    %p130 = scmp.eq.s32.totalorder %s129, 0
    %s132 = sadd.s32 %s131, 1
    %s133 = scalar_select %p130, %s131, %s132
    %p136 = pneg %p130
    %p137 = scmp.eq.s32.totalorder %s11, 1
    %p138 = por %p136, %p137
    %p139 = scmp.ne.s32.totalorder %s131, %s134
    %p140 = scmp.eq.s32.totalorder %s11, 0
    %p141 = por %p139, %p140
    %p142 = scmp.ne.s32.totalorder %s131, %s134
    %p143 = scmp.eq.s32.totalorder %s16, 1
    %p144 = por %p142, %p143
    %p145 = scmp.ne.s32.totalorder %s134, %s135
    %p146 = scmp.eq.s32.totalorder %s16, 0
    %p147 = por %p145, %p146
    %p148 = scmp.ne.s32.totalorder %s134, %s135
    %p149 = scmp.eq.s32.totalorder %s17, 1
    %p150 = por %p148, %p149
    %p152 = scmp.ne.s32.totalorder %s135, %s151
    %p153 = scmp.eq.s32.totalorder %s17, 0
    %p154 = por %p152, %p153
    %p155 = scmp.le.s32.totalorder 1, %s11
    %p156 = scmp.lt.s32.totalorder %s11, 3
    %p157 = pnand %p155, %p156
    %p158 = pneg %p157
    // Predicated region
    $region9: #{rfb_modified_forward.1} parent=5 // pred_check
      _
    $region10: #{rfb_modified_forward.1} parent=5 // pred_check_branch
      %160 = sbr.rel (%p157) target = $region12
    $region11: #{rfb_modified_forward.1} parent=5 // pred_region
      %s161 = ssub.s32 %s11, 1
      // Predicated region
      $region13: #{rfb_modified_forward.1} parent=11 // pred_check
        %p162 = pneg %p58
      $region14: #{rfb_modified_forward.1} parent=11 // pred_check_branch
        %164 = sbr.rel (%p162) target = $region16
      $region15: #{rfb_modified_forward.1} parent=11 // pred_region
        _
      $region16: #{rfb_modified_forward.1} parent=11 // pred_fallthru
        _
      // Predicated region
      $region17: #{rfb_modified_forward.1} parent=11 // pred_check
        %p165 = pneg %p79
      $region18: #{rfb_modified_forward.1} parent=11 // pred_check_branch
        %167 = sbr.rel (%p165) target = $region20
      $region19: #{rfb_modified_forward.1} parent=11 // pred_region
        _
      $region20: #{rfb_modified_forward.1} parent=11 // pred_fallthru
        _
      // Predicated region
      $region21: #{rfb_modified_forward.1} parent=11 // pred_check
        %p168 = pneg %p100
      $region22: #{rfb_modified_forward.1} parent=11 // pred_check_branch
        %170 = sbr.rel (%p168) target = $region24
      $region23: #{rfb_modified_forward.1} parent=11 // pred_region
        _
      $region24: #{rfb_modified_forward.1} parent=11 // pred_fallthru
        _
      // Predicated region
      $region25: #{rfb_modified_forward.1} parent=11 // pred_check
        %p171 = pneg %p121
      $region26: #{rfb_modified_forward.1} parent=11 // pred_check_branch
        %173 = sbr.rel (%p171) target = $region28
      $region27: #{rfb_modified_forward.1} parent=11 // pred_region
        _
      $region28: #{rfb_modified_forward.1} parent=11 // pred_fallthru
        _
    $region12: #{rfb_modified_forward.1} parent=5 // pred_fallthru
      _
    %p174 = scmp.lt.s32.totalorder %s11, 2
    // Predicated region
    $region29: #{rfb_modified_forward.1} parent=5 // pred_check
      %p175 = pneg %p174
    $region30: #{rfb_modified_forward.1} parent=5 // pred_check_branch
      %177 = sbr.rel (%p175) target = $region32
    $region31: #{rfb_modified_forward.1} parent=5 // pred_region
      // Predicated region
      $region33: #{rfb_modified_forward.1} parent=31 // pred_check
        %p178 = pneg %p31
      $region34: #{rfb_modified_forward.1} parent=31 // pred_check_branch
        %180 = sbr.rel (%p178) target = $region36
      $region35: #{rfb_modified_forward.1} parent=31 // pred_region
        %p181 = scmp.lt.s32.totalorder %s11, 1
        %s182 = scalar_select %p181, %s11, 1
        %s183 = smul.addr %s182, 2
        %s184 = smul.addr %s183, 4
        %s185 = scalar_lea.vmem %s0, %s184
      $region36: #{rfb_modified_forward.1} parent=31 // pred_fallthru
        _
    $region32: #{rfb_modified_forward.1} parent=5 // pred_fallthru
      _
    %p186 = scmp.le.s32.totalorder 1, %s11
    %p187 = scmp.lt.s32.totalorder %s11, 3
    %p188 = pnand %p186, %p187
    %p189 = pneg %p188
    // Predicated region
    $region37: #{rfb_modified_forward.1} parent=5 // pred_check
      _
    $region38: #{rfb_modified_forward.1} parent=5 // pred_check_branch
      %191 = sbr.rel (%p188) target = $region40
    $region39: #{rfb_modified_forward.1} parent=5 // pred_region
      %s192 = ssub.s32 %s11, 1
      %p193 = scmp.lt.s32.totalorder %s16, 1
      %s194 = scalar_select %p193, %s16, 1
      %s195 = smul.addr %s194, 2
      %s196 = smul.addr %s195, 4
      %s197 = scalar_lea.vmem %s0, %s196
      %p198 = pneg %p37
      %p199 = pneg %p34
      %p200 = pneg %p58
      %p201 = pneg %p55
      %p202 = pneg %p79
      %p203 = pneg %p76
      %p204 = pneg %p100
      %p205 = pneg %p97
      %p206 = pneg %p121
      %p207 = pneg %p118
      %p208 = pneg %p147
      %p209 = pneg %p144
      %p210 = scmp.lt.s32.totalorder %s16, 1
      %s211 = scalar_select %p210, %s16, 1
      %s212 = smul.addr %s211, 2
      %s213 = smul.addr %s212, 8
      %s214 = scalar_lea.vmem %s5, %s213
      %p215 = scmp.lt.s32.totalorder %s16, 1
      %s216 = scalar_select %p215, %s16, 1
      %s217 = smul.addr %s216, 2
      %s218 = smul.addr %s217, 4
      %s219 = scalar_lea.vmem %s0, %s218
      %p220 = scmp.lt.s32.totalorder %s16, 1
      %s221 = scalar_select %p220, %s16, 1
      %s222 = smul.addr %s221, 2
      %s223 = smul.addr %s222, 8
      %s224 = scalar_lea.vmem %s5, %s223
      %v225 = vlaneseq
      %v226 = vand.u32 %v225, 127
      %v227 = vadd.s32 %v226, 128
      %v228 = vand.u32 %v226, 255
      %v229 = vand.u32 %v227, 255
      %v230 = vand.u32 %v226, 15
      %v231 = vand.u32 %v227, 15
      %v232 = vld [vmem:[%s219] sm:$0xff]
      %v233 = vld [vmem:[%s1] sm:$0xff]
      %v234 = vld [vmem:[%s1 + $0x8] sm:$0xff]
      %v235 = vld [vmem:[%s1 + $0x10] sm:$0xff]
      %v236 = vld [vmem:[%s1 + $0x18] sm:$0xff]
      %v237 = vld [vmem:[%s1 + $0x20] sm:$0xff]
      %v238 = vld [vmem:[%s2] sm:$0xff]
      %v239 = vld [vmem:[%s2 + $0x8] sm:$0xff]
      %v240 = vld [vmem:[%s2 + $0x10] sm:$0xff]
      %v241 = vld [vmem:[%s2 + $0x18] sm:$0xff]
      %v242 = vld [vmem:[%s2 + $0x20] sm:$0xff]
      %244 = vset.pattern.permute.xlu0 0
      %245 = vperm.xlu0 %244, %v238
      %v246 = vpop.permute.xlu0 %245
      %249 = vset.pattern.permute.xlu0 0
      %250 = vperm.xlu0 %249, %v239
      %v251 = vpop.permute.xlu0 %250
      %254 = vset.pattern.permute.xlu0 0
      %255 = vperm.xlu0 %254, %v240
      %v256 = vpop.permute.xlu0 %255
      %259 = vset.pattern.permute.xlu0 0
      %260 = vperm.xlu0 %259, %v241
      %v261 = vpop.permute.xlu0 %260
      %264 = vset.pattern.permute.xlu0 0
      %265 = vperm.xlu0 %264, %v242
      %v266 = vpop.permute.xlu0 %265
      %v269 = vcombine.high %v232, %v232
      %vm270 = vcmask 31744
      %v272 = vsel %vm270, %v233, 0
      %v275 = vsel %vm270, %v234, 0
      %v278 = vsel %vm270, %v235, 0
      %v281 = vsel %vm270, %v236, 0
      %v284 = vsel %vm270, %v237, 0
      %vm286 = vcmask 1043456
      %v287 = vsel %vm286, %v232, 0
      %v289 = vsel %vm286, %v269, 0
      %291 = vmatprep.subr.mxu0 %v289
      %292 = vmatpush1.msra.mxu0 %v287
      %293 = vmatprep.subr.mxu0 0.0
      %294 = vmatpush1.msra.mxu0 0.0
      %295 = vmatprep.subr.mxu0 0.0
      %296 = vmatpush1.msra.mxu0 0.0
      %297 = vmatprep.subr.mxu0 0.0
      %298 = vmatpush1.msra.mxu0 0.0
      %299 = vmatprep.subr.mxu0 0.0
      %300 = vmatpush1.msra.mxu0 0.0
      %301 = vmatprep.subr.mxu0 0.0
      %302 = vmatpush1.msra.mxu0 0.0
      %303 = vmatprep.subr.mxu0 0.0
      %304 = vmatpush1.msra.mxu0 0.0
      %305 = vmatprep.subr.mxu0 0.0
      %306 = vmatpush1.msra.mxu0 0.0
      %307 = vmatprep.subr.mxu0 0.0
      %308 = vmatpush1.msra.mxu0 0.0
      %309 = vmatprep.subr.mxu0 0.0
      %310 = vmatpush1.msra.mxu0 0.0
      %311 = vmatprep.subr.mxu0 0.0
      %312 = vmatpush1.msra.mxu0 0.0
      %313 = vmatprep.subr.mxu0 0.0
      %314 = vmatpush1.msra.mxu0 0.0
      %315 = vmatprep.subr.mxu0 0.0
      %316 = vmatpush1.msra.mxu0 0.0
      %317 = vmatprep.subr.mxu0 0.0
      %318 = vmatpush1.msra.mxu0 0.0
      %319 = vmatprep.subr.mxu0 0.0
      %320 = vmatpush1.msra.mxu0 0.0
      %321 = vmatprep.subr.mxu0 0.0
      %322 = vmatpush1.msra.mxu0 0.0
      %323 = vmatprep.subr.mxu0 0.0
      %324 = vmatpush1.msra.mxu0 0.0
      %325 = vmatprep.subr.mxu0 0.0
      %326 = vmatpush1.msra.mxu0 0.0
      %327 = vmatprep.subr.mxu0 0.0
      %328 = vmatpush1.msra.mxu0 0.0
      %329 = vmatprep.subr.mxu0 0.0
      %330 = vmatpush1.msra.mxu0 0.0
      %331 = vmatprep.subr.mxu0 0.0
      %332 = vmatpush1.msra.mxu0 0.0
      %333 = vmatprep.subr.mxu0 0.0
      %334 = vmatpush1.msra.mxu0 0.0
      %335 = vmatprep.subr.mxu0 0.0
      %336 = vmatpush1.msra.mxu0 0.0
      %337 = vmatprep.subr.mxu0 0.0
      %338 = vmatpush1.msra.mxu0 0.0
      %339 = vmatprep.subr.mxu0 0.0
      %340 = vmatpush1.msra.mxu0 0.0
      %341 = vmatprep.subr.mxu0 0.0
      %342 = vmatpush1.msra.mxu0 0.0
      %343 = vmatprep.subr.mxu0 0.0
      %344 = vmatpush1.msra.mxu0 0.0
      %345 = vmatprep.subr.mxu0 0.0
      %346 = vmatpush1.msra.mxu0 0.0
      %347 = vmatprep.subr.mxu0 0.0
      %348 = vmatpush1.msra.mxu0 0.0
      %349 = vmatprep.subr.mxu0 0.0
      %350 = vmatpush1.msra.mxu0 0.0
      %351 = vmatprep.subr.mxu0 0.0
      %352 = vmatpush1.msra.mxu0 0.0
      %353 = vmatprep.subr.mxu0 0.0
      %354 = vmatpush1.msra.mxu0 0.0
      %355 = vmatprep.mubr.f32.mxu0 0.0
      %356 = vmatmul.mubr.f32.gmra.mrb[0].mxu0 %v272
      %v357 = vpop.f32.mrb[0].mxu0
      %v358 = vadd.f32 %v246, %v357
      %v359 = vpop.f32.mrb[0].mxu0
      %v360 = vadd.f32 %v246, %v359
      %361 = vmatprep.mubr.f32.mxu0 0.0
      %362 = vmatmul.mubr.f32.gmra.mrb[0].mxu0 %v275
      %v363 = vpop.f32.mrb[0].mxu0
      %v364 = vadd.f32 %v251, %v363
      %v365 = vpop.f32.mrb[0].mxu0
      %v366 = vadd.f32 %v251, %v365
      %367 = vmatprep.mubr.f32.mxu0 0.0
      %368 = vmatmul.mubr.f32.gmra.mrb[0].mxu0 %v278
      %v369 = vpop.f32.mrb[0].mxu0
      %v370 = vadd.f32 %v256, %v369
      %v371 = vpop.f32.mrb[0].mxu0
      %v372 = vadd.f32 %v256, %v371
      %373 = vmatprep.mubr.f32.mxu0 0.0
      %374 = vmatmul.mubr.f32.gmra.mrb[0].mxu0 %v281
      %v375 = vpop.f32.mrb[0].mxu0
      %v376 = vadd.f32 %v261, %v375
      %v377 = vpop.f32.mrb[0].mxu0
      %v378 = vadd.f32 %v261, %v377
      %379 = vmatprep.mubr.f32.mxu0 0.0
      %380 = vmatmul.mubr.f32.gmra.mrb[0].mxu0 %v284
      %v381 = vpop.f32.mrb[0].mxu0
      %v382 = vadd.f32 %v266, %v381
      %v383 = vpop.f32.mrb[0].mxu0
      %v384 = vadd.f32 %v266, %v383
      %385 = vdwg.mxu0
      %386 = vrot.lane.b32.xlu0 %v364, 1
      %v387 = vpop.permute.xlu0 %386
      %388 = vrot.lane.b32.xlu0 %v366, 1
      %v389 = vpop.permute.xlu0 %388
      %vm390 = vcmp.lt.s32.totalorder %v226, 1
      %v391 = vsel %vm390, %v387, %v389
      %v392 = vsel %vm390, %v389, %v387
      %vm393 = vcmp.ge.s32.totalorder %v228, 1
      %vm394 = vcmp.ge.s32.totalorder %v229, 1
      %vm395 = vcmp.ge.s32.totalorder %v230, 1
      %vm396 = vcmp.ge.s32.totalorder %v231, 1
      %vm397 = vmand %vm393, %vm395
      %vm398 = vmand %vm394, %vm396
      %v399 = vsel %vm397, 1.0, 0.0
      %v400 = vsel %vm398, 1.0, 0.0
      %v401 = vmul.f32 %v392, %v399
      %v402 = vmul.f32 %v391, %v400
      %403 = vrot.lane.b32.xlu0 %v364, 127
      %v404 = vpop.permute.xlu0 %403
      %405 = vrot.lane.b32.xlu0 %v366, 127
      %v406 = vpop.permute.xlu0 %405
      %vm407 = vcmp.lt.s32.totalorder %v226, 127
      %v408 = vsel %vm407, %v404, %v406
      %v409 = vsel %vm407, %v406, %v404
      %vm410 = vcmp.lt.s32.totalorder %v228, 255
      %vm411 = vcmp.lt.s32.totalorder %v229, 255
      %vm412 = vcmp.lt.s32.totalorder %v230, 15
      %vm413 = vcmp.lt.s32.totalorder %v231, 15
      %vm414 = vmand %vm410, %vm412
      %vm415 = vmand %vm411, %vm413
      %v416 = vsel %vm414, 1.0, 0.0
      %v417 = vsel %vm415, 1.0, 0.0
      %v418 = vmul.f32 %v408, %v416
      %v419 = vmul.f32 %v409, %v417
      %v420 = vld [vmem:[%s3] sm:$0xff]
      %v421 = vld [vmem:[%s4] sm:$0xff]
      %423 = vset.pattern.permute.xlu0 0
      %424 = vperm.xlu0 %423, %v421
      %v425 = vpop.permute.xlu0 %424
      %vm427 = vcmask 195584
      %v429 = vsel %vm427, %v420, 0
      %431 = vmatprep.subr.mxu0 %v402
      %432 = vmatpush1.msra.mxu0 %v401
      %433 = vmatprep.subr.mxu0 %v366
      %434 = vmatpush1.msra.mxu0 %v364
      %435 = vmatprep.subr.mxu0 %v419
      %436 = vmatpush1.msra.mxu0 %v418
      %437 = vmatprep.subr.mxu0 0.0
      %438 = vmatpush1.msra.mxu0 0.0
      %439 = vmatprep.subr.mxu0 0.0
      %440 = vmatpush1.msra.mxu0 0.0
      %441 = vmatprep.subr.mxu0 0.0
      %442 = vmatpush1.msra.mxu0 0.0
      %443 = vmatprep.subr.mxu0 0.0
      %444 = vmatpush1.msra.mxu0 0.0
      %445 = vmatprep.subr.mxu0 0.0
      %446 = vmatpush1.msra.mxu0 0.0
      %447 = vmatprep.subr.mxu0 0.0
      %448 = vmatpush1.msra.mxu0 0.0
      %449 = vmatprep.subr.mxu0 0.0
      %450 = vmatpush1.msra.mxu0 0.0
      %451 = vmatprep.subr.mxu0 0.0
      %452 = vmatpush1.msra.mxu0 0.0
      %453 = vmatprep.subr.mxu0 0.0
      %454 = vmatpush1.msra.mxu0 0.0
      %455 = vmatprep.subr.mxu0 0.0
      %456 = vmatpush1.msra.mxu0 0.0
      %457 = vmatprep.subr.mxu0 0.0
      %458 = vmatpush1.msra.mxu0 0.0
      %459 = vmatprep.subr.mxu0 0.0
      %460 = vmatpush1.msra.mxu0 0.0
      %461 = vmatprep.subr.mxu0 0.0
      %462 = vmatpush1.msra.mxu0 0.0
      %463 = vmatprep.subr.mxu0 0.0
      %464 = vmatpush1.msra.mxu0 0.0
      %465 = vmatprep.subr.mxu0 0.0
      %466 = vmatpush1.msra.mxu0 0.0
      %467 = vmatprep.subr.mxu0 0.0
      %468 = vmatpush1.msra.mxu0 0.0
      %469 = vmatprep.subr.mxu0 0.0
      %470 = vmatpush1.msra.mxu0 0.0
      %471 = vmatprep.subr.mxu0 0.0
      %472 = vmatpush1.msra.mxu0 0.0
      %473 = vmatprep.subr.mxu0 0.0
      %474 = vmatpush1.msra.mxu0 0.0
      %475 = vmatprep.subr.mxu0 0.0
      %476 = vmatpush1.msra.mxu0 0.0
      %477 = vmatprep.subr.mxu0 0.0
      %478 = vmatpush1.msra.mxu0 0.0
      %479 = vmatprep.subr.mxu0 0.0
      %480 = vmatpush1.msra.mxu0 0.0
      %481 = vmatprep.subr.mxu0 0.0
      %482 = vmatpush1.msra.mxu0 0.0
      %483 = vmatprep.subr.mxu0 0.0
      %484 = vmatpush1.msra.mxu0 0.0
      %485 = vmatprep.subr.mxu0 0.0
      %486 = vmatpush1.msra.mxu0 0.0
      %487 = vmatprep.subr.mxu0 0.0
      %488 = vmatpush1.msra.mxu0 0.0
      %489 = vmatprep.subr.mxu0 0.0
      %490 = vmatpush1.msra.mxu0 0.0
      %491 = vmatprep.subr.mxu0 0.0
      %492 = vmatpush1.msra.mxu0 0.0
      %493 = vmatprep.subr.mxu0 0.0
      %494 = vmatpush1.msra.mxu0 0.0
      %495 = vmatprep.mubr.f32.mxu0 0.0
      %496 = vmatmul.mubr.f32.gmra.mrb[0].mxu0 %v429
      %v497 = vpop.f32.mrb[0].mxu0
      %v498 = vadd.f32 %v425, %v497
      %v499 = vpop.f32.mrb[0].mxu0
      %v500 = vadd.f32 %v425, %v499
      %501 = vdwg.mxu0
      %502 = vrot.lane.b32.xlu0 %v498, 16
      %v503 = vpop.permute.xlu0 %502
      %504 = vrot.lane.b32.xlu0 %v500, 16
      %v505 = vpop.permute.xlu0 %504
      %vm506 = vcmp.lt.s32.totalorder %v226, 16
      %v507 = vsel %vm506, %v503, %v505
      %v508 = vsel %vm506, %v505, %v503
      %vm509 = vcmp.ge.s32.totalorder %v228, 16
      %vm510 = vcmp.ge.s32.totalorder %v229, 16
      %v511 = vsel %vm509, 1.0, 0.0
      %v512 = vsel %vm510, 1.0, 0.0
      %v513 = vmul.f32 %v508, %v511
      %v514 = vmul.f32 %v507, %v512
      %515 = vrot.lane.b32.xlu0 %v498, 112
      %v516 = vpop.permute.xlu0 %515
      %517 = vrot.lane.b32.xlu0 %v500, 112
      %v518 = vpop.permute.xlu0 %517
      %vm519 = vcmp.lt.s32.totalorder %v226, 112
      %v520 = vsel %vm519, %v516, %v518
      %v521 = vsel %vm519, %v518, %v516
      %vm522 = vcmp.lt.s32.totalorder %v228, 240
      %vm523 = vcmp.lt.s32.totalorder %v229, 240
      %v524 = vsel %vm522, 1.0, 0.0
      %v525 = vsel %vm523, 1.0, 0.0
      %v526 = vmul.f32 %v520, %v524
      %v527 = vmul.f32 %v521, %v525
      %v528 = vld [vmem:[%s3 + $0x8] sm:$0xff]
      %529 = vset.pattern.permute.xlu0 1
      %530 = vperm.xlu0 %529, %v421
      %v531 = vpop.permute.xlu0 %530
      %v534 = vsel %vm427, %v528, 0
      %536 = vmatprep.subr.mxu0 %v514
      %537 = vmatpush1.msra.mxu0 %v513
      %538 = vmatprep.subr.mxu0 %v500
      %539 = vmatpush1.msra.mxu0 %v498
      %540 = vmatprep.subr.mxu0 %v527
      %541 = vmatpush1.msra.mxu0 %v526
      %542 = vmatprep.subr.mxu0 0.0
      %543 = vmatpush1.msra.mxu0 0.0
      %544 = vmatprep.subr.mxu0 0.0
      %545 = vmatpush1.msra.mxu0 0.0
      %546 = vmatprep.subr.mxu0 0.0
      %547 = vmatpush1.msra.mxu0 0.0
      %548 = vmatprep.subr.mxu0 0.0
      %549 = vmatpush1.msra.mxu0 0.0
      %550 = vmatprep.subr.mxu0 0.0
      %551 = vmatpush1.msra.mxu0 0.0
      %552 = vmatprep.subr.mxu0 0.0
      %553 = vmatpush1.msra.mxu0 0.0
      %554 = vmatprep.subr.mxu0 0.0
      %555 = vmatpush1.msra.mxu0 0.0
      %556 = vmatprep.subr.mxu0 0.0
      %557 = vmatpush1.msra.mxu0 0.0
      %558 = vmatprep.subr.mxu0 0.0
      %559 = vmatpush1.msra.mxu0 0.0
      %560 = vmatprep.subr.mxu0 0.0
      %561 = vmatpush1.msra.mxu0 0.0
      %562 = vmatprep.subr.mxu0 0.0
      %563 = vmatpush1.msra.mxu0 0.0
      %564 = vmatprep.subr.mxu0 0.0
      %565 = vmatpush1.msra.mxu0 0.0
      %566 = vmatprep.subr.mxu0 0.0
      %567 = vmatpush1.msra.mxu0 0.0
      %568 = vmatprep.subr.mxu0 0.0
      %569 = vmatpush1.msra.mxu0 0.0
      %570 = vmatprep.subr.mxu0 0.0
      %571 = vmatpush1.msra.mxu0 0.0
      %572 = vmatprep.subr.mxu0 0.0
      %573 = vmatpush1.msra.mxu0 0.0
      %574 = vmatprep.subr.mxu0 0.0
      %575 = vmatpush1.msra.mxu0 0.0
      %576 = vmatprep.subr.mxu0 0.0
      %577 = vmatpush1.msra.mxu0 0.0
      %578 = vmatprep.subr.mxu0 0.0
      %579 = vmatpush1.msra.mxu0 0.0
      %580 = vmatprep.subr.mxu0 0.0
      %581 = vmatpush1.msra.mxu0 0.0
      %582 = vmatprep.subr.mxu0 0.0
      %583 = vmatpush1.msra.mxu0 0.0
      %584 = vmatprep.subr.mxu0 0.0
      %585 = vmatpush1.msra.mxu0 0.0
      %586 = vmatprep.subr.mxu0 0.0
      %587 = vmatpush1.msra.mxu0 0.0
      %588 = vmatprep.subr.mxu0 0.0
      %589 = vmatpush1.msra.mxu0 0.0
      %590 = vmatprep.subr.mxu0 0.0
      %591 = vmatpush1.msra.mxu0 0.0
      %592 = vmatprep.subr.mxu0 0.0
      %593 = vmatpush1.msra.mxu0 0.0
      %594 = vmatprep.subr.mxu0 0.0
      %595 = vmatpush1.msra.mxu0 0.0
      %596 = vmatprep.subr.mxu0 0.0
      %597 = vmatpush1.msra.mxu0 0.0
      %598 = vmatprep.subr.mxu0 0.0
      %599 = vmatpush1.msra.mxu0 0.0
      %600 = vmatprep.mubr.f32.mxu0 0.0
      %601 = vmatmul.mubr.f32.gmra.mrb[0].mxu0 %v534
      %v602 = vpop.f32.mrb[0].mxu0
      %v603 = vadd.f32 %v531, %v602
      %v604 = vpop.f32.mrb[0].mxu0
      %v605 = vadd.f32 %v531, %v604
      %606 = vdwg.mxu0
      %607 = vrot.lane.b32.xlu0 %v603, 51
      %v608 = vpop.permute.xlu0 %607
      %609 = vrot.lane.b32.xlu0 %v605, 51
      %v610 = vpop.permute.xlu0 %609
      %vm611 = vcmp.lt.s32.totalorder %v226, 51
      %v612 = vsel %vm611, %v608, %v610
      %v613 = vsel %vm611, %v610, %v608
      %vm614 = vcmp.ge.s32.totalorder %v228, 51
      %vm615 = vcmp.ge.s32.totalorder %v229, 51
      %vm616 = vcmp.ge.s32.totalorder %v230, 3
      %vm617 = vcmp.ge.s32.totalorder %v231, 3
      %vm618 = vmand %vm614, %vm616
      %vm619 = vmand %vm615, %vm617
      %v620 = vsel %vm618, 1.0, 0.0
      %v621 = vsel %vm619, 1.0, 0.0
      %v622 = vmul.f32 %v613, %v620
      %v623 = vmul.f32 %v612, %v621
      %624 = vrot.lane.b32.xlu0 %v603, 48
      %v625 = vpop.permute.xlu0 %624
      %626 = vrot.lane.b32.xlu0 %v605, 48
      %v627 = vpop.permute.xlu0 %626
      %vm628 = vcmp.lt.s32.totalorder %v226, 48
      %v629 = vsel %vm628, %v625, %v627
      %v630 = vsel %vm628, %v627, %v625
      %vm631 = vcmp.ge.s32.totalorder %v228, 48
      %vm632 = vcmp.ge.s32.totalorder %v229, 48
      %v633 = vsel %vm631, 1.0, 0.0
      %v634 = vsel %vm632, 1.0, 0.0
      %v635 = vmul.f32 %v630, %v633
      %v636 = vmul.f32 %v629, %v634
      %637 = vrot.lane.b32.xlu0 %v603, 45
      %v638 = vpop.permute.xlu0 %637
      %639 = vrot.lane.b32.xlu0 %v605, 45
      %v640 = vpop.permute.xlu0 %639
      %vm641 = vcmp.lt.s32.totalorder %v226, 45
      %v642 = vsel %vm641, %v638, %v640
      %v643 = vsel %vm641, %v640, %v638
      %vm644 = vcmp.ge.s32.totalorder %v228, 45
      %vm645 = vcmp.ge.s32.totalorder %v229, 45
      %vm646 = vcmp.lt.s32.totalorder %v230, 13
      %vm647 = vcmp.lt.s32.totalorder %v231, 13
      %vm648 = vmand %vm644, %vm646
      %vm649 = vmand %vm645, %vm647
      %v650 = vsel %vm648, 1.0, 0.0
      %v651 = vsel %vm649, 1.0, 0.0
      %v652 = vmul.f32 %v643, %v650
      %v653 = vmul.f32 %v642, %v651
      %654 = vrot.lane.b32.xlu0 %v603, 3
      %v655 = vpop.permute.xlu0 %654
      %656 = vrot.lane.b32.xlu0 %v605, 3
      %v657 = vpop.permute.xlu0 %656
      %vm658 = vcmp.lt.s32.totalorder %v226, 3
      %v659 = vsel %vm658, %v655, %v657
      %v660 = vsel %vm658, %v657, %v655
      %vm661 = vcmp.ge.s32.totalorder %v228, 3
      %vm662 = vcmp.ge.s32.totalorder %v229, 3
      %vm663 = vmand %vm661, %vm616
      %vm664 = vmand %vm662, %vm617
      %v665 = vsel %vm663, 1.0, 0.0
      %v666 = vsel %vm664, 1.0, 0.0
      %v667 = vmul.f32 %v660, %v665
      %v668 = vmul.f32 %v659, %v666
      %669 = vrot.lane.b32.xlu0 %v603, 125
      %v670 = vpop.permute.xlu0 %669
      %671 = vrot.lane.b32.xlu0 %v605, 125
      %v672 = vpop.permute.xlu0 %671
      %vm673 = vcmp.lt.s32.totalorder %v226, 125
      %v674 = vsel %vm673, %v670, %v672
      %v675 = vsel %vm673, %v672, %v670
      %vm676 = vcmp.lt.s32.totalorder %v228, 253
      %vm677 = vcmp.lt.s32.totalorder %v229, 253
      %vm678 = vmand %vm676, %vm646
      %vm679 = vmand %vm677, %vm647
      %v680 = vsel %vm678, 1.0, 0.0
      %v681 = vsel %vm679, 1.0, 0.0
      %v682 = vmul.f32 %v674, %v680
      %v683 = vmul.f32 %v675, %v681
      %684 = vrot.lane.b32.xlu0 %v603, 83
      %v685 = vpop.permute.xlu0 %684
      %686 = vrot.lane.b32.xlu0 %v605, 83
      %v687 = vpop.permute.xlu0 %686
      %vm688 = vcmp.lt.s32.totalorder %v226, 83
      %v689 = vsel %vm688, %v685, %v687
      %v690 = vsel %vm688, %v687, %v685
      %vm691 = vcmp.lt.s32.totalorder %v228, 211
      %vm692 = vcmp.lt.s32.totalorder %v229, 211
      %vm693 = vmand %vm691, %vm616
      %vm694 = vmand %vm692, %vm617
      %v695 = vsel %vm693, 1.0, 0.0
      %v696 = vsel %vm694, 1.0, 0.0
      %v697 = vmul.f32 %v689, %v695
      %v698 = vmul.f32 %v690, %v696
      %699 = vrot.lane.b32.xlu0 %v603, 80
      %v700 = vpop.permute.xlu0 %699
      %701 = vrot.lane.b32.xlu0 %v605, 80
      %v702 = vpop.permute.xlu0 %701
      %vm703 = vcmp.lt.s32.totalorder %v226, 80
      %v704 = vsel %vm703, %v700, %v702
      %v705 = vsel %vm703, %v702, %v700
      %vm706 = vcmp.lt.s32.totalorder %v228, 208
      %vm707 = vcmp.lt.s32.totalorder %v229, 208
      %v708 = vsel %vm706, 1.0, 0.0
      %v709 = vsel %vm707, 1.0, 0.0
      %v710 = vmul.f32 %v704, %v708
      %v711 = vmul.f32 %v705, %v709
      %712 = vrot.lane.b32.xlu0 %v603, 77
      %v713 = vpop.permute.xlu0 %712
      %714 = vrot.lane.b32.xlu0 %v605, 77
      %v715 = vpop.permute.xlu0 %714
      %vm716 = vcmp.lt.s32.totalorder %v226, 77
      %v717 = vsel %vm716, %v713, %v715
      %v718 = vsel %vm716, %v715, %v713
      %vm719 = vcmp.lt.s32.totalorder %v228, 205
      %vm720 = vcmp.lt.s32.totalorder %v229, 205
      %vm721 = vmand %vm719, %vm646
      %vm722 = vmand %vm720, %vm647
      %v723 = vsel %vm721, 1.0, 0.0
      %v724 = vsel %vm722, 1.0, 0.0
      %v725 = vmul.f32 %v717, %v723
      %v726 = vmul.f32 %v718, %v724
      %v727 = vld [vmem:[%s3 + $0x10] sm:$0xff]
      %728 = vset.pattern.permute.xlu0 2
      %729 = vperm.xlu0 %728, %v421
      %v730 = vpop.permute.xlu0 %729
      %vm732 = vcmask 588800
      %v734 = vsel %vm732, %v727, 0
      %736 = vmatprep.subr.mxu0 %v623
      %737 = vmatpush1.msra.mxu0 %v622
      %738 = vmatprep.subr.mxu0 %v636
      %739 = vmatpush1.msra.mxu0 %v635
      %740 = vmatprep.subr.mxu0 %v653
      %741 = vmatpush1.msra.mxu0 %v652
      %742 = vmatprep.subr.mxu0 %v668
      %743 = vmatpush1.msra.mxu0 %v667
      %744 = vmatprep.subr.mxu0 %v605
      %745 = vmatpush1.msra.mxu0 %v603
      %746 = vmatprep.subr.mxu0 %v683
      %747 = vmatpush1.msra.mxu0 %v682
      %748 = vmatprep.subr.mxu0 %v698
      %749 = vmatpush1.msra.mxu0 %v697
      %750 = vmatprep.subr.mxu0 %v711
      %751 = vmatpush1.msra.mxu0 %v710
      %752 = vmatprep.subr.mxu0 %v726
      %753 = vmatpush1.msra.mxu0 %v725
      %754 = vmatprep.subr.mxu0 0.0
      %755 = vmatpush1.msra.mxu0 0.0
      %756 = vmatprep.subr.mxu0 0.0
      %757 = vmatpush1.msra.mxu0 0.0
      %758 = vmatprep.subr.mxu0 0.0
      %759 = vmatpush1.msra.mxu0 0.0
      %760 = vmatprep.subr.mxu0 0.0
      %761 = vmatpush1.msra.mxu0 0.0
      %762 = vmatprep.subr.mxu0 0.0
      %763 = vmatpush1.msra.mxu0 0.0
      %764 = vmatprep.subr.mxu0 0.0
      %765 = vmatpush1.msra.mxu0 0.0
      %766 = vmatprep.subr.mxu0 0.0
      %767 = vmatpush1.msra.mxu0 0.0
      %768 = vmatprep.subr.mxu0 0.0
      %769 = vmatpush1.msra.mxu0 0.0
      %770 = vmatprep.subr.mxu0 0.0
      %771 = vmatpush1.msra.mxu0 0.0
      %772 = vmatprep.subr.mxu0 0.0
      %773 = vmatpush1.msra.mxu0 0.0
      %774 = vmatprep.subr.mxu0 0.0
      %775 = vmatpush1.msra.mxu0 0.0
      %776 = vmatprep.subr.mxu0 0.0
      %777 = vmatpush1.msra.mxu0 0.0
      %778 = vmatprep.subr.mxu0 0.0
      %779 = vmatpush1.msra.mxu0 0.0
      %780 = vmatprep.subr.mxu0 0.0
      %781 = vmatpush1.msra.mxu0 0.0
      %782 = vmatprep.subr.mxu0 0.0
      %783 = vmatpush1.msra.mxu0 0.0
      %784 = vmatprep.subr.mxu0 0.0
      %785 = vmatpush1.msra.mxu0 0.0
      %786 = vmatprep.subr.mxu0 0.0
      %787 = vmatpush1.msra.mxu0 0.0
      %788 = vmatprep.subr.mxu0 0.0
      %789 = vmatpush1.msra.mxu0 0.0
      %790 = vmatprep.subr.mxu0 0.0
      %791 = vmatpush1.msra.mxu0 0.0
      %792 = vmatprep.subr.mxu0 0.0
      %793 = vmatpush1.msra.mxu0 0.0
      %794 = vmatprep.subr.mxu0 0.0
      %795 = vmatpush1.msra.mxu0 0.0
      %796 = vmatprep.subr.mxu0 0.0
      %797 = vmatpush1.msra.mxu0 0.0
      %798 = vmatprep.subr.mxu0 0.0
      %799 = vmatpush1.msra.mxu0 0.0
      %800 = vmatprep.mubr.f32.mxu0 0.0
      %801 = vmatmul.mubr.f32.gmra.mrb[0].mxu0 %v734
      %v802 = vpop.f32.mrb[0].mxu0
      %v803 = vadd.f32 %v730, %v802
      %v804 = vpop.f32.mrb[0].mxu0
      %v805 = vadd.f32 %v730, %v804
      %806 = vdwg.mxu0
      %807 = vrot.lane.b32.xlu0 %v370, 2
      %v808 = vpop.permute.xlu0 %807
      %809 = vrot.lane.b32.xlu0 %v372, 2
      %v810 = vpop.permute.xlu0 %809
      %vm811 = vcmp.lt.s32.totalorder %v226, 2
      %v812 = vsel %vm811, %v808, %v810
      %v813 = vsel %vm811, %v810, %v808
      %vm814 = vcmp.ge.s32.totalorder %v228, 2
      %vm815 = vcmp.ge.s32.totalorder %v229, 2
      %vm816 = vcmp.ge.s32.totalorder %v230, 2
      %vm817 = vcmp.ge.s32.totalorder %v231, 2
      %vm818 = vmand %vm814, %vm816
      %vm819 = vmand %vm815, %vm817
      %v820 = vsel %vm818, 1.0, 0.0
      %v821 = vsel %vm819, 1.0, 0.0
      %v822 = vmul.f32 %v813, %v820
      %v823 = vmul.f32 %v812, %v821
      %824 = vrot.lane.b32.xlu0 %v370, 1
      %v825 = vpop.permute.xlu0 %824
      %826 = vrot.lane.b32.xlu0 %v372, 1
      %v827 = vpop.permute.xlu0 %826
      %v828 = vsel %vm390, %v825, %v827
      %v829 = vsel %vm390, %v827, %v825
      %v830 = vmul.f32 %v829, %v399
      %v831 = vmul.f32 %v828, %v400
      %832 = vrot.lane.b32.xlu0 %v370, 127
      %v833 = vpop.permute.xlu0 %832
      %834 = vrot.lane.b32.xlu0 %v372, 127
      %v835 = vpop.permute.xlu0 %834
      %v836 = vsel %vm407, %v833, %v835
      %v837 = vsel %vm407, %v835, %v833
      %v838 = vmul.f32 %v836, %v416
      %v839 = vmul.f32 %v837, %v417
      %840 = vrot.lane.b32.xlu0 %v370, 126
      %v841 = vpop.permute.xlu0 %840
      %842 = vrot.lane.b32.xlu0 %v372, 126
      %v843 = vpop.permute.xlu0 %842
      %vm844 = vcmp.lt.s32.totalorder %v226, 126
      %v845 = vsel %vm844, %v841, %v843
      %v846 = vsel %vm844, %v843, %v841
      %vm847 = vcmp.lt.s32.totalorder %v228, 254
      %vm848 = vcmp.lt.s32.totalorder %v229, 254
      %vm849 = vcmp.lt.s32.totalorder %v230, 14
      %vm850 = vcmp.lt.s32.totalorder %v231, 14
      %vm851 = vmand %vm847, %vm849
      %vm852 = vmand %vm848, %vm850
      %v853 = vsel %vm851, 1.0, 0.0
      %v854 = vsel %vm852, 1.0, 0.0
      %v855 = vmul.f32 %v845, %v853
      %v856 = vmul.f32 %v846, %v854
      %v857 = vld [vmem:[%s3 + $0x18] sm:$0xff]
      %858 = vset.pattern.permute.xlu0 3
      %859 = vperm.xlu0 %858, %v421
      %v860 = vpop.permute.xlu0 %859
      %vm862 = vcmask 326656
      %v864 = vsel %vm862, %v857, 0
      %866 = vmatprep.subr.mxu0 %v823
      %867 = vmatpush1.msra.mxu0 %v822
      %868 = vmatprep.subr.mxu0 %v831
      %869 = vmatpush1.msra.mxu0 %v830
      %870 = vmatprep.subr.mxu0 %v372
      %871 = vmatpush1.msra.mxu0 %v370
      %872 = vmatprep.subr.mxu0 %v839
      %873 = vmatpush1.msra.mxu0 %v838
      %874 = vmatprep.subr.mxu0 %v856
      %875 = vmatpush1.msra.mxu0 %v855
      %876 = vmatprep.subr.mxu0 0.0
      %877 = vmatpush1.msra.mxu0 0.0
      %878 = vmatprep.subr.mxu0 0.0
      %879 = vmatpush1.msra.mxu0 0.0
      %880 = vmatprep.subr.mxu0 0.0
      %881 = vmatpush1.msra.mxu0 0.0
      %882 = vmatprep.subr.mxu0 0.0
      %883 = vmatpush1.msra.mxu0 0.0
      %884 = vmatprep.subr.mxu0 0.0
      %885 = vmatpush1.msra.mxu0 0.0
      %886 = vmatprep.subr.mxu0 0.0
      %887 = vmatpush1.msra.mxu0 0.0
      %888 = vmatprep.subr.mxu0 0.0
      %889 = vmatpush1.msra.mxu0 0.0
      %890 = vmatprep.subr.mxu0 0.0
      %891 = vmatpush1.msra.mxu0 0.0
      %892 = vmatprep.subr.mxu0 0.0
      %893 = vmatpush1.msra.mxu0 0.0
      %894 = vmatprep.subr.mxu0 0.0
      %895 = vmatpush1.msra.mxu0 0.0
      %896 = vmatprep.subr.mxu0 0.0
      %897 = vmatpush1.msra.mxu0 0.0
      %898 = vmatprep.subr.mxu0 0.0
      %899 = vmatpush1.msra.mxu0 0.0
      %900 = vmatprep.subr.mxu0 0.0
      %901 = vmatpush1.msra.mxu0 0.0
      %902 = vmatprep.subr.mxu0 0.0
      %903 = vmatpush1.msra.mxu0 0.0
      %904 = vmatprep.subr.mxu0 0.0
      %905 = vmatpush1.msra.mxu0 0.0
      %906 = vmatprep.subr.mxu0 0.0
      %907 = vmatpush1.msra.mxu0 0.0
      %908 = vmatprep.subr.mxu0 0.0
      %909 = vmatpush1.msra.mxu0 0.0
      %910 = vmatprep.subr.mxu0 0.0
      %911 = vmatpush1.msra.mxu0 0.0
      %912 = vmatprep.subr.mxu0 0.0
      %913 = vmatpush1.msra.mxu0 0.0
      %914 = vmatprep.subr.mxu0 0.0
      %915 = vmatpush1.msra.mxu0 0.0
      %916 = vmatprep.subr.mxu0 0.0
      %917 = vmatpush1.msra.mxu0 0.0
      %918 = vmatprep.subr.mxu0 0.0
      %919 = vmatpush1.msra.mxu0 0.0
      %920 = vmatprep.subr.mxu0 0.0
      %921 = vmatpush1.msra.mxu0 0.0
      %922 = vmatprep.subr.mxu0 0.0
      %923 = vmatpush1.msra.mxu0 0.0
      %924 = vmatprep.subr.mxu0 0.0
      %925 = vmatpush1.msra.mxu0 0.0
      %926 = vmatprep.subr.mxu0 0.0
      %927 = vmatpush1.msra.mxu0 0.0
      %928 = vmatprep.subr.mxu0 0.0
      %929 = vmatpush1.msra.mxu0 0.0
      %930 = vmatprep.mubr.f32.mxu0 0.0
      %931 = vmatmul.mubr.f32.gmra.mrb[0].mxu0 %v864
      %v932 = vpop.f32.mrb[0].mxu0
      %v933 = vadd.f32 %v860, %v932
      %v934 = vpop.f32.mrb[0].mxu0
      %v935 = vadd.f32 %v860, %v934
      %936 = vdwg.mxu0
      %937 = vrot.lane.b32.xlu0 %v933, 32
      %v938 = vpop.permute.xlu0 %937
      %939 = vrot.lane.b32.xlu0 %v935, 32
      %v940 = vpop.permute.xlu0 %939
      %vm941 = vcmp.lt.s32.totalorder %v226, 32
      %v942 = vsel %vm941, %v938, %v940
      %v943 = vsel %vm941, %v940, %v938
      %vm944 = vcmp.ge.s32.totalorder %v228, 32
      %vm945 = vcmp.ge.s32.totalorder %v229, 32
      %v946 = vsel %vm944, 1.0, 0.0
      %v947 = vsel %vm945, 1.0, 0.0
      %v948 = vmul.f32 %v943, %v946
      %v949 = vmul.f32 %v942, %v947
      %950 = vrot.lane.b32.xlu0 %v933, 16
      %v951 = vpop.permute.xlu0 %950
      %952 = vrot.lane.b32.xlu0 %v935, 16
      %v953 = vpop.permute.xlu0 %952
      %v954 = vsel %vm506, %v951, %v953
      %v955 = vsel %vm506, %v953, %v951
      %v956 = vmul.f32 %v955, %v511
      %v957 = vmul.f32 %v954, %v512
      %958 = vrot.lane.b32.xlu0 %v933, 112
      %v959 = vpop.permute.xlu0 %958
      %960 = vrot.lane.b32.xlu0 %v935, 112
      %v961 = vpop.permute.xlu0 %960
      %v962 = vsel %vm519, %v959, %v961
      %v963 = vsel %vm519, %v961, %v959
      %v964 = vmul.f32 %v962, %v524
      %v965 = vmul.f32 %v963, %v525
      %966 = vrot.lane.b32.xlu0 %v933, 96
      %v967 = vpop.permute.xlu0 %966
      %968 = vrot.lane.b32.xlu0 %v935, 96
      %v969 = vpop.permute.xlu0 %968
      %vm970 = vcmp.lt.s32.totalorder %v226, 96
      %v971 = vsel %vm970, %v967, %v969
      %v972 = vsel %vm970, %v969, %v967
      %vm973 = vcmp.lt.s32.totalorder %v228, 224
      %vm974 = vcmp.lt.s32.totalorder %v229, 224
      %v975 = vsel %vm973, 1.0, 0.0
      %v976 = vsel %vm974, 1.0, 0.0
      %v977 = vmul.f32 %v971, %v975
      %v978 = vmul.f32 %v972, %v976
      %v979 = vld [vmem:[%s3 + $0x20] sm:$0xff]
      %980 = vset.pattern.permute.xlu0 4
      %981 = vperm.xlu0 %980, %v421
      %v982 = vpop.permute.xlu0 %981
      %v985 = vsel %vm862, %v979, 0
      %987 = vmatprep.subr.mxu0 %v949
      %988 = vmatpush1.msra.mxu0 %v948
      %989 = vmatprep.subr.mxu0 %v957
      %990 = vmatpush1.msra.mxu0 %v956
      %991 = vmatprep.subr.mxu0 %v935
      %992 = vmatpush1.msra.mxu0 %v933
      %993 = vmatprep.subr.mxu0 %v965
      %994 = vmatpush1.msra.mxu0 %v964
      %995 = vmatprep.subr.mxu0 %v978
      %996 = vmatpush1.msra.mxu0 %v977
      %997 = vmatprep.subr.mxu0 0.0
      %998 = vmatpush1.msra.mxu0 0.0
      %999 = vmatprep.subr.mxu0 0.0
      %1000 = vmatpush1.msra.mxu0 0.0
      %1001 = vmatprep.subr.mxu0 0.0
      %1002 = vmatpush1.msra.mxu0 0.0
      %1003 = vmatprep.subr.mxu0 0.0
      %1004 = vmatpush1.msra.mxu0 0.0
      %1005 = vmatprep.subr.mxu0 0.0
      %1006 = vmatpush1.msra.mxu0 0.0
      %1007 = vmatprep.subr.mxu0 0.0
      %1008 = vmatpush1.msra.mxu0 0.0
      %1009 = vmatprep.subr.mxu0 0.0
      %1010 = vmatpush1.msra.mxu0 0.0
      %1011 = vmatprep.subr.mxu0 0.0
      %1012 = vmatpush1.msra.mxu0 0.0
      %1013 = vmatprep.subr.mxu0 0.0
      %1014 = vmatpush1.msra.mxu0 0.0
      %1015 = vmatprep.subr.mxu0 0.0
      %1016 = vmatpush1.msra.mxu0 0.0
      %1017 = vmatprep.subr.mxu0 0.0
      %1018 = vmatpush1.msra.mxu0 0.0
      %1019 = vmatprep.subr.mxu0 0.0
      %1020 = vmatpush1.msra.mxu0 0.0
      %1021 = vmatprep.subr.mxu0 0.0
      %1022 = vmatpush1.msra.mxu0 0.0
      %1023 = vmatprep.subr.mxu0 0.0
      %1024 = vmatpush1.msra.mxu0 0.0
      %1025 = vmatprep.subr.mxu0 0.0
      %1026 = vmatpush1.msra.mxu0 0.0
      %1027 = vmatprep.subr.mxu0 0.0
      %1028 = vmatpush1.msra.mxu0 0.0
      %1029 = vmatprep.subr.mxu0 0.0
      %1030 = vmatpush1.msra.mxu0 0.0
      %1031 = vmatprep.subr.mxu0 0.0
      %1032 = vmatpush1.msra.mxu0 0.0
      %1033 = vmatprep.subr.mxu0 0.0
      %1034 = vmatpush1.msra.mxu0 0.0
      %1035 = vmatprep.subr.mxu0 0.0
      %1036 = vmatpush1.msra.mxu0 0.0
      %1037 = vmatprep.subr.mxu0 0.0
      %1038 = vmatpush1.msra.mxu0 0.0
      %1039 = vmatprep.subr.mxu0 0.0
      %1040 = vmatpush1.msra.mxu0 0.0
      %1041 = vmatprep.subr.mxu0 0.0
      %1042 = vmatpush1.msra.mxu0 0.0
      %1043 = vmatprep.subr.mxu0 0.0
      %1044 = vmatpush1.msra.mxu0 0.0
      %1045 = vmatprep.subr.mxu0 0.0
      %1046 = vmatpush1.msra.mxu0 0.0
      %1047 = vmatprep.subr.mxu0 0.0
      %1048 = vmatpush1.msra.mxu0 0.0
      %1049 = vmatprep.subr.mxu0 0.0
      %1050 = vmatpush1.msra.mxu0 0.0
      %1051 = vmatprep.mubr.f32.mxu0 0.0
      %1052 = vmatmul.mubr.f32.gmra.mrb[0].mxu0 %v985
      %v1053 = vpop.f32.mrb[0].mxu0
      %v1054 = vadd.f32 %v982, %v1053
      %v1055 = vpop.f32.mrb[0].mxu0
      %v1056 = vadd.f32 %v982, %v1055
      %1057 = vdwg.mxu0
      %1058 = vrot.lane.b32.xlu0 %v1054, 85
      %v1059 = vpop.permute.xlu0 %1058
      %1060 = vrot.lane.b32.xlu0 %v1056, 85
      %v1061 = vpop.permute.xlu0 %1060
      %vm1062 = vcmp.lt.s32.totalorder %v226, 85
      %v1063 = vsel %vm1062, %v1059, %v1061
      %v1064 = vsel %vm1062, %v1061, %v1059
      %vm1065 = vcmp.ge.s32.totalorder %v228, 85
      %vm1066 = vcmp.ge.s32.totalorder %v229, 85
      %vm1067 = vcmp.ge.s32.totalorder %v230, 5
      %vm1068 = vcmp.ge.s32.totalorder %v231, 5
      %vm1069 = vmand %vm1065, %vm1067
      %vm1070 = vmand %vm1066, %vm1068
      %v1071 = vsel %vm1069, 1.0, 0.0
      %v1072 = vsel %vm1070, 1.0, 0.0
      %v1073 = vmul.f32 %v1064, %v1071
      %v1074 = vmul.f32 %v1063, %v1072
      %1075 = vrot.lane.b32.xlu0 %v1054, 80
      %v1076 = vpop.permute.xlu0 %1075
      %1077 = vrot.lane.b32.xlu0 %v1056, 80
      %v1078 = vpop.permute.xlu0 %1077
      %v1079 = vsel %vm703, %v1076, %v1078
      %v1080 = vsel %vm703, %v1078, %v1076
      %vm1081 = vcmp.ge.s32.totalorder %v228, 80
      %vm1082 = vcmp.ge.s32.totalorder %v229, 80
      %v1083 = vsel %vm1081, 1.0, 0.0
      %v1084 = vsel %vm1082, 1.0, 0.0
      %v1085 = vmul.f32 %v1080, %v1083
      %v1086 = vmul.f32 %v1079, %v1084
      %1087 = vrot.lane.b32.xlu0 %v1054, 75
      %v1088 = vpop.permute.xlu0 %1087
      %1089 = vrot.lane.b32.xlu0 %v1056, 75
      %v1090 = vpop.permute.xlu0 %1089
      %vm1091 = vcmp.lt.s32.totalorder %v226, 75
      %v1092 = vsel %vm1091, %v1088, %v1090
      %v1093 = vsel %vm1091, %v1090, %v1088
      %vm1094 = vcmp.ge.s32.totalorder %v228, 75
      %vm1095 = vcmp.ge.s32.totalorder %v229, 75
      %vm1096 = vcmp.lt.s32.totalorder %v230, 11
      %vm1097 = vcmp.lt.s32.totalorder %v231, 11
      %vm1098 = vmand %vm1094, %vm1096
      %vm1099 = vmand %vm1095, %vm1097
      %v1100 = vsel %vm1098, 1.0, 0.0
      %v1101 = vsel %vm1099, 1.0, 0.0
      %v1102 = vmul.f32 %v1093, %v1100
      %v1103 = vmul.f32 %v1092, %v1101
      %1104 = vrot.lane.b32.xlu0 %v1054, 5
      %v1105 = vpop.permute.xlu0 %1104
      %1106 = vrot.lane.b32.xlu0 %v1056, 5
      %v1107 = vpop.permute.xlu0 %1106
      %vm1108 = vcmp.lt.s32.totalorder %v226, 5
      %v1109 = vsel %vm1108, %v1105, %v1107
      %v1110 = vsel %vm1108, %v1107, %v1105
      %vm1111 = vcmp.ge.s32.totalorder %v228, 5
      %vm1112 = vcmp.ge.s32.totalorder %v229, 5
      %vm1113 = vmand %vm1111, %vm1067
      %vm1114 = vmand %vm1112, %vm1068
      %v1115 = vsel %vm1113, 1.0, 0.0
      %v1116 = vsel %vm1114, 1.0, 0.0
      %v1117 = vmul.f32 %v1110, %v1115
      %v1118 = vmul.f32 %v1109, %v1116
      %1119 = vrot.lane.b32.xlu0 %v1054, 123
      %v1120 = vpop.permute.xlu0 %1119
      %1121 = vrot.lane.b32.xlu0 %v1056, 123
      %v1122 = vpop.permute.xlu0 %1121
      %vm1123 = vcmp.lt.s32.totalorder %v226, 123
      %v1124 = vsel %vm1123, %v1120, %v1122
      %v1125 = vsel %vm1123, %v1122, %v1120
      %vm1126 = vcmp.lt.s32.totalorder %v228, 251
      %vm1127 = vcmp.lt.s32.totalorder %v229, 251
      %vm1128 = vmand %vm1126, %vm1096
      %vm1129 = vmand %vm1127, %vm1097
      %v1130 = vsel %vm1128, 1.0, 0.0
      %v1131 = vsel %vm1129, 1.0, 0.0
      %v1132 = vmul.f32 %v1124, %v1130
      %v1133 = vmul.f32 %v1125, %v1131
      %1134 = vrot.lane.b32.xlu0 %v1054, 53
      %v1135 = vpop.permute.xlu0 %1134
      %1136 = vrot.lane.b32.xlu0 %v1056, 53
      %v1137 = vpop.permute.xlu0 %1136
      %vm1138 = vcmp.lt.s32.totalorder %v226, 53
      %v1139 = vsel %vm1138, %v1135, %v1137
      %v1140 = vsel %vm1138, %v1137, %v1135
      %vm1141 = vcmp.lt.s32.totalorder %v228, 181
      %vm1142 = vcmp.lt.s32.totalorder %v229, 181
      %vm1143 = vmand %vm1141, %vm1067
      %vm1144 = vmand %vm1142, %vm1068
      %v1145 = vsel %vm1143, 1.0, 0.0
      %v1146 = vsel %vm1144, 1.0, 0.0
      %v1147 = vmul.f32 %v1139, %v1145
      %v1148 = vmul.f32 %v1140, %v1146
      %1149 = vrot.lane.b32.xlu0 %v1054, 48
      %v1150 = vpop.permute.xlu0 %1149
      %1151 = vrot.lane.b32.xlu0 %v1056, 48
      %v1152 = vpop.permute.xlu0 %1151
      %v1153 = vsel %vm628, %v1150, %v1152
      %v1154 = vsel %vm628, %v1152, %v1150
      %vm1155 = vcmp.lt.s32.totalorder %v228, 176
      %vm1156 = vcmp.lt.s32.totalorder %v229, 176
      %v1157 = vsel %vm1155, 1.0, 0.0
      %v1158 = vsel %vm1156, 1.0, 0.0
      %v1159 = vmul.f32 %v1153, %v1157
      %v1160 = vmul.f32 %v1154, %v1158
      %1161 = vrot.lane.b32.xlu0 %v1054, 43
      %v1162 = vpop.permute.xlu0 %1161
      %1163 = vrot.lane.b32.xlu0 %v1056, 43
      %v1164 = vpop.permute.xlu0 %1163
      %vm1165 = vcmp.lt.s32.totalorder %v226, 43
      %v1166 = vsel %vm1165, %v1162, %v1164
      %v1167 = vsel %vm1165, %v1164, %v1162
      %vm1168 = vcmp.lt.s32.totalorder %v228, 171
      %vm1169 = vcmp.lt.s32.totalorder %v229, 171
      %vm1170 = vmand %vm1168, %vm1096
      %vm1171 = vmand %vm1169, %vm1097
      %v1172 = vsel %vm1170, 1.0, 0.0
      %v1173 = vsel %vm1171, 1.0, 0.0
      %v1174 = vmul.f32 %v1166, %v1172
      %v1175 = vmul.f32 %v1167, %v1173
      %v1176 = vld [vmem:[%s3 + $0x28] sm:$0xff]
      %1177 = vset.pattern.permute.xlu0 5
      %1178 = vperm.xlu0 %1177, %v421
      %v1179 = vpop.permute.xlu0 %1178
      %v1182 = vsel %vm732, %v1176, 0
      %1184 = vmatprep.subr.mxu0 %v1074
      %1185 = vmatpush1.msra.mxu0 %v1073
      %1186 = vmatprep.subr.mxu0 %v1086
      %1187 = vmatpush1.msra.mxu0 %v1085
      %1188 = vmatprep.subr.mxu0 %v1103
      %1189 = vmatpush1.msra.mxu0 %v1102
      %1190 = vmatprep.subr.mxu0 %v1118
      %1191 = vmatpush1.msra.mxu0 %v1117
      %1192 = vmatprep.subr.mxu0 %v1056
      %1193 = vmatpush1.msra.mxu0 %v1054
      %1194 = vmatprep.subr.mxu0 %v1133
      %1195 = vmatpush1.msra.mxu0 %v1132
      %1196 = vmatprep.subr.mxu0 %v1148
      %1197 = vmatpush1.msra.mxu0 %v1147
      %1198 = vmatprep.subr.mxu0 %v1160
      %1199 = vmatpush1.msra.mxu0 %v1159
      %1200 = vmatprep.subr.mxu0 %v1175
      %1201 = vmatpush1.msra.mxu0 %v1174
      %1202 = vmatprep.subr.mxu0 0.0
      %1203 = vmatpush1.msra.mxu0 0.0
      %1204 = vmatprep.subr.mxu0 0.0
      %1205 = vmatpush1.msra.mxu0 0.0
      %1206 = vmatprep.subr.mxu0 0.0
      %1207 = vmatpush1.msra.mxu0 0.0
      %1208 = vmatprep.subr.mxu0 0.0
      %1209 = vmatpush1.msra.mxu0 0.0
      %1210 = vmatprep.subr.mxu0 0.0
      %1211 = vmatpush1.msra.mxu0 0.0
      %1212 = vmatprep.subr.mxu0 0.0
      %1213 = vmatpush1.msra.mxu0 0.0
      %1214 = vmatprep.subr.mxu0 0.0
      %1215 = vmatpush1.msra.mxu0 0.0
      %1216 = vmatprep.subr.mxu0 0.0
      %1217 = vmatpush1.msra.mxu0 0.0
      %1218 = vmatprep.subr.mxu0 0.0
      %1219 = vmatpush1.msra.mxu0 0.0
      %1220 = vmatprep.subr.mxu0 0.0
      %1221 = vmatpush1.msra.mxu0 0.0
      %1222 = vmatprep.subr.mxu0 0.0
      %1223 = vmatpush1.msra.mxu0 0.0
      %1224 = vmatprep.subr.mxu0 0.0
      %1225 = vmatpush1.msra.mxu0 0.0
      %1226 = vmatprep.subr.mxu0 0.0
      %1227 = vmatpush1.msra.mxu0 0.0
      %1228 = vmatprep.subr.mxu0 0.0
      %1229 = vmatpush1.msra.mxu0 0.0
      %1230 = vmatprep.subr.mxu0 0.0
      %1231 = vmatpush1.msra.mxu0 0.0
      %1232 = vmatprep.subr.mxu0 0.0
      %1233 = vmatpush1.msra.mxu0 0.0
      %1234 = vmatprep.subr.mxu0 0.0
      %1235 = vmatpush1.msra.mxu0 0.0
      %1236 = vmatprep.subr.mxu0 0.0
      %1237 = vmatpush1.msra.mxu0 0.0
      %1238 = vmatprep.subr.mxu0 0.0
      %1239 = vmatpush1.msra.mxu0 0.0
      %1240 = vmatprep.subr.mxu0 0.0
      %1241 = vmatpush1.msra.mxu0 0.0
      %1242 = vmatprep.subr.mxu0 0.0
      %1243 = vmatpush1.msra.mxu0 0.0
      %1244 = vmatprep.subr.mxu0 0.0
      %1245 = vmatpush1.msra.mxu0 0.0
      %1246 = vmatprep.subr.mxu0 0.0
      %1247 = vmatpush1.msra.mxu0 0.0
      %1248 = vmatprep.mubr.f32.mxu0 0.0
      %1249 = vmatmul.mubr.f32.gmra.mrb[0].mxu0 %v1182
      %v1250 = vpop.f32.mrb[0].mxu0
      %v1251 = vadd.f32 %v1179, %v1250
      %v1252 = vpop.f32.mrb[0].mxu0
      %v1253 = vadd.f32 %v1179, %v1252
      %1254 = vdwg.mxu0
      %1255 = vrot.lane.b32.xlu0 %v376, 3
      %v1256 = vpop.permute.xlu0 %1255
      %1257 = vrot.lane.b32.xlu0 %v378, 3
      %v1258 = vpop.permute.xlu0 %1257
      %v1259 = vsel %vm658, %v1256, %v1258
      %v1260 = vsel %vm658, %v1258, %v1256
      %v1261 = vmul.f32 %v1260, %v665
      %v1262 = vmul.f32 %v1259, %v666
      %1263 = vrot.lane.b32.xlu0 %v376, 2
      %v1264 = vpop.permute.xlu0 %1263
      %1265 = vrot.lane.b32.xlu0 %v378, 2
      %v1266 = vpop.permute.xlu0 %1265
      %v1267 = vsel %vm811, %v1264, %v1266
      %v1268 = vsel %vm811, %v1266, %v1264
      %v1269 = vmul.f32 %v1268, %v820
      %v1270 = vmul.f32 %v1267, %v821
      %1271 = vrot.lane.b32.xlu0 %v376, 1
      %v1272 = vpop.permute.xlu0 %1271
      %1273 = vrot.lane.b32.xlu0 %v378, 1
      %v1274 = vpop.permute.xlu0 %1273
      %v1275 = vsel %vm390, %v1272, %v1274
      %v1276 = vsel %vm390, %v1274, %v1272
      %v1277 = vmul.f32 %v1276, %v399
      %v1278 = vmul.f32 %v1275, %v400
      %1279 = vrot.lane.b32.xlu0 %v376, 127
      %v1280 = vpop.permute.xlu0 %1279
      %1281 = vrot.lane.b32.xlu0 %v378, 127
      %v1282 = vpop.permute.xlu0 %1281
      %v1283 = vsel %vm407, %v1280, %v1282
      %v1284 = vsel %vm407, %v1282, %v1280
      %v1285 = vmul.f32 %v1283, %v416
      %v1286 = vmul.f32 %v1284, %v417
      %1287 = vrot.lane.b32.xlu0 %v376, 126
      %v1288 = vpop.permute.xlu0 %1287
      %1289 = vrot.lane.b32.xlu0 %v378, 126
      %v1290 = vpop.permute.xlu0 %1289
      %v1291 = vsel %vm844, %v1288, %v1290
      %v1292 = vsel %vm844, %v1290, %v1288
      %v1293 = vmul.f32 %v1291, %v853
      %v1294 = vmul.f32 %v1292, %v854
      %1295 = vrot.lane.b32.xlu0 %v376, 125
      %v1296 = vpop.permute.xlu0 %1295
      %1297 = vrot.lane.b32.xlu0 %v378, 125
      %v1298 = vpop.permute.xlu0 %1297
      %v1299 = vsel %vm673, %v1296, %v1298
      %v1300 = vsel %vm673, %v1298, %v1296
      %v1301 = vmul.f32 %v1299, %v680
      %v1302 = vmul.f32 %v1300, %v681
      %v1303 = vld [vmem:[%s3 + $0x30] sm:$0xff]
      %1304 = vset.pattern.permute.xlu0 6
      %1305 = vperm.xlu0 %1304, %v421
      %v1306 = vpop.permute.xlu0 %1305
      %vm1308 = vcmask 457728
      %v1310 = vsel %vm1308, %v1303, 0
      %1312 = vmatprep.subr.mxu0 %v1262
      %1313 = vmatpush1.msra.mxu0 %v1261
      %1314 = vmatprep.subr.mxu0 %v1270
      %1315 = vmatpush1.msra.mxu0 %v1269
      %1316 = vmatprep.subr.mxu0 %v1278
      %1317 = vmatpush1.msra.mxu0 %v1277
      %1318 = vmatprep.subr.mxu0 %v378
      %1319 = vmatpush1.msra.mxu0 %v376
      %1320 = vmatprep.subr.mxu0 %v1286
      %1321 = vmatpush1.msra.mxu0 %v1285
      %1322 = vmatprep.subr.mxu0 %v1294
      %1323 = vmatpush1.msra.mxu0 %v1293
      %1324 = vmatprep.subr.mxu0 %v1302
      %1325 = vmatpush1.msra.mxu0 %v1301
      %1326 = vmatprep.subr.mxu0 0.0
      %1327 = vmatpush1.msra.mxu0 0.0
      %1328 = vmatprep.subr.mxu0 0.0
      %1329 = vmatpush1.msra.mxu0 0.0
      %1330 = vmatprep.subr.mxu0 0.0
      %1331 = vmatpush1.msra.mxu0 0.0
      %1332 = vmatprep.subr.mxu0 0.0
      %1333 = vmatpush1.msra.mxu0 0.0
      %1334 = vmatprep.subr.mxu0 0.0
      %1335 = vmatpush1.msra.mxu0 0.0
      %1336 = vmatprep.subr.mxu0 0.0
      %1337 = vmatpush1.msra.mxu0 0.0
      %1338 = vmatprep.subr.mxu0 0.0
      %1339 = vmatpush1.msra.mxu0 0.0
      %1340 = vmatprep.subr.mxu0 0.0
      %1341 = vmatpush1.msra.mxu0 0.0
      %1342 = vmatprep.subr.mxu0 0.0
      %1343 = vmatpush1.msra.mxu0 0.0
      %1344 = vmatprep.subr.mxu0 0.0
      %1345 = vmatpush1.msra.mxu0 0.0
      %1346 = vmatprep.subr.mxu0 0.0
      %1347 = vmatpush1.msra.mxu0 0.0
      %1348 = vmatprep.subr.mxu0 0.0
      %1349 = vmatpush1.msra.mxu0 0.0
      %1350 = vmatprep.subr.mxu0 0.0
      %1351 = vmatpush1.msra.mxu0 0.0
      %1352 = vmatprep.subr.mxu0 0.0
      %1353 = vmatpush1.msra.mxu0 0.0
      %1354 = vmatprep.subr.mxu0 0.0
      %1355 = vmatpush1.msra.mxu0 0.0
      %1356 = vmatprep.subr.mxu0 0.0
      %1357 = vmatpush1.msra.mxu0 0.0
      %1358 = vmatprep.subr.mxu0 0.0
      %1359 = vmatpush1.msra.mxu0 0.0
      %1360 = vmatprep.subr.mxu0 0.0
      %1361 = vmatpush1.msra.mxu0 0.0
      %1362 = vmatprep.subr.mxu0 0.0
      %1363 = vmatpush1.msra.mxu0 0.0
      %1364 = vmatprep.subr.mxu0 0.0
      %1365 = vmatpush1.msra.mxu0 0.0
      %1366 = vmatprep.subr.mxu0 0.0
      %1367 = vmatpush1.msra.mxu0 0.0
      %1368 = vmatprep.subr.mxu0 0.0
      %1369 = vmatpush1.msra.mxu0 0.0
      %1370 = vmatprep.subr.mxu0 0.0
      %1371 = vmatpush1.msra.mxu0 0.0
      %1372 = vmatprep.subr.mxu0 0.0
      %1373 = vmatpush1.msra.mxu0 0.0
      %1374 = vmatprep.subr.mxu0 0.0
      %1375 = vmatpush1.msra.mxu0 0.0
      %1376 = vmatprep.mubr.f32.mxu0 0.0
      %1377 = vmatmul.mubr.f32.gmra.mrb[0].mxu0 %v1310
      %v1378 = vpop.f32.mrb[0].mxu0
      %v1379 = vadd.f32 %v1306, %v1378
      %v1380 = vpop.f32.mrb[0].mxu0
      %v1381 = vadd.f32 %v1306, %v1380
      %1382 = vdwg.mxu0
      %1383 = vrot.lane.b32.xlu0 %v1379, 48
      %v1384 = vpop.permute.xlu0 %1383
      %1385 = vrot.lane.b32.xlu0 %v1381, 48
      %v1386 = vpop.permute.xlu0 %1385
      %v1387 = vsel %vm628, %v1384, %v1386
      %v1388 = vsel %vm628, %v1386, %v1384
      %v1389 = vmul.f32 %v1388, %v633
      %v1390 = vmul.f32 %v1387, %v634
      %1391 = vrot.lane.b32.xlu0 %v1379, 32
      %v1392 = vpop.permute.xlu0 %1391
      %1393 = vrot.lane.b32.xlu0 %v1381, 32
      %v1394 = vpop.permute.xlu0 %1393
      %v1395 = vsel %vm941, %v1392, %v1394
      %v1396 = vsel %vm941, %v1394, %v1392
      %v1397 = vmul.f32 %v1396, %v946
      %v1398 = vmul.f32 %v1395, %v947
      %1399 = vrot.lane.b32.xlu0 %v1379, 16
      %v1400 = vpop.permute.xlu0 %1399
      %1401 = vrot.lane.b32.xlu0 %v1381, 16
      %v1402 = vpop.permute.xlu0 %1401
      %v1403 = vsel %vm506, %v1400, %v1402
      %v1404 = vsel %vm506, %v1402, %v1400
      %v1405 = vmul.f32 %v1404, %v511
      %v1406 = vmul.f32 %v1403, %v512
      %1407 = vrot.lane.b32.xlu0 %v1379, 112
      %v1408 = vpop.permute.xlu0 %1407
      %1409 = vrot.lane.b32.xlu0 %v1381, 112
      %v1410 = vpop.permute.xlu0 %1409
      %v1411 = vsel %vm519, %v1408, %v1410
      %v1412 = vsel %vm519, %v1410, %v1408
      %v1413 = vmul.f32 %v1411, %v524
      %v1414 = vmul.f32 %v1412, %v525
      %1415 = vrot.lane.b32.xlu0 %v1379, 96
      %v1416 = vpop.permute.xlu0 %1415
      %1417 = vrot.lane.b32.xlu0 %v1381, 96
      %v1418 = vpop.permute.xlu0 %1417
      %v1419 = vsel %vm970, %v1416, %v1418
      %v1420 = vsel %vm970, %v1418, %v1416
      %v1421 = vmul.f32 %v1419, %v975
      %v1422 = vmul.f32 %v1420, %v976
      %1423 = vrot.lane.b32.xlu0 %v1379, 80
      %v1424 = vpop.permute.xlu0 %1423
      %1425 = vrot.lane.b32.xlu0 %v1381, 80
      %v1426 = vpop.permute.xlu0 %1425
      %v1427 = vsel %vm703, %v1424, %v1426
      %v1428 = vsel %vm703, %v1426, %v1424
      %v1429 = vmul.f32 %v1427, %v708
      %v1430 = vmul.f32 %v1428, %v709
      %v1431 = vld [vmem:[%s3 + $0x38] sm:$0xff]
      %1432 = vset.pattern.permute.xlu0 7
      %1433 = vperm.xlu0 %1432, %v421
      %v1434 = vpop.permute.xlu0 %1433
      %v1437 = vsel %vm1308, %v1431, 0
      %1439 = vmatprep.subr.mxu0 %v1390
      %1440 = vmatpush1.msra.mxu0 %v1389
      %1441 = vmatprep.subr.mxu0 %v1398
      %1442 = vmatpush1.msra.mxu0 %v1397
      %1443 = vmatprep.subr.mxu0 %v1406
      %1444 = vmatpush1.msra.mxu0 %v1405
      %1445 = vmatprep.subr.mxu0 %v1381
      %1446 = vmatpush1.msra.mxu0 %v1379
      %1447 = vmatprep.subr.mxu0 %v1414
      %1448 = vmatpush1.msra.mxu0 %v1413
      %1449 = vmatprep.subr.mxu0 %v1422
      %1450 = vmatpush1.msra.mxu0 %v1421
      %1451 = vmatprep.subr.mxu0 %v1430
      %1452 = vmatpush1.msra.mxu0 %v1429
      %1453 = vmatprep.subr.mxu0 0.0
      %1454 = vmatpush1.msra.mxu0 0.0
      %1455 = vmatprep.subr.mxu0 0.0
      %1456 = vmatpush1.msra.mxu0 0.0
      %1457 = vmatprep.subr.mxu0 0.0
      %1458 = vmatpush1.msra.mxu0 0.0
      %1459 = vmatprep.subr.mxu0 0.0
      %1460 = vmatpush1.msra.mxu0 0.0
      %1461 = vmatprep.subr.mxu0 0.0
      %1462 = vmatpush1.msra.mxu0 0.0
      %1463 = vmatprep.subr.mxu0 0.0
      %1464 = vmatpush1.msra.mxu0 0.0
      %1465 = vmatprep.subr.mxu0 0.0
      %1466 = vmatpush1.msra.mxu0 0.0
      %1467 = vmatprep.subr.mxu0 0.0
      %1468 = vmatpush1.msra.mxu0 0.0
      %1469 = vmatprep.subr.mxu0 0.0
      %1470 = vmatpush1.msra.mxu0 0.0
      %1471 = vmatprep.subr.mxu0 0.0
      %1472 = vmatpush1.msra.mxu0 0.0
      %1473 = vmatprep.subr.mxu0 0.0
      %1474 = vmatpush1.msra.mxu0 0.0
      %1475 = vmatprep.subr.mxu0 0.0
      %1476 = vmatpush1.msra.mxu0 0.0
      %1477 = vmatprep.subr.mxu0 0.0
      %1478 = vmatpush1.msra.mxu0 0.0
      %1479 = vmatprep.subr.mxu0 0.0
      %1480 = vmatpush1.msra.mxu0 0.0
      %1481 = vmatprep.subr.mxu0 0.0
      %1482 = vmatpush1.msra.mxu0 0.0
      %1483 = vmatprep.subr.mxu0 0.0
      %1484 = vmatpush1.msra.mxu0 0.0
      %1485 = vmatprep.subr.mxu0 0.0
      %1486 = vmatpush1.msra.mxu0 0.0
      %1487 = vmatprep.subr.mxu0 0.0
      %1488 = vmatpush1.msra.mxu0 0.0
      %1489 = vmatprep.subr.mxu0 0.0
      %1490 = vmatpush1.msra.mxu0 0.0
      %1491 = vmatprep.subr.mxu0 0.0
      %1492 = vmatpush1.msra.mxu0 0.0
      %1493 = vmatprep.subr.mxu0 0.0
      %1494 = vmatpush1.msra.mxu0 0.0
      %1495 = vmatprep.subr.mxu0 0.0
      %1496 = vmatpush1.msra.mxu0 0.0
      %1497 = vmatprep.subr.mxu0 0.0
      %1498 = vmatpush1.msra.mxu0 0.0
      %1499 = vmatprep.subr.mxu0 0.0
      %1500 = vmatpush1.msra.mxu0 0.0
      %1501 = vmatprep.subr.mxu0 0.0
      %1502 = vmatpush1.msra.mxu0 0.0
      %1503 = vmatprep.mubr.f32.mxu0 0.0
      %1504 = vmatmul.mubr.f32.gmra.mrb[0].mxu0 %v1437
      %v1505 = vpop.f32.mrb[0].mxu0
      %v1506 = vadd.f32 %v1434, %v1505
      %v1507 = vpop.f32.mrb[0].mxu0
      %v1508 = vadd.f32 %v1434, %v1507
      %1509 = vdwg.mxu0
      %1510 = vrot.lane.b32.xlu0 %v1506, 119
      %v1511 = vpop.permute.xlu0 %1510
      %1512 = vrot.lane.b32.xlu0 %v1508, 119
      %v1513 = vpop.permute.xlu0 %1512
      %vm1514 = vcmp.lt.s32.totalorder %v226, 119
      %v1515 = vsel %vm1514, %v1511, %v1513
      %v1516 = vsel %vm1514, %v1513, %v1511
      %vm1517 = vcmp.ge.s32.totalorder %v228, 119
      %vm1518 = vcmp.ge.s32.totalorder %v229, 119
      %vm1519 = vcmp.ge.s32.totalorder %v230, 7
      %vm1520 = vcmp.ge.s32.totalorder %v231, 7
      %vm1521 = vmand %vm1517, %vm1519
      %vm1522 = vmand %vm1518, %vm1520
      %v1523 = vsel %vm1521, 1.0, 0.0
      %v1524 = vsel %vm1522, 1.0, 0.0
      %v1525 = vmul.f32 %v1516, %v1523
      %v1526 = vmul.f32 %v1515, %v1524
      %1527 = vrot.lane.b32.xlu0 %v1506, 112
      %v1528 = vpop.permute.xlu0 %1527
      %1529 = vrot.lane.b32.xlu0 %v1508, 112
      %v1530 = vpop.permute.xlu0 %1529
      %v1531 = vsel %vm519, %v1528, %v1530
      %v1532 = vsel %vm519, %v1530, %v1528
      %vm1533 = vcmp.ge.s32.totalorder %v228, 112
      %vm1534 = vcmp.ge.s32.totalorder %v229, 112
      %v1535 = vsel %vm1533, 1.0, 0.0
      %v1536 = vsel %vm1534, 1.0, 0.0
      %v1537 = vmul.f32 %v1532, %v1535
      %v1538 = vmul.f32 %v1531, %v1536
      %1539 = vrot.lane.b32.xlu0 %v1506, 105
      %v1540 = vpop.permute.xlu0 %1539
      %1541 = vrot.lane.b32.xlu0 %v1508, 105
      %v1542 = vpop.permute.xlu0 %1541
      %vm1543 = vcmp.lt.s32.totalorder %v226, 105
      %v1544 = vsel %vm1543, %v1540, %v1542
      %v1545 = vsel %vm1543, %v1542, %v1540
      %vm1546 = vcmp.ge.s32.totalorder %v228, 105
      %vm1547 = vcmp.ge.s32.totalorder %v229, 105
      %vm1548 = vcmp.lt.s32.totalorder %v230, 9
      %vm1549 = vcmp.lt.s32.totalorder %v231, 9
      %vm1550 = vmand %vm1546, %vm1548
      %vm1551 = vmand %vm1547, %vm1549
      %v1552 = vsel %vm1550, 1.0, 0.0
      %v1553 = vsel %vm1551, 1.0, 0.0
      %v1554 = vmul.f32 %v1545, %v1552
      %v1555 = vmul.f32 %v1544, %v1553
      %1556 = vrot.lane.b32.xlu0 %v1506, 7
      %v1557 = vpop.permute.xlu0 %1556
      %1558 = vrot.lane.b32.xlu0 %v1508, 7
      %v1559 = vpop.permute.xlu0 %1558
      %vm1560 = vcmp.lt.s32.totalorder %v226, 7
      %v1561 = vsel %vm1560, %v1557, %v1559
      %v1562 = vsel %vm1560, %v1559, %v1557
      %vm1563 = vcmp.ge.s32.totalorder %v228, 7
      %vm1564 = vcmp.ge.s32.totalorder %v229, 7
      %vm1565 = vmand %vm1563, %vm1519
      %vm1566 = vmand %vm1564, %vm1520
      %v1567 = vsel %vm1565, 1.0, 0.0
      %v1568 = vsel %vm1566, 1.0, 0.0
      %v1569 = vmul.f32 %v1562, %v1567
      %v1570 = vmul.f32 %v1561, %v1568
      %1571 = vrot.lane.b32.xlu0 %v1506, 121
      %v1572 = vpop.permute.xlu0 %1571
      %1573 = vrot.lane.b32.xlu0 %v1508, 121
      %v1574 = vpop.permute.xlu0 %1573
      %vm1575 = vcmp.lt.s32.totalorder %v226, 121
      %v1576 = vsel %vm1575, %v1572, %v1574
      %v1577 = vsel %vm1575, %v1574, %v1572
      %vm1578 = vcmp.lt.s32.totalorder %v228, 249
      %vm1579 = vcmp.lt.s32.totalorder %v229, 249
      %vm1580 = vmand %vm1578, %vm1548
      %vm1581 = vmand %vm1579, %vm1549
      %v1582 = vsel %vm1580, 1.0, 0.0
      %v1583 = vsel %vm1581, 1.0, 0.0
      %v1584 = vmul.f32 %v1576, %v1582
      %v1585 = vmul.f32 %v1577, %v1583
      %1586 = vrot.lane.b32.xlu0 %v1506, 23
      %v1587 = vpop.permute.xlu0 %1586
      %1588 = vrot.lane.b32.xlu0 %v1508, 23
      %v1589 = vpop.permute.xlu0 %1588
      %vm1590 = vcmp.lt.s32.totalorder %v226, 23
      %v1591 = vsel %vm1590, %v1587, %v1589
      %v1592 = vsel %vm1590, %v1589, %v1587
      %vm1593 = vcmp.lt.s32.totalorder %v228, 151
      %vm1594 = vcmp.lt.s32.totalorder %v229, 151
      %vm1595 = vmand %vm1593, %vm1519
      %vm1596 = vmand %vm1594, %vm1520
      %v1597 = vsel %vm1595, 1.0, 0.0
      %v1598 = vsel %vm1596, 1.0, 0.0
      %v1599 = vmul.f32 %v1591, %v1597
      %v1600 = vmul.f32 %v1592, %v1598
      %1601 = vrot.lane.b32.xlu0 %v1506, 16
      %v1602 = vpop.permute.xlu0 %1601
      %1603 = vrot.lane.b32.xlu0 %v1508, 16
      %v1604 = vpop.permute.xlu0 %1603
      %v1605 = vsel %vm506, %v1602, %v1604
      %v1606 = vsel %vm506, %v1604, %v1602
      %vm1607 = vcmp.lt.s32.totalorder %v228, 144
      %vm1608 = vcmp.lt.s32.totalorder %v229, 144
      %v1609 = vsel %vm1607, 1.0, 0.0
      %v1610 = vsel %vm1608, 1.0, 0.0
      %v1611 = vmul.f32 %v1605, %v1609
      %v1612 = vmul.f32 %v1606, %v1610
      %1613 = vrot.lane.b32.xlu0 %v1506, 9
      %v1614 = vpop.permute.xlu0 %1613
      %1615 = vrot.lane.b32.xlu0 %v1508, 9
      %v1616 = vpop.permute.xlu0 %1615
      %vm1617 = vcmp.lt.s32.totalorder %v226, 9
      %v1618 = vsel %vm1617, %v1614, %v1616
      %v1619 = vsel %vm1617, %v1616, %v1614
      %vm1620 = vcmp.lt.s32.totalorder %v228, 137
      %vm1621 = vcmp.lt.s32.totalorder %v229, 137
      %vm1622 = vmand %vm1620, %vm1548
      %vm1623 = vmand %vm1621, %vm1549
      %v1624 = vsel %vm1622, 1.0, 0.0
      %v1625 = vsel %vm1623, 1.0, 0.0
      %v1626 = vmul.f32 %v1618, %v1624
      %v1627 = vmul.f32 %v1619, %v1625
      %v1628 = vld [vmem:[%s3 + $0x40] sm:$0xff]
      %1629 = vset.pattern.permute.xlu0 8
      %1630 = vperm.xlu0 %1629, %v421
      %v1631 = vpop.permute.xlu0 %1630
      %v1634 = vsel %vm732, %v1628, 0
      %1636 = vmatprep.subr.mxu0 %v1526
      %1637 = vmatpush1.msra.mxu0 %v1525
      %1638 = vmatprep.subr.mxu0 %v1538
      %1639 = vmatpush1.msra.mxu0 %v1537
      %1640 = vmatprep.subr.mxu0 %v1555
      %1641 = vmatpush1.msra.mxu0 %v1554
      %1642 = vmatprep.subr.mxu0 %v1570
      %1643 = vmatpush1.msra.mxu0 %v1569
      %1644 = vmatprep.subr.mxu0 %v1508
      %1645 = vmatpush1.msra.mxu0 %v1506
      %1646 = vmatprep.subr.mxu0 %v1585
      %1647 = vmatpush1.msra.mxu0 %v1584
      %1648 = vmatprep.subr.mxu0 %v1600
      %1649 = vmatpush1.msra.mxu0 %v1599
      %1650 = vmatprep.subr.mxu0 %v1612
      %1651 = vmatpush1.msra.mxu0 %v1611
      %1652 = vmatprep.subr.mxu0 %v1627
      %1653 = vmatpush1.msra.mxu0 %v1626
      %1654 = vmatprep.subr.mxu0 0.0
      %1655 = vmatpush1.msra.mxu0 0.0
      %1656 = vmatprep.subr.mxu0 0.0
      %1657 = vmatpush1.msra.mxu0 0.0
      %1658 = vmatprep.subr.mxu0 0.0
      %1659 = vmatpush1.msra.mxu0 0.0
      %1660 = vmatprep.subr.mxu0 0.0
      %1661 = vmatpush1.msra.mxu0 0.0
      %1662 = vmatprep.subr.mxu0 0.0
      %1663 = vmatpush1.msra.mxu0 0.0
      %1664 = vmatprep.subr.mxu0 0.0
      %1665 = vmatpush1.msra.mxu0 0.0
      %1666 = vmatprep.subr.mxu0 0.0
      %1667 = vmatpush1.msra.mxu0 0.0
      %1668 = vmatprep.subr.mxu0 0.0
      %1669 = vmatpush1.msra.mxu0 0.0
      %1670 = vmatprep.subr.mxu0 0.0
      %1671 = vmatpush1.msra.mxu0 0.0
      %1672 = vmatprep.subr.mxu0 0.0
      %1673 = vmatpush1.msra.mxu0 0.0
      %1674 = vmatprep.subr.mxu0 0.0
      %1675 = vmatpush1.msra.mxu0 0.0
      %1676 = vmatprep.subr.mxu0 0.0
      %1677 = vmatpush1.msra.mxu0 0.0
      %1678 = vmatprep.subr.mxu0 0.0
      %1679 = vmatpush1.msra.mxu0 0.0
      %1680 = vmatprep.subr.mxu0 0.0
      %1681 = vmatpush1.msra.mxu0 0.0
      %1682 = vmatprep.subr.mxu0 0.0
      %1683 = vmatpush1.msra.mxu0 0.0
      %1684 = vmatprep.subr.mxu0 0.0
      %1685 = vmatpush1.msra.mxu0 0.0
      %1686 = vmatprep.subr.mxu0 0.0
      %1687 = vmatpush1.msra.mxu0 0.0
      %1688 = vmatprep.subr.mxu0 0.0
      %1689 = vmatpush1.msra.mxu0 0.0
      %1690 = vmatprep.subr.mxu0 0.0
      %1691 = vmatpush1.msra.mxu0 0.0
      %1692 = vmatprep.subr.mxu0 0.0
      %1693 = vmatpush1.msra.mxu0 0.0
      %1694 = vmatprep.subr.mxu0 0.0
      %1695 = vmatpush1.msra.mxu0 0.0
      %1696 = vmatprep.subr.mxu0 0.0
      %1697 = vmatpush1.msra.mxu0 0.0
      %1698 = vmatprep.subr.mxu0 0.0
      %1699 = vmatpush1.msra.mxu0 0.0
      %1700 = vmatprep.mubr.f32.mxu0 0.0
      %1701 = vmatmul.mubr.f32.gmra.mrb[0].mxu0 %v1634
      %v1702 = vpop.f32.mrb[0].mxu0
      %v1703 = vadd.f32 %v1631, %v1702
      %v1704 = vpop.f32.mrb[0].mxu0
      %v1705 = vadd.f32 %v1631, %v1704
      %1706 = vdwg.mxu0
      %1707 = vrot.lane.b32.xlu0 %v358, 17
      %v1708 = vpop.permute.xlu0 %1707
      %1709 = vrot.lane.b32.xlu0 %v803, 17
      %v1710 = vpop.permute.xlu0 %1709
      %1711 = vrot.lane.b32.xlu0 %v1251, 17
      %v1712 = vpop.permute.xlu0 %1711
      %1713 = vrot.lane.b32.xlu0 %v1703, 17
      %v1714 = vpop.permute.xlu0 %1713
      %1715 = vrot.lane.b32.xlu0 %v360, 17
      %v1716 = vpop.permute.xlu0 %1715
      %1717 = vrot.lane.b32.xlu0 %v805, 17
      %v1718 = vpop.permute.xlu0 %1717
      %1719 = vrot.lane.b32.xlu0 %v1253, 17
      %v1720 = vpop.permute.xlu0 %1719
      %1721 = vrot.lane.b32.xlu0 %v1705, 17
      %v1722 = vpop.permute.xlu0 %1721
      %vm1723 = vcmp.lt.s32.totalorder %v226, 17
      %v1724 = vsel %vm1723, %v1708, %v1716
      %v1725 = vsel %vm1723, %v1710, %v1718
      %v1726 = vsel %vm1723, %v1712, %v1720
      %v1727 = vsel %vm1723, %v1714, %v1722
      %v1728 = vsel %vm1723, %v1716, %v1708
      %v1729 = vsel %vm1723, %v1718, %v1710
      %v1730 = vsel %vm1723, %v1720, %v1712
      %v1731 = vsel %vm1723, %v1722, %v1714
      %vm1732 = vcmp.ge.s32.totalorder %v228, 17
      %vm1733 = vcmp.ge.s32.totalorder %v229, 17
      %vm1734 = vmand %vm1732, %vm395
      %vm1735 = vmand %vm1733, %vm396
      %v1736 = vsel %vm1734, 1.0, 0.0
      %v1737 = vsel %vm1735, 1.0, 0.0
      %v1738 = vmul.f32 %v1728, %v1736
      %v1739 = vmul.f32 %v1724, %v1737
      %v1740 = vmul.f32 %v1729, %v1736
      %v1741 = vmul.f32 %v1725, %v1737
      %v1742 = vmul.f32 %v1730, %v1736
      %v1743 = vmul.f32 %v1726, %v1737
      %v1744 = vmul.f32 %v1731, %v1736
      %v1745 = vmul.f32 %v1727, %v1737
      %1746 = vrot.lane.b32.xlu0 %v358, 16
      %v1747 = vpop.permute.xlu0 %1746
      %1748 = vrot.lane.b32.xlu0 %v803, 16
      %v1749 = vpop.permute.xlu0 %1748
      %1750 = vrot.lane.b32.xlu0 %v1251, 16
      %v1751 = vpop.permute.xlu0 %1750
      %1752 = vrot.lane.b32.xlu0 %v1703, 16
      %v1753 = vpop.permute.xlu0 %1752
      %1754 = vrot.lane.b32.xlu0 %v360, 16
      %v1755 = vpop.permute.xlu0 %1754
      %1756 = vrot.lane.b32.xlu0 %v805, 16
      %v1757 = vpop.permute.xlu0 %1756
      %1758 = vrot.lane.b32.xlu0 %v1253, 16
      %v1759 = vpop.permute.xlu0 %1758
      %1760 = vrot.lane.b32.xlu0 %v1705, 16
      %v1761 = vpop.permute.xlu0 %1760
      %v1762 = vsel %vm506, %v1747, %v1755
      %v1763 = vsel %vm506, %v1749, %v1757
      %v1764 = vsel %vm506, %v1751, %v1759
      %v1765 = vsel %vm506, %v1753, %v1761
      %v1766 = vsel %vm506, %v1755, %v1747
      %v1767 = vsel %vm506, %v1757, %v1749
      %v1768 = vsel %vm506, %v1759, %v1751
      %v1769 = vsel %vm506, %v1761, %v1753
      %v1770 = vmul.f32 %v1766, %v511
      %v1771 = vmul.f32 %v1762, %v512
      %v1772 = vmul.f32 %v1767, %v511
      %v1773 = vmul.f32 %v1763, %v512
      %v1774 = vmul.f32 %v1768, %v511
      %v1775 = vmul.f32 %v1764, %v512
      %v1776 = vmul.f32 %v1769, %v511
      %v1777 = vmul.f32 %v1765, %v512
      %1778 = vrot.lane.b32.xlu0 %v358, 15
      %v1779 = vpop.permute.xlu0 %1778
      %1780 = vrot.lane.b32.xlu0 %v803, 15
      %v1781 = vpop.permute.xlu0 %1780
      %1782 = vrot.lane.b32.xlu0 %v1251, 15
      %v1783 = vpop.permute.xlu0 %1782
      %1784 = vrot.lane.b32.xlu0 %v1703, 15
      %v1785 = vpop.permute.xlu0 %1784
      %1786 = vrot.lane.b32.xlu0 %v360, 15
      %v1787 = vpop.permute.xlu0 %1786
      %1788 = vrot.lane.b32.xlu0 %v805, 15
      %v1789 = vpop.permute.xlu0 %1788
      %1790 = vrot.lane.b32.xlu0 %v1253, 15
      %v1791 = vpop.permute.xlu0 %1790
      %1792 = vrot.lane.b32.xlu0 %v1705, 15
      %v1793 = vpop.permute.xlu0 %1792
      %vm1794 = vcmp.lt.s32.totalorder %v226, 15
      %v1795 = vsel %vm1794, %v1779, %v1787
      %v1796 = vsel %vm1794, %v1781, %v1789
      %v1797 = vsel %vm1794, %v1783, %v1791
      %v1798 = vsel %vm1794, %v1785, %v1793
      %v1799 = vsel %vm1794, %v1787, %v1779
      %v1800 = vsel %vm1794, %v1789, %v1781
      %v1801 = vsel %vm1794, %v1791, %v1783
      %v1802 = vsel %vm1794, %v1793, %v1785
      %vm1803 = vcmp.ge.s32.totalorder %v228, 15
      %vm1804 = vcmp.ge.s32.totalorder %v229, 15
      %vm1805 = vmand %vm1803, %vm412
      %vm1806 = vmand %vm1804, %vm413
      %v1807 = vsel %vm1805, 1.0, 0.0
      %v1808 = vsel %vm1806, 1.0, 0.0
      %v1809 = vmul.f32 %v1799, %v1807
      %v1810 = vmul.f32 %v1795, %v1808
      %v1811 = vmul.f32 %v1800, %v1807
      %v1812 = vmul.f32 %v1796, %v1808
      %v1813 = vmul.f32 %v1801, %v1807
      %v1814 = vmul.f32 %v1797, %v1808
      %v1815 = vmul.f32 %v1802, %v1807
      %v1816 = vmul.f32 %v1798, %v1808
      %1817 = vrot.lane.b32.xlu0 %v358, 1
      %v1818 = vpop.permute.xlu0 %1817
      %1819 = vrot.lane.b32.xlu0 %v803, 1
      %v1820 = vpop.permute.xlu0 %1819
      %1821 = vrot.lane.b32.xlu0 %v1251, 1
      %v1822 = vpop.permute.xlu0 %1821
      %1823 = vrot.lane.b32.xlu0 %v1703, 1
      %v1824 = vpop.permute.xlu0 %1823
      %1825 = vrot.lane.b32.xlu0 %v360, 1
      %v1826 = vpop.permute.xlu0 %1825
      %1827 = vrot.lane.b32.xlu0 %v805, 1
      %v1828 = vpop.permute.xlu0 %1827
      %1829 = vrot.lane.b32.xlu0 %v1253, 1
      %v1830 = vpop.permute.xlu0 %1829
      %1831 = vrot.lane.b32.xlu0 %v1705, 1
      %v1832 = vpop.permute.xlu0 %1831
      %v1833 = vsel %vm390, %v1818, %v1826
      %v1834 = vsel %vm390, %v1820, %v1828
      %v1835 = vsel %vm390, %v1822, %v1830
      %v1836 = vsel %vm390, %v1824, %v1832
      %v1837 = vsel %vm390, %v1826, %v1818
      %v1838 = vsel %vm390, %v1828, %v1820
      %v1839 = vsel %vm390, %v1830, %v1822
      %v1840 = vsel %vm390, %v1832, %v1824
      %v1841 = vmul.f32 %v1837, %v399
      %v1842 = vmul.f32 %v1833, %v400
      %v1843 = vmul.f32 %v1838, %v399
      %v1844 = vmul.f32 %v1834, %v400
      %v1845 = vmul.f32 %v1839, %v399
      %v1846 = vmul.f32 %v1835, %v400
      %v1847 = vmul.f32 %v1840, %v399
      %v1848 = vmul.f32 %v1836, %v400
      %1849 = vrot.lane.b32.xlu0 %v358, 127
      %v1850 = vpop.permute.xlu0 %1849
      %1851 = vrot.lane.b32.xlu0 %v803, 127
      %v1852 = vpop.permute.xlu0 %1851
      %1853 = vrot.lane.b32.xlu0 %v1251, 127
      %v1854 = vpop.permute.xlu0 %1853
      %1855 = vrot.lane.b32.xlu0 %v1703, 127
      %v1856 = vpop.permute.xlu0 %1855
      %1857 = vrot.lane.b32.xlu0 %v360, 127
      %v1858 = vpop.permute.xlu0 %1857
      %1859 = vrot.lane.b32.xlu0 %v805, 127
      %v1860 = vpop.permute.xlu0 %1859
      %1861 = vrot.lane.b32.xlu0 %v1253, 127
      %v1862 = vpop.permute.xlu0 %1861
      %1863 = vrot.lane.b32.xlu0 %v1705, 127
      %v1864 = vpop.permute.xlu0 %1863
      %v1865 = vsel %vm407, %v1850, %v1858
      %v1866 = vsel %vm407, %v1852, %v1860
      %v1867 = vsel %vm407, %v1854, %v1862
      %v1868 = vsel %vm407, %v1856, %v1864
      %v1869 = vsel %vm407, %v1858, %v1850
      %v1870 = vsel %vm407, %v1860, %v1852
      %v1871 = vsel %vm407, %v1862, %v1854
      %v1872 = vsel %vm407, %v1864, %v1856
      %v1873 = vmul.f32 %v1865, %v416
      %v1874 = vmul.f32 %v1869, %v417
      %v1875 = vmul.f32 %v1866, %v416
      %v1876 = vmul.f32 %v1870, %v417
      %v1877 = vmul.f32 %v1867, %v416
      %v1878 = vmul.f32 %v1871, %v417
      %v1879 = vmul.f32 %v1868, %v416
      %v1880 = vmul.f32 %v1872, %v417
      %1881 = vrot.lane.b32.xlu0 %v358, 113
      %v1882 = vpop.permute.xlu0 %1881
      %1883 = vrot.lane.b32.xlu0 %v803, 113
      %v1884 = vpop.permute.xlu0 %1883
      %1885 = vrot.lane.b32.xlu0 %v1251, 113
      %v1886 = vpop.permute.xlu0 %1885
      %1887 = vrot.lane.b32.xlu0 %v1703, 113
      %v1888 = vpop.permute.xlu0 %1887
      %1889 = vrot.lane.b32.xlu0 %v360, 113
      %v1890 = vpop.permute.xlu0 %1889
      %1891 = vrot.lane.b32.xlu0 %v805, 113
      %v1892 = vpop.permute.xlu0 %1891
      %1893 = vrot.lane.b32.xlu0 %v1253, 113
      %v1894 = vpop.permute.xlu0 %1893
      %1895 = vrot.lane.b32.xlu0 %v1705, 113
      %v1896 = vpop.permute.xlu0 %1895
      %vm1897 = vcmp.lt.s32.totalorder %v226, 113
      %v1898 = vsel %vm1897, %v1882, %v1890
      %v1899 = vsel %vm1897, %v1884, %v1892
      %v1900 = vsel %vm1897, %v1886, %v1894
      %v1901 = vsel %vm1897, %v1888, %v1896
      %v1902 = vsel %vm1897, %v1890, %v1882
      %v1903 = vsel %vm1897, %v1892, %v1884
      %v1904 = vsel %vm1897, %v1894, %v1886
      %v1905 = vsel %vm1897, %v1896, %v1888
      %vm1906 = vcmp.lt.s32.totalorder %v228, 241
      %vm1907 = vcmp.lt.s32.totalorder %v229, 241
      %vm1908 = vmand %vm1906, %vm395
      %vm1909 = vmand %vm1907, %vm396
      %v1910 = vsel %vm1908, 1.0, 0.0
      %v1911 = vsel %vm1909, 1.0, 0.0
      %v1912 = vmul.f32 %v1898, %v1910
      %v1913 = vmul.f32 %v1902, %v1911
      %v1914 = vmul.f32 %v1899, %v1910
      %v1915 = vmul.f32 %v1903, %v1911
      %v1916 = vmul.f32 %v1900, %v1910
      %v1917 = vmul.f32 %v1904, %v1911
      %v1918 = vmul.f32 %v1901, %v1910
      %v1919 = vmul.f32 %v1905, %v1911
      %1920 = vrot.lane.b32.xlu0 %v358, 112
      %v1921 = vpop.permute.xlu0 %1920
      %1922 = vrot.lane.b32.xlu0 %v803, 112
      %v1923 = vpop.permute.xlu0 %1922
      %1924 = vrot.lane.b32.xlu0 %v1251, 112
      %v1925 = vpop.permute.xlu0 %1924
      %1926 = vrot.lane.b32.xlu0 %v1703, 112
      %v1927 = vpop.permute.xlu0 %1926
      %1928 = vrot.lane.b32.xlu0 %v360, 112
      %v1929 = vpop.permute.xlu0 %1928
      %1930 = vrot.lane.b32.xlu0 %v805, 112
      %v1931 = vpop.permute.xlu0 %1930
      %1932 = vrot.lane.b32.xlu0 %v1253, 112
      %v1933 = vpop.permute.xlu0 %1932
      %1934 = vrot.lane.b32.xlu0 %v1705, 112
      %v1935 = vpop.permute.xlu0 %1934
      %v1936 = vsel %vm519, %v1921, %v1929
      %v1937 = vsel %vm519, %v1923, %v1931
      %v1938 = vsel %vm519, %v1925, %v1933
      %v1939 = vsel %vm519, %v1927, %v1935
      %v1940 = vsel %vm519, %v1929, %v1921
      %v1941 = vsel %vm519, %v1931, %v1923
      %v1942 = vsel %vm519, %v1933, %v1925
      %v1943 = vsel %vm519, %v1935, %v1927
      %v1944 = vmul.f32 %v1936, %v524
      %v1945 = vmul.f32 %v1940, %v525
      %v1946 = vmul.f32 %v1937, %v524
      %v1947 = vmul.f32 %v1941, %v525
      %v1948 = vmul.f32 %v1938, %v524
      %v1949 = vmul.f32 %v1942, %v525
      %v1950 = vmul.f32 %v1939, %v524
      %v1951 = vmul.f32 %v1943, %v525
      %1952 = vrot.lane.b32.xlu0 %v358, 111
      %v1953 = vpop.permute.xlu0 %1952
      %1954 = vrot.lane.b32.xlu0 %v803, 111
      %v1955 = vpop.permute.xlu0 %1954
      %1956 = vrot.lane.b32.xlu0 %v1251, 111
      %v1957 = vpop.permute.xlu0 %1956
      %1958 = vrot.lane.b32.xlu0 %v1703, 111
      %v1959 = vpop.permute.xlu0 %1958
      %1960 = vrot.lane.b32.xlu0 %v360, 111
      %v1961 = vpop.permute.xlu0 %1960
      %1962 = vrot.lane.b32.xlu0 %v805, 111
      %v1963 = vpop.permute.xlu0 %1962
      %1964 = vrot.lane.b32.xlu0 %v1253, 111
      %v1965 = vpop.permute.xlu0 %1964
      %1966 = vrot.lane.b32.xlu0 %v1705, 111
      %v1967 = vpop.permute.xlu0 %1966
      %vm1968 = vcmp.lt.s32.totalorder %v226, 111
      %v1969 = vsel %vm1968, %v1953, %v1961
      %v1970 = vsel %vm1968, %v1955, %v1963
      %v1971 = vsel %vm1968, %v1957, %v1965
      %v1972 = vsel %vm1968, %v1959, %v1967
      %v1973 = vsel %vm1968, %v1961, %v1953
      %v1974 = vsel %vm1968, %v1963, %v1955
      %v1975 = vsel %vm1968, %v1965, %v1957
      %v1976 = vsel %vm1968, %v1967, %v1959
      %vm1977 = vcmp.lt.s32.totalorder %v228, 239
      %vm1978 = vcmp.lt.s32.totalorder %v229, 239
      %vm1979 = vmand %vm1977, %vm412
      %vm1980 = vmand %vm1978, %vm413
      %v1981 = vsel %vm1979, 1.0, 0.0
      %v1982 = vsel %vm1980, 1.0, 0.0
      %v1983 = vmul.f32 %v1969, %v1981
      %v1984 = vmul.f32 %v1973, %v1982
      %v1985 = vmul.f32 %v1970, %v1981
      %v1986 = vmul.f32 %v1974, %v1982
      %v1987 = vmul.f32 %v1971, %v1981
      %v1988 = vmul.f32 %v1975, %v1982
      %v1989 = vmul.f32 %v1972, %v1981
      %v1990 = vmul.f32 %v1976, %v1982
      %v1991 = vld [vmem:[%s3 + $0x48] sm:$0xff]
      %v1992 = vld [vmem:[%s3 + $0x50] sm:$0xff]
      %v1993 = vld [vmem:[%s3 + $0x58] sm:$0xff]
      %1994 = vset.pattern.permute.xlu0 9
      %1995 = vperm.xlu0 %1994, %v421
      %v1996 = vpop.permute.xlu0 %1995
      %vm1998 = vcmask 261120
      %v2000 = vsel %vm1998, %v1993, 0
      %2002 = vmatprep.subr.mxu0 %v1739
      %2003 = vmatpush1.msra.mxu0 %v1738
      %2004 = vmatprep.subr.mxu0 %v1741
      %2005 = vmatpush1.msra.mxu0 %v1740
      %2006 = vmatprep.subr.mxu0 %v1743
      %2007 = vmatpush1.msra.mxu0 %v1742
      %2008 = vmatprep.subr.mxu0 %v1745
      %2009 = vmatpush1.msra.mxu0 %v1744
      %2010 = vmatprep.subr.mxu0 %v1771
      %2011 = vmatpush1.msra.mxu0 %v1770
      %2012 = vmatprep.subr.mxu0 %v1773
      %2013 = vmatpush1.msra.mxu0 %v1772
      %2014 = vmatprep.subr.mxu0 %v1775
      %2015 = vmatpush1.msra.mxu0 %v1774
      %2016 = vmatprep.subr.mxu0 %v1777
      %2017 = vmatpush1.msra.mxu0 %v1776
      %2018 = vmatprep.subr.mxu0 %v1810
      %2019 = vmatpush1.msra.mxu0 %v1809
      %2020 = vmatprep.subr.mxu0 %v1812
      %2021 = vmatpush1.msra.mxu0 %v1811
      %2022 = vmatprep.subr.mxu0 %v1814
      %2023 = vmatpush1.msra.mxu0 %v1813
      %2024 = vmatprep.subr.mxu0 %v1816
      %2025 = vmatpush1.msra.mxu0 %v1815
      %2026 = vmatprep.subr.mxu0 %v1842
      %2027 = vmatpush1.msra.mxu0 %v1841
      %2028 = vmatprep.subr.mxu0 %v1844
      %2029 = vmatpush1.msra.mxu0 %v1843
      %2030 = vmatprep.subr.mxu0 %v1846
      %2031 = vmatpush1.msra.mxu0 %v1845
      %2032 = vmatprep.subr.mxu0 %v1848
      %2033 = vmatpush1.msra.mxu0 %v1847
      %2034 = vmatprep.subr.mxu0 %v360
      %2035 = vmatpush1.msra.mxu0 %v358
      %2036 = vmatprep.subr.mxu0 %v805
      %2037 = vmatpush1.msra.mxu0 %v803
      %2038 = vmatprep.subr.mxu0 %v1253
      %2039 = vmatpush1.msra.mxu0 %v1251
      %2040 = vmatprep.subr.mxu0 %v1705
      %2041 = vmatpush1.msra.mxu0 %v1703
      %2042 = vmatprep.subr.mxu0 %v1874
      %2043 = vmatpush1.msra.mxu0 %v1873
      %2044 = vmatprep.subr.mxu0 %v1876
      %2045 = vmatpush1.msra.mxu0 %v1875
      %2046 = vmatprep.subr.mxu0 %v1878
      %2047 = vmatpush1.msra.mxu0 %v1877
      %2048 = vmatprep.subr.mxu0 %v1880
      %2049 = vmatpush1.msra.mxu0 %v1879
      %2050 = vmatprep.subr.mxu0 %v1913
      %2051 = vmatpush1.msra.mxu0 %v1912
      %2052 = vmatprep.subr.mxu0 %v1915
      %2053 = vmatpush1.msra.mxu0 %v1914
      %2054 = vmatprep.subr.mxu0 %v1917
      %2055 = vmatpush1.msra.mxu0 %v1916
      %2056 = vmatprep.subr.mxu0 %v1919
      %2057 = vmatpush1.msra.mxu0 %v1918
      %2058 = vmatprep.subr.mxu0 %v1945
      %2059 = vmatpush1.msra.mxu0 %v1944
      %2060 = vmatprep.subr.mxu0 %v1947
      %2061 = vmatpush1.msra.mxu0 %v1946
      %2062 = vmatprep.subr.mxu0 %v1949
      %2063 = vmatpush1.msra.mxu0 %v1948
      %2064 = vmatprep.subr.mxu0 %v1951
      %2065 = vmatpush1.msra.mxu0 %v1950
      %2066 = vmatprep.mubr.f32.mxu0 %v1992
      %2067 = vmatmul.mubr.f32.gmra.mrb[0].mxu0 %v1991
      %v2068 = vpop.f32.mrb[0].mxu0
      %v2069 = vadd.f32 %v1996, %v2068
      %v2070 = vpop.f32.mrb[0].mxu0
      %v2071 = vadd.f32 %v1996, %v2070
      %2072 = vdwg.mxu0
      %2073 = vmatprep.subr.mxu0 %v1984
      %2074 = vmatpush1.msra.mxu0 %v1983
      %2075 = vmatprep.subr.mxu0 %v1986
      %2076 = vmatpush1.msra.mxu0 %v1985
      %2077 = vmatprep.subr.mxu0 %v1988
      %2078 = vmatpush1.msra.mxu0 %v1987
      %2079 = vmatprep.subr.mxu0 %v1990
      %2080 = vmatpush1.msra.mxu0 %v1989
      %2081 = vmatprep.subr.mxu0 0.0
      %2082 = vmatpush1.msra.mxu0 0.0
      %2083 = vmatprep.subr.mxu0 0.0
      %2084 = vmatpush1.msra.mxu0 0.0
      %2085 = vmatprep.subr.mxu0 0.0
      %2086 = vmatpush1.msra.mxu0 0.0
      %2087 = vmatprep.subr.mxu0 0.0
      %2088 = vmatpush1.msra.mxu0 0.0
      %2089 = vmatprep.subr.mxu0 0.0
      %2090 = vmatpush1.msra.mxu0 0.0
      %2091 = vmatprep.subr.mxu0 0.0
      %2092 = vmatpush1.msra.mxu0 0.0
      %2093 = vmatprep.subr.mxu0 0.0
      %2094 = vmatpush1.msra.mxu0 0.0
      %2095 = vmatprep.subr.mxu0 0.0
      %2096 = vmatpush1.msra.mxu0 0.0
      %2097 = vmatprep.subr.mxu0 0.0
      %2098 = vmatpush1.msra.mxu0 0.0
      %2099 = vmatprep.subr.mxu0 0.0
      %2100 = vmatpush1.msra.mxu0 0.0
      %2101 = vmatprep.subr.mxu0 0.0
      %2102 = vmatpush1.msra.mxu0 0.0
      %2103 = vmatprep.subr.mxu0 0.0
      %2104 = vmatpush1.msra.mxu0 0.0
      %2105 = vmatprep.subr.mxu0 0.0
      %2106 = vmatpush1.msra.mxu0 0.0
      %2107 = vmatprep.subr.mxu0 0.0
      %2108 = vmatpush1.msra.mxu0 0.0
      %2109 = vmatprep.subr.mxu0 0.0
      %2110 = vmatpush1.msra.mxu0 0.0
      %2111 = vmatprep.subr.mxu0 0.0
      %2112 = vmatpush1.msra.mxu0 0.0
      %2113 = vmatprep.subr.mxu0 0.0
      %2114 = vmatpush1.msra.mxu0 0.0
      %2115 = vmatprep.subr.mxu0 0.0
      %2116 = vmatpush1.msra.mxu0 0.0
      %2117 = vmatprep.subr.mxu0 0.0
      %2118 = vmatpush1.msra.mxu0 0.0
      %2119 = vmatprep.subr.mxu0 0.0
      %2120 = vmatpush1.msra.mxu0 0.0
      %2121 = vmatprep.subr.mxu0 0.0
      %2122 = vmatpush1.msra.mxu0 0.0
      %2123 = vmatprep.subr.mxu0 0.0
      %2124 = vmatpush1.msra.mxu0 0.0
      %2125 = vmatprep.subr.mxu0 0.0
      %2126 = vmatpush1.msra.mxu0 0.0
      %2127 = vmatprep.subr.mxu0 0.0
      %2128 = vmatpush1.msra.mxu0 0.0
      %2129 = vmatprep.subr.mxu0 0.0
      %2130 = vmatpush1.msra.mxu0 0.0
      %2131 = vmatprep.subr.mxu0 0.0
      %2132 = vmatpush1.msra.mxu0 0.0
      %2133 = vmatprep.subr.mxu0 0.0
      %2134 = vmatpush1.msra.mxu0 0.0
      %2135 = vmatprep.subr.mxu0 0.0
      %2136 = vmatpush1.msra.mxu0 0.0
      %2137 = vmatprep.mubr.f32.mxu0 0.0
      %2138 = vmatmul.mubr.f32.gmra.mrb[0].mxu0 %v2000
      %v2139 = vpop.f32.mrb[0].mxu0
      %v2140 = vadd.f32 %v2069, %v2139
      %v2141 = vpop.f32.mrb[0].mxu0
      %v2142 = vadd.f32 %v2071, %v2141
      %2143 = vdwg.mxu0
      %v2144 = vadd.f32 %v2140, %v382
      %v2145 = vadd.f32 %v2142, %v384
      %v2146 = vmax.f32 %v2144, 0.0
      %v2147 = vmax.f32 %v2145, 0.0
      %2148 = vst [vmem:[%s224] sm:$0xff] %v2146
      %2149 = vst [vmem:[%s224 + $0x8] sm:$0xff] %v2147
      %p2150 = scmp.lt.s32.totalorder %s16, 1
      %s2151 = scalar_select %p2150, %s16, 1
      %s2152 = smul.addr %s2151, 2
      %s2153 = smul.addr %s2152, 8
      %s2154 = scalar_lea.vmem %s5, %s2153
      // Predicated region
      $region41: #{rfb_modified_forward.1} parent=39 // pred_check
        %p2155 = pneg %p144
      $region42: #{rfb_modified_forward.1} parent=39 // pred_check_branch
        %2157 = sbr.rel (%p2155) target = $region44
      $region43: #{rfb_modified_forward.1} parent=39 // pred_region
        _
      $region44: #{rfb_modified_forward.1} parent=39 // pred_fallthru
        _
    $region40: #{rfb_modified_forward.1} parent=5 // pred_fallthru
      _
    %p2158 = scmp.le.s32.totalorder 2, %s11
    // Predicated region
    $region45: #{rfb_modified_forward.1} parent=5 // pred_check
      %p2159 = pneg %p2158
    $region46: #{rfb_modified_forward.1} parent=5 // pred_check_branch
      %2161 = sbr.rel (%p2159) target = $region48
    $region47: #{rfb_modified_forward.1} parent=5 // pred_region
      %s2162 = ssub.s32 %s11, 2
      // Predicated region
      $region49: #{rfb_modified_forward.1} parent=47 // pred_check
        %p2163 = pneg %p150
      $region50: #{rfb_modified_forward.1} parent=47 // pred_check_branch
        %2165 = sbr.rel (%p2163) target = $region52
      $region51: #{rfb_modified_forward.1} parent=47 // pred_region
        %p2166 = scmp.lt.s32.totalorder %s17, 1
        %s2167 = scalar_select %p2166, %s17, 1
        %s2168 = smul.addr %s2167, 2
        %s2169 = smul.addr %s2168, 8
        %s2170 = scalar_lea.vmem %s5, %s2169
      $region52: #{rfb_modified_forward.1} parent=47 // pred_fallthru
        _
    $region48: #{rfb_modified_forward.1} parent=5 // pred_fallthru
      _
  $region6: #{rfb_modified_forward.1} parent=0 // loop_footer
    %s15 = sadd.s32 1, %s11
  $region7: #{rfb_modified_forward.1} parent=0 // loop_footer_branch
    %10 = sbr.rel target = $region3
  $region8: #{rfb_modified_forward.1} parent=0 // loop_exit
    _

</llo_original>
